<compile_context>
chip_gen: v7x
topology: tpu7x:2x2x1
jax: 0.10.0
libtpu: 0.0.40
codegen_flags: <defaults>
</compile_context>

<pallas_src>
import functools

import jax
import jax.numpy as jnp
from jax import lax
from jax.experimental import pallas as pl
from jax.experimental.pallas import tpu as pltpu

# pltpu.CompilerParams on recent jax; TPUCompilerParams on older releases.
_CP = getattr(pltpu, "CompilerParams", None) or getattr(pltpu, "TPUCompilerParams")


def _mosaic(dimension_semantics):
    return _CP(dimension_semantics=dimension_semantics)


def _largest_divisor_leq(n, cap):
    for d in range(min(n, cap), 0, -1):
        if n % d == 0:
            return d
    return 1


def _pick_batch_tile(batch, seq):
    """Divisor tb of `batch` such that tb*seq is a multiple of 128 (lane-dense out)."""
    cap = max(1, 1024 // max(seq, 1))
    for tb in range(min(batch, cap), 0, -1):
        if batch % tb == 0 and (tb * seq) % 128 == 0:
            return tb
    return batch


def _pick_lane_tile(m, target=2048):
    if m <= target or m % 128 != 0:
        return m
    t = (target // 128) * 128
    for tm in range(t, 127, -128):
        if m % tm == 0:
            return tm
    return m


# --------------------------- maxpool 2x2 kernel -----------------------------
def _maxpool_kernel(x_ref, o_ref):
    _, cb, hp, w2 = x_ref.shape
    w = w2 // 2
    wp = w // 2
    xx = x_ref[0]                                   # (cb, Hp, 2W)
    # H-pair max: the two rows of each pair are stored contiguously (free reshape
    # in the wrapper), so this is a plain contiguous lane slice.
    m = jnp.maximum(xx[:, :, :w], xx[:, :, w:])     # (cb, Hp, W)
    # W-pair max: gather even/odd lanes with exact 0/1 selection matmuls (MXU is
    # idle here), then take the elementwise max.  Avoids strided lane access.
    src = lax.broadcasted_iota(jnp.int32, (w, wp), 0)
    dst = lax.broadcasted_iota(jnp.int32, (w, wp), 1)
    s_even = (src == 2 * dst).astype(jnp.float32)
    s_odd = (src == 2 * dst + 1).astype(jnp.float32)
    even = jnp.einsum('chw,wq->chq', m, s_even, preferred_element_type=jnp.float32)
    odd = jnp.einsum('chw,wq->chq', m, s_odd, preferred_element_type=jnp.float32)
    o_ref[...] = jnp.maximum(even, odd).reshape(cb, 1, hp, wp)


def maxpool2x2_cm(x):
    """2x2 max pool.  In: (N, C, H, W) f32.  Out: channel-major (C, N, H/2, W/2)."""
    n, c, h, w = x.shape
    hp, wp = h // 2, w // 2
    xr = x.reshape(n, c, hp, 2 * w)    # free reshape: groups the two rows of a pair
    cb = _largest_divisor_leq(c, 8)
    return pl.pallas_call(
        _maxpool_kernel,
        out_shape=jax.ShapeDtypeStruct((c, n, hp, wp), jnp.float32),
        grid=(n, c // cb),
        in_specs=[pl.BlockSpec((1, cb, hp, 2 * w), lambda i, j: (i, j, 0, 0))],
        out_specs=pl.BlockSpec((cb, 1, hp, wp), lambda i, j: (j, i, 0, 0)),
        compiler_params=_mosaic(("parallel", "parallel")),
    )(xr)


# --------------------- axial self-attention (merged H+W) --------------------
def _attn_kernel(x_ref, wqkv_ref, wo_ref, bo_ref, o_ref, *, scale):
    h = pl.program_id(2)                       # head index (innermost, "arbitrary")
    _, tb, t, d = x_ref.shape
    e3 = wqkv_ref.shape[-1]
    e = e3 // 3

    x2 = x_ref[...].reshape(tb * t, d)
    # fused per-head QKV projection: one matmul instead of two
    qkv = jnp.dot(x2, wqkv_ref[...].reshape(d, e3),
                  preferred_element_type=jnp.float32)            # (tb*T, 3e)
    q = qkv[:, :e].reshape(tb, t, e)
    k = qkv[:, e:2 * e].reshape(tb, t, e)
    v = qkv[:, 2 * e:].reshape(tb, t, e)

    dots = jnp.einsum('bte,bse->bts', q, k,
                      preferred_element_type=jnp.float32) * scale
    dots = dots - jnp.max(dots, axis=-1, keepdims=True)
    p = jnp.exp(dots)
    p = p / jnp.sum(p, axis=-1, keepdims=True)
    oh = jnp.einsum('bts,bse->bte', p, v,
                    preferred_element_type=jnp.float32)

    # lane-dense, channel-major output projection: (D, tb*T)
    proj = jnp.einsum('de,me->dm', wo_ref[...].reshape(d, e),
                      oh.reshape(tb * t, e),
                      preferred_element_type=jnp.float32)
    proj = proj.reshape(1, d, tb * t)

    @pl.when(h == 0)
    def _():
        o_ref[...] = proj + bo_ref[...]          # bias added once

    @pl.when(h != 0)
    def _():
        o_ref[...] = o_ref[...] + proj           # accumulate heads in-place


def _axial_attention(x_tok, wqkv, wo, bo, heads):
    """x_tok: (A, B, T, D) stacked token batches.  Returns (A, D, B*T)."""
    a, bt, t, d = x_tok.shape
    e = d // heads
    tb = _pick_batch_tile(bt, t)
    nb = bt // tb
    return pl.pallas_call(
        functools.partial(_attn_kernel, scale=float(e) ** -0.5),
        out_shape=jax.ShapeDtypeStruct((a, d, bt * t), jnp.float32),
        grid=(a, nb, heads),
        in_specs=[
            pl.BlockSpec((1, tb, t, d), lambda ai, bi, hi: (ai, bi, 0, 0)),
            pl.BlockSpec((1, 1, d, 3 * e), lambda ai, bi, hi: (ai, hi, 0, 0)),
            pl.BlockSpec((1, 1, d, e), lambda ai, bi, hi: (ai, hi, 0, 0)),
            pl.BlockSpec((1, d, 1), lambda ai, bi, hi: (ai, 0, 0)),
        ],
        out_specs=pl.BlockSpec((1, d, tb * t), lambda ai, bi, hi: (ai, 0, bi)),
        compiler_params=_mosaic(("parallel", "parallel", "arbitrary")),
    )(x_tok, wqkv, wo, bo)


def _prep_attn_weights(axis_params, heads):
    """Build per-axis, per-head fused QKV / output-projection weights."""
    wqkv_all, wo_all, bo_all = [], [], []
    for (wq, wkv, wo, bo) in axis_params:
        dh, d = wq.shape
        e = dh // heads
        per_qkv, per_wo = [], []
        for hh in range(heads):
            sl = slice(hh * e, (hh + 1) * e)
            per_qkv.append(jnp.concatenate(
                [wq[sl, :].T, wkv[sl, :].T,
                 wkv[dh + hh * e: dh + (hh + 1) * e, :].T], axis=1))   # (d, 3e)
            per_wo.append(wo[:, sl])                                   # (d, e)
        wqkv_all.append(jnp.stack(per_qkv))
        wo_all.append(jnp.stack(per_wo))
        bo_all.append(bo.reshape(d, 1))
    return jnp.stack(wqkv_all), jnp.stack(wo_all), jnp.stack(bo_all)


# ------- relu(ah+aw) | concat | conv1x1 | relu  + partial BN statistics ------
def _conv_head_kernel(ah_ref, aw_ref, xp_ref, wc_ref, y_ref, s1_ref, s2_ref):
    c = ah_ref.shape[0]
    xa = jnp.maximum(ah_ref[...] + aw_ref[...], 0.0)     # relu(sum of axial outs)
    wc = wc_ref[...]                                     # (Cout, 2C)
    # conv1x1 over concat([x_attn, x], channel) == split matmul (lane-dense out)
    y = (jnp.dot(wc[:, :c], xa, preferred_element_type=jnp.float32) +
         jnp.dot(wc[:, c:], xp_ref[...], preferred_element_type=jnp.float32))
    y = jnp.maximum(y, 0.0)                              # relu
    y_ref[...] = y
    s1_ref[...] = jnp.sum(y, axis=1, keepdims=True)[None]        # (1, Cout, 1)
    s2_ref[...] = jnp.sum(y * y, axis=1, keepdims=True)[None]


def _bn_kernel(y_ref, scale_ref, shift_ref, o_ref):
    o_ref[...] = y_ref[...] * scale_ref[...] + shift_ref[...]


# ------------------------------ full module ---------------------------------
def axial_down(x, params, heads=2, eps=1e-5):
    n, c, h, w = x.shape
    hp, wp = h // 2, w // 2
    m_tot = n * hp * wp

    # maxpool 2x2, emitted channel-major (C, N, Hp, Wp)
    xp_cm4 = maxpool2x2_cm(x)
    xp_cm = xp_cm4.reshape(c, m_tot)

    # token views for the two axial attentions (remaining layout glue in XLA)
    # TODO(synk): fold these permutes into the attention kernel itself (needs a
    # feature-major in-kernel attention to satisfy the (8,128) block rule).
    xh = jnp.transpose(xp_cm4, (1, 3, 2, 0)).reshape(n * wp, hp, c)   # (n,w) x h
    xw = jnp.transpose(xp_cm4, (1, 2, 3, 0)).reshape(n * hp, wp, c)   # (n,h) x w

    wqkv, wo, bo = _prep_attn_weights([params['attn_h'], params['attn_w']], heads)

    if hp == wp:
        xs = jnp.stack([xh, xw], axis=0)                    # (2, B, T, C)
        att = _axial_attention(xs, wqkv, wo, bo, heads)     # (2, C, B*T)
        ah_t, aw_t = att[0], att[1]
    else:
        ah_t = _axial_attention(xh[None], wqkv[0:1], wo[0:1], bo[0:1], heads)[0]
        aw_t = _axial_attention(xw[None], wqkv[1:2], wo[1:2], bo[1:2], heads)[0]

    # both branches channel-major (C, N*Hp*Wp); H branch is (n, w, h) -> swap back
    ah_cm = jnp.swapaxes(ah_t.reshape(c, n, wp, hp), -1, -2).reshape(c, m_tot)
    aw_cm = aw_t.reshape(c, m_tot)

    cout = params['wc'].shape[0]
    tm = _pick_lane_tile(m_tot)
    nbm = m_tot // tm
    y, s1, s2 = pl.pallas_call(
        _conv_head_kernel,
        out_shape=(jax.ShapeDtypeStruct((cout, m_tot), jnp.float32),
                   jax.ShapeDtypeStruct((nbm, cout, 1), jnp.float32),
                   jax.ShapeDtypeStruct((nbm, cout, 1), jnp.float32)),
        grid=(nbm,),
        in_specs=[pl.BlockSpec((c, tm), lambda i: (0, i)),
                  pl.BlockSpec((c, tm), lambda i: (0, i)),
                  pl.BlockSpec((c, tm), lambda i: (0, i)),
                  pl.BlockSpec((cout, 2 * c), lambda i: (0, 0))],
        out_specs=(pl.BlockSpec((cout, tm), lambda i: (0, i)),
                   pl.BlockSpec((1, cout, 1), lambda i: (i, 0, 0)),
                   pl.BlockSpec((1, cout, 1), lambda i: (i, 0, 0))),
        compiler_params=_mosaic(("parallel",)),
    )(ah_cm, aw_cm, xp_cm, params['wc'])

    # finalize global (train-mode, biased) BN statistics: tiny (Cout,)-sized math
    inv_m = 1.0 / float(m_tot)
    mean = jnp.sum(s1, axis=0) * inv_m                          # (Cout, 1)
    var = jnp.sum(s2, axis=0) * inv_m - mean * mean
    scale = params['gamma'].reshape(cout, 1) * lax.rsqrt(var + eps)
    shift = params['beta'].reshape(cout, 1) - mean * scale

    # normalize (second streaming pass over y)
    y_bn = pl.pallas_call(
        _bn_kernel,
        out_shape=jax.ShapeDtypeStruct((cout, m_tot), jnp.float32),
        grid=(nbm,),
        in_specs=[pl.BlockSpec((cout, tm), lambda i: (0, i)),
                  pl.BlockSpec((cout, 1), lambda i: (0, 0)),
                  pl.BlockSpec((cout, 1), lambda i: (0, 0))],
        out_specs=pl.BlockSpec((cout, tm), lambda i: (0, i)),
        compiler_params=_mosaic(("parallel",)),
    )(y, scale, shift)

    return y_bn.reshape(cout, n, hp, wp).transpose(1, 0, 2, 3)   # back to NCHW


# ----------------------------- parameters -----------------------------------
def init_params(key, n_channels, embedding_dims, heads):
    assert embedding_dims == 2 * n_channels, \
        "AxialDown requires embedding_dims == 2 * n_channels for conv1 shapes"
    d = n_channels
    dh = (d // heads) * heads
    ks = jax.random.split(key, 11)

    def lin(k, shape, scale=0.3):
        return scale * jax.random.normal(k, shape, jnp.float32)

    attn_h = (lin(ks[0], (dh, d)), lin(ks[1], (2 * dh, d)),
              lin(ks[2], (d, dh)), lin(ks[3], (d,), 0.1))
    attn_w = (lin(ks[4], (dh, d)), lin(ks[5], (2 * dh, d)),
              lin(ks[6], (d, dh)), lin(ks[7], (d,), 0.1))
    wc = lin(ks[8], (embedding_dims, embedding_dims))            # conv1x1, no bias
    gamma = 1.0 + 0.1 * jax.random.normal(ks[9], (embedding_dims,), jnp.float32)
    beta = 0.05 * jax.random.normal(ks[10], (embedding_dims,), jnp.float32)
    return {'attn_h': attn_h, 'attn_w': attn_w,
            'wc': wc, 'gamma': gamma, 'beta': beta}


# ---------------------- pure-JAX reference (torch semantics) ----------------
def _self_attention_ref(x, wq, wkv, wo, bo, heads):
    b, t, d = x.shape
    e = d // heads
    dh = heads * e
    q = x @ wq.T
    kv = x @ wkv.T
    k, v = kv[..., :dh], kv[..., dh:]

    def merge(z):
        return z.reshape(b, t, heads, e).transpose(0, 2, 1, 3).reshape(b * heads, t, e)

    q, k, v = merge(q), merge(k), merge(v)
    dots = jnp.einsum('bie,bje->bij', q, k) * (e ** -0.5)
    dots = jax.nn.softmax(dots, axis=-1)
    out = jnp.einsum('bij,bje->bie', dots, v)
    out = out.reshape(b, heads, t, e).transpose(0, 2, 1, 3).reshape(b, t, dh)
    return out @ wo.T + bo


def axial_down_ref(x, params, heads=2):
    N, C, H, W = x.shape
    Hp, Wp = H // 2, W // 2
    xp = x.reshape(N, C, Hp, 2, Wp, 2).max(axis=(3, 5))
    xh = jnp.transpose(xp, (0, 3, 2, 1)).reshape(N * Wp, Hp, C)
    ah = _self_attention_ref(xh, *params['attn_h'], heads)
    ah = ah.reshape(N, Wp, Hp, C).transpose(0, 3, 2, 1)
    xw = jnp.transpose(xp, (0, 2, 3, 1)).reshape(N * Hp, Wp, C)
    aw = _self_attention_ref(xw, *params['attn_w'], heads)
    aw = aw.reshape(N, Hp, Wp, C).transpose(0, 3, 1, 2)
    xa = jax.nn.relu(ah + aw)
    cat = jnp.concatenate([xa, xp], axis=1)
    y = jnp.einsum('oc,nchw->nohw', params['wc'], cat)
    y = jax.nn.relu(y)
    mean = y.mean(axis=(0, 2, 3), keepdims=True)
    var = ((y - mean) ** 2).mean(axis=(0, 2, 3), keepdims=True)
    g = params['gamma'].reshape(1, -1, 1, 1)
    b = params['beta'].reshape(1, -1, 1, 1)
    return g * (y - mean) / jnp.sqrt(var + 1e-5) + b


# --------------------------------- main --------------------------------------
if __name__ == "__main__":
    N, C, H, W = 2, 4, 16, 16
    heads = 2
    embedding_dims = 2 * C   # required so conv1 in_channels == concat channels

    key = jax.random.PRNGKey(0)
    kx, kp = jax.random.split(key)
    x = jax.random.normal(kx, (N, C, H, W), jnp.float32)
    params = init_params(kp, C, embedding_dims, heads)

    out = jax.jit(lambda xx: axial_down(xx, params, heads))(x)
    out = jax.block_until_ready(out)

    ref = axial_down_ref(x, params, heads)
    assert out.shape == (N, embedding_dims, H // 2, W // 2), out.shape
    max_err = float(jnp.max(jnp.abs(out - ref)))
    assert jnp.allclose(out, ref, atol=2e-3, rtol=2e-3), max_err
    print("KERNEL_OK")
</pallas_src>

<mosaic_0001>
module attributes {stable_mosaic.version = 11 : i64} {
  func.func @_maxpool_kernel(%arg0: i32, %arg1: i32, %arg2: memref<1x4x8x32xf32, #tpu.memory_space<vmem>>, %arg3: memref<4x1x8x8xf32, #tpu.memory_space<vmem>>) attributes {dimension_semantics = [#tpu.dimension_semantics<parallel>, #tpu.dimension_semantics<parallel>], iteration_bounds = array<i64: 2, 1>, scalar_prefetch = 0 : i64, scratch_operands = 0 : i64, tpu.core_type = #tpu.core_type<tc>, window_params = [{transform_indices = @transform_0, window_bounds = array<i64: 1, 4, 8, 32>}, {transform_indices = @transform_1, window_bounds = array<i64: 4, 1, 8, 8>}]} {
    %c0 = arith.constant 0 : index
    %c0_0 = arith.constant 0 : index
    %c0_1 = arith.constant 0 : index
    %c0_2 = arith.constant 0 : index
    %0 = vector.load %arg2[%c0, %c0_0, %c0_1, %c0_2] : memref<1x4x8x32xf32, #tpu.memory_space<vmem>>, vector<1x4x8x32xf32>
    %1 = vector.shape_cast %0 : vector<1x4x8x32xf32> to vector<4x8x32xf32>
    %2 = vector.extract_strided_slice %1 {offsets = [0, 0, 0], sizes = [4, 8, 16], strides = [1, 1, 1]} : vector<4x8x32xf32> to vector<4x8x16xf32>
    %3 = vector.extract_strided_slice %1 {offsets = [0, 0, 16], sizes = [4, 8, 16], strides = [1, 1, 1]} : vector<4x8x32xf32> to vector<4x8x16xf32>
    %4 = arith.maximumf %2, %3 : vector<4x8x16xf32>
    %5 = tpu.iota {dimensions = array<i32: 0>} : vector<16x8xi32>
    %6 = tpu.iota {dimensions = array<i32: 1>} : vector<16x8xi32>
    %c2_i32 = arith.constant 2 : i32
    %7 = vector.broadcast %c2_i32 : i32 to vector<16x8xi32>
    %8 = arith.muli %7, %6 : vector<16x8xi32>
    %9 = arith.cmpi eq, %5, %8 : vector<16x8xi32>
    %10 = arith.extui %9 : vector<16x8xi1> to vector<16x8xi32>
    %11 = arith.sitofp %10 : vector<16x8xi32> to vector<16x8xf32>
    %c2_i32_3 = arith.constant 2 : i32
    %12 = vector.broadcast %c2_i32_3 : i32 to vector<16x8xi32>
    %13 = arith.muli %12, %6 : vector<16x8xi32>
    %c1_i32 = arith.constant 1 : i32
    %14 = vector.broadcast %c1_i32 : i32 to vector<16x8xi32>
    %15 = arith.addi %13, %14 : vector<16x8xi32>
    %16 = arith.cmpi eq, %5, %15 : vector<16x8xi32>
    %17 = arith.extui %16 : vector<16x8xi1> to vector<16x8xi32>
    %18 = arith.sitofp %17 : vector<16x8xi32> to vector<16x8xf32>
    "tpu.trace_start"() <{level = 10 : i32, message = "chw,wq->chq"}> : () -> ()
    %cst = arith.constant dense<0.000000e+00> : vector<4x8x8xf32>
    %19 = tpu.matmul %4, %11, %cst {dimension_numbers = #tpu.dot_dimension_numbers<[2], [0], [0, 1], [1], [0, 0, 0, 1, 1, 1], [], []>} : vector<4x8x16xf32>, vector<16x8xf32>, vector<4x8x8xf32> -> vector<4x8x8xf32>
    %cst_4 = arith.constant dense<0.000000e+00> : vector<4x8x8xf32>
    %20 = tpu.matmul %4, %18, %cst_4 {dimension_numbers = #tpu.dot_dimension_numbers<[2], [0], [0, 1], [1], [0, 0, 0, 1, 1, 1], [], []>} : vector<4x8x16xf32>, vector<16x8xf32>, vector<4x8x8xf32> -> vector<4x8x8xf32>
    "tpu.trace_stop"() : () -> ()
    %21 = arith.maximumf %19, %20 : vector<4x8x8xf32>
    %22 = vector.shape_cast %21 : vector<4x8x8xf32> to vector<4x1x8x8xf32>
    %c0_5 = arith.constant 0 : index
    %c0_6 = arith.constant 0 : index
    %c0_7 = arith.constant 0 : index
    %c0_8 = arith.constant 0 : index
    %23 = vector.load %arg3[%c0_5, %c0_6, %c0_7, %c0_8] : memref<4x1x8x8xf32, #tpu.memory_space<vmem>>, vector<4x1x8x8xf32>
    tpu.vector_store %arg3[%c0_5, %c0_6, %c0_7, %c0_8], %22 {strides = array<i32>} : memref<4x1x8x8xf32, #tpu.memory_space<vmem>>, vector<4x1x8x8xf32>,
    return
  }
  func.func @transform_0(%arg0: i32, %arg1: i32) -> (i32, i32, i32, i32) {
    %c0_i32 = arith.constant 0 : i32
    %c0_i32_0 = arith.constant 0 : i32
    %c0_i32_1 = arith.constant 0 : i32
    return %arg0, %arg1, %c0_i32, %c0_i32_0 : i32, i32, i32, i32
  }
  func.func @transform_1(%arg0: i32, %arg1: i32) -> (i32, i32, i32, i32) {
    %c0_i32 = arith.constant 0 : i32
    %c0_i32_0 = arith.constant 0 : i32
    %c0_i32_1 = arith.constant 0 : i32
    return %arg1, %arg0, %c0_i32, %c0_i32_0 : i32, i32, i32, i32
  }
}

module attributes {stable_mosaic.version = 11 : i64} {
  func.func @_attn_kernel(%arg0: i32, %arg1: i32, %arg2: i32, %arg3: memref<1x16x8x4xf32, #tpu.memory_space<vmem>>, %arg4: memref<1x1x4x6xf32, #tpu.memory_space<vmem>>, %arg5: memref<1x1x4x2xf32, #tpu.memory_space<vmem>>, %arg6: memref<1x4x1xf32, #tpu.memory_space<vmem>>, %arg7: memref<1x4x128xf32, #tpu.memory_space<vmem>>) attributes {dimension_semantics = [#tpu.dimension_semantics<parallel>, #tpu.dimension_semantics<parallel>, #tpu.dimension_semantics<arbitrary>], iteration_bounds = array<i64: 2, 1, 2>, scalar_prefetch = 0 : i64, scratch_operands = 0 : i64, tpu.core_type = #tpu.core_type<tc>, window_params = [{transform_indices = @transform_0, window_bounds = array<i64: 1, 16, 8, 4>}, {transform_indices = @transform_1, window_bounds = array<i64: 1, 1, 4, 6>}, {transform_indices = @transform_2, window_bounds = array<i64: 1, 1, 4, 2>}, {transform_indices = @transform_3, window_bounds = array<i64: 1, 4, 1>}, {transform_indices = @transform_4, window_bounds = array<i64: 1, 4, 128>}]} {
    %c0 = arith.constant 0 : index
    %c0_0 = arith.constant 0 : index
    %c0_1 = arith.constant 0 : index
    %c0_2 = arith.constant 0 : index
    %0 = vector.load %arg3[%c0, %c0_0, %c0_1, %c0_2] : memref<1x16x8x4xf32, #tpu.memory_space<vmem>>, vector<1x16x8x4xf32>
    %1 = vector.shape_cast %0 : vector<1x16x8x4xf32> to vector<128x4xf32>
    %c0_3 = arith.constant 0 : index
    %c0_4 = arith.constant 0 : index
    %c0_5 = arith.constant 0 : index
    %c0_6 = arith.constant 0 : index
    %2 = vector.load %arg4[%c0_3, %c0_4, %c0_5, %c0_6] : memref<1x1x4x6xf32, #tpu.memory_space<vmem>>, vector<1x1x4x6xf32>
    %3 = vector.shape_cast %2 : vector<1x1x4x6xf32> to vector<4x6xf32>
    %cst = arith.constant dense<0.000000e+00> : vector<128x6xf32>
    %4 = tpu.matmul %1, %3, %cst {dimension_numbers = #tpu.dot_dimension_numbers<[1], [0], [0], [1], [0, 0, 1, 1], [], []>} : vector<128x4xf32>, vector<4x6xf32>, vector<128x6xf32> -> vector<128x6xf32>
    %5 = vector.extract_strided_slice %4 {offsets = [0, 0], sizes = [128, 2], strides = [1, 1]} : vector<128x6xf32> to vector<128x2xf32>
    %6 = vector.shape_cast %5 : vector<128x2xf32> to vector<16x8x2xf32>
    %7 = vector.extract_strided_slice %4 {offsets = [0, 2], sizes = [128, 2], strides = [1, 1]} : vector<128x6xf32> to vector<128x2xf32>
    %8 = vector.shape_cast %7 : vector<128x2xf32> to vector<16x8x2xf32>
    %9 = vector.extract_strided_slice %4 {offsets = [0, 4], sizes = [128, 2], strides = [1, 1]} : vector<128x6xf32> to vector<128x2xf32>
    %10 = vector.shape_cast %9 : vector<128x2xf32> to vector<16x8x2xf32>
    "tpu.trace_start"() <{level = 10 : i32, message = "bte,bse->bts"}> : () -> ()
    %cst_7 = arith.constant dense<0.000000e+00> : vector<16x8x8xf32>
    %11 = tpu.matmul %6, %8, %cst_7 {dimension_numbers = #tpu.dot_dimension_numbers<[2], [2], [1], [1], [0, 0, 0, 1, 1, 1], [0], [0]>} : vector<16x8x2xf32>, vector<16x8x2xf32>, vector<16x8x8xf32> -> vector<16x8x8xf32>
    "tpu.trace_stop"() : () -> ()
    %cst_8 = arith.constant 0.707106769 : f32
    %12 = vector.broadcast %cst_8 : f32 to vector<16x8x8xf32>
    %13 = arith.mulf %11, %12 : vector<16x8x8xf32>
    %cst_9 = arith.constant dense<0xFF800000> : vector<16x8xf32>
    %14 = vector.multi_reduction <maximumf>, %13, %cst_9 [2] : vector<16x8x8xf32> to vector<16x8xf32>
    %15 = vector.shape_cast %14 : vector<16x8xf32> to vector<16x8x1xf32>
    %16 = vector.broadcast %15 : vector<16x8x1xf32> to vector<16x8x8xf32>
    %17 = arith.subf %13, %16 : vector<16x8x8xf32>
    %18 = math.exp %17 : vector<16x8x8xf32>
    %cst_10 = arith.constant dense<0.000000e+00> : vector<16x8xf32>
    %19 = vector.multi_reduction <add>, %18, %cst_10 [2] : vector<16x8x8xf32> to vector<16x8xf32>
    %20 = vector.shape_cast %19 : vector<16x8xf32> to vector<16x8x1xf32>
    %21 = vector.broadcast %20 : vector<16x8x1xf32> to vector<16x8x8xf32>
    %22 = arith.divf %18, %21 : vector<16x8x8xf32>
    "tpu.trace_start"() <{level = 10 : i32, message = "bts,bse->bte"}> : () -> ()
    %cst_11 = arith.constant dense<0.000000e+00> : vector<16x8x2xf32>
    %23 = tpu.matmul %22, %10, %cst_11 {dimension_numbers = #tpu.dot_dimension_numbers<[2], [1], [1], [2], [0, 0, 0, 1, 1, 2], [0], [0]>} : vector<16x8x8xf32>, vector<16x8x2xf32>, vector<16x8x2xf32> -> vector<16x8x2xf32>
    "tpu.trace_stop"() : () -> ()
    %c0_12 = arith.constant 0 : index
    %c0_13 = arith.constant 0 : index
    %c0_14 = arith.constant 0 : index
    %c0_15 = arith.constant 0 : index
    %24 = vector.load %arg5[%c0_12, %c0_13, %c0_14, %c0_15] : memref<1x1x4x2xf32, #tpu.memory_space<vmem>>, vector<1x1x4x2xf32>
    %25 = vector.shape_cast %24 : vector<1x1x4x2xf32> to vector<4x2xf32>
    %26 = vector.shape_cast %23 : vector<16x8x2xf32> to vector<128x2xf32>
    "tpu.trace_start"() <{level = 10 : i32, message = "de,me->dm"}> : () -> ()
    %cst_16 = arith.constant dense<0.000000e+00> : vector<4x128xf32>
    %27 = tpu.matmul %25, %26, %cst_16 {dimension_numbers = #tpu.dot_dimension_numbers<[1], [1], [0], [0], [0, 0, 1, 0], [], []>} : vector<4x2xf32>, vector<128x2xf32>, vector<4x128xf32> -> vector<4x128xf32>
    "tpu.trace_stop"() : () -> ()
    %28 = vector.shape_cast %27 : vector<4x128xf32> to vector<1x4x128xf32>
    %c0_i32 = arith.constant 0 : i32
    %29 = arith.cmpi eq, %arg2, %c0_i32 : i32
    %30 = arith.extui %29 : i1 to i32
    %c0_i32_17 = arith.constant 0 : i32
    %31 = arith.cmpi ne, %30, %c0_i32_17 : i32
    scf.if %31 {
      %c0_20 = arith.constant 0 : index
      %c0_21 = arith.constant 0 : index
      %c0_22 = arith.constant 0 : index
      %35 = vector.load %arg6[%c0_20, %c0_21, %c0_22] : memref<1x4x1xf32, #tpu.memory_space<vmem>>, vector<1x4x1xf32>
      %36 = vector.broadcast %35 : vector<1x4x1xf32> to vector<1x4x128xf32>
      %37 = arith.addf %28, %36 : vector<1x4x128xf32>
      %c0_23 = arith.constant 0 : index
      %c0_24 = arith.constant 0 : index
      %c0_25 = arith.constant 0 : index
      %38 = vector.load %arg7[%c0_23, %c0_24, %c0_25] : memref<1x4x128xf32, #tpu.memory_space<vmem>>, vector<1x4x128xf32>
      tpu.vector_store %arg7[%c0_23, %c0_24, %c0_25], %37 {strides = array<i32>} : memref<1x4x128xf32, #tpu.memory_space<vmem>>, vector<1x4x128xf32>,
    } else {
    }
    %c0_i32_18 = arith.constant 0 : i32
    %32 = arith.cmpi ne, %arg2, %c0_i32_18 : i32
    %33 = arith.extui %32 : i1 to i32
    %c0_i32_19 = arith.constant 0 : i32
    %34 = arith.cmpi ne, %33, %c0_i32_19 : i32
    scf.if %34 {
      %c0_20 = arith.constant 0 : index
      %c0_21 = arith.constant 0 : index
      %c0_22 = arith.constant 0 : index
      %35 = vector.load %arg7[%c0_20, %c0_21, %c0_22] : memref<1x4x128xf32, #tpu.memory_space<vmem>>, vector<1x4x128xf32>
      %36 = arith.addf %35, %28 : vector<1x4x128xf32>
      %c0_23 = arith.constant 0 : index
      %c0_24 = arith.constant 0 : index
      %c0_25 = arith.constant 0 : index
      %37 = vector.load %arg7[%c0_23, %c0_24, %c0_25] : memref<1x4x128xf32, #tpu.memory_space<vmem>>, vector<1x4x128xf32>
      tpu.vector_store %arg7[%c0_23, %c0_24, %c0_25], %36 {strides = array<i32>} : memref<1x4x128xf32, #tpu.memory_space<vmem>>, vector<1x4x128xf32>,
    } else {
    }
    return
  }
  func.func @transform_0(%arg0: i32, %arg1: i32, %arg2: i32) -> (i32, i32, i32, i32) {
    %c0_i32 = arith.constant 0 : i32
    %c0_i32_0 = arith.constant 0 : i32
    %c0_i32_1 = arith.constant 0 : i32
    return %arg0, %arg1, %c0_i32, %c0_i32_0 : i32, i32, i32, i32
  }
  func.func @transform_1(%arg0: i32, %arg1: i32, %arg2: i32) -> (i32, i32, i32, i32) {
    %c0_i32 = arith.constant 0 : i32
    %c0_i32_0 = arith.constant 0 : i32
    %c0_i32_1 = arith.constant 0 : i32
    return %arg0, %arg2, %c0_i32, %c0_i32_0 : i32, i32, i32, i32
  }
  func.func @transform_2(%arg0: i32, %arg1: i32, %arg2: i32) -> (i32, i32, i32, i32) {
    %c0_i32 = arith.constant 0 : i32
    %c0_i32_0 = arith.constant 0 : i32
    %c0_i32_1 = arith.constant 0 : i32
    return %arg0, %arg2, %c0_i32, %c0_i32_0 : i32, i32, i32, i32
  }
  func.func @transform_3(%arg0: i32, %arg1: i32, %arg2: i32) -> (i32, i32, i32) {
    %c0_i32 = arith.constant 0 : i32
    %c0_i32_0 = arith.constant 0 : i32
    %c0_i32_1 = arith.constant 0 : i32
    return %arg0, %c0_i32, %c0_i32_0 : i32, i32, i32
  }
  func.func @transform_4(%arg0: i32, %arg1: i32, %arg2: i32) -> (i32, i32, i32) {
    %c0_i32 = arith.constant 0 : i32
    %c0_i32_0 = arith.constant 0 : i32
    return %arg0, %c0_i32, %arg1 : i32, i32, i32
  }
}

module attributes {stable_mosaic.version = 11 : i64} {
  func.func @_bn_kernel(%arg0: i32, %arg1: memref<8x128xf32, #tpu.memory_space<vmem>>, %arg2: memref<8x1xf32, #tpu.memory_space<vmem>>, %arg3: memref<8x1xf32, #tpu.memory_space<vmem>>, %arg4: memref<8x128xf32, #tpu.memory_space<vmem>>) attributes {dimension_semantics = [#tpu.dimension_semantics<parallel>], iteration_bounds = array<i64: 1>, scalar_prefetch = 0 : i64, scratch_operands = 0 : i64, tpu.core_type = #tpu.core_type<tc>, window_params = [{transform_indices = @transform_0, window_bounds = array<i64: 8, 128>}, {pipeline_mode = #tpu.pipeline_mode<synchronous>, transform_indices = @transform_1, window_bounds = array<i64: 8, 1>}, {pipeline_mode = #tpu.pipeline_mode<synchronous>, transform_indices = @transform_2, window_bounds = array<i64: 8, 1>}, {transform_indices = @transform_3, window_bounds = array<i64: 8, 128>}]} {
    %c0 = arith.constant 0 : index
    %c0_0 = arith.constant 0 : index
    %0 = vector.load %arg1[%c0, %c0_0] : memref<8x128xf32, #tpu.memory_space<vmem>>, vector<8x128xf32>
    %c0_1 = arith.constant 0 : index
    %c0_2 = arith.constant 0 : index
    %1 = vector.load %arg2[%c0_1, %c0_2] : memref<8x1xf32, #tpu.memory_space<vmem>>, vector<8x1xf32>
    %2 = vector.broadcast %1 : vector<8x1xf32> to vector<8x128xf32>
    %3 = arith.mulf %0, %2 : vector<8x128xf32>
    %c0_3 = arith.constant 0 : index
    %c0_4 = arith.constant 0 : index
    %4 = vector.load %arg3[%c0_3, %c0_4] : memref<8x1xf32, #tpu.memory_space<vmem>>, vector<8x1xf32>
    %5 = vector.broadcast %4 : vector<8x1xf32> to vector<8x128xf32>
    %6 = arith.addf %3, %5 : vector<8x128xf32>
    %c0_5 = arith.constant 0 : index
    %c0_6 = arith.constant 0 : index
    %7 = vector.load %arg4[%c0_5, %c0_6] : memref<8x128xf32, #tpu.memory_space<vmem>>, vector<8x128xf32>
    tpu.vector_store %arg4[%c0_5, %c0_6], %6 {strides = array<i32>} : memref<8x128xf32, #tpu.memory_space<vmem>>, vector<8x128xf32>,
    return
  }
  func.func @transform_0(%arg0: i32) -> (i32, i32) {
    %c0_i32 = arith.constant 0 : i32
    %c0_i32_0 = arith.constant 0 : i32
    return %c0_i32, %arg0 : i32, i32
  }
  func.func @transform_1(%arg0: i32) -> (i32, i32) {
    %c0_i32 = arith.constant 0 : i32
    %c0_i32_0 = arith.constant 0 : i32
    %c0_i32_1 = arith.constant 0 : i32
    return %c0_i32, %c0_i32_0 : i32, i32
  }
  func.func @transform_2(%arg0: i32) -> (i32, i32) {
    %c0_i32 = arith.constant 0 : i32
    %c0_i32_0 = arith.constant 0 : i32
    %c0_i32_1 = arith.constant 0 : i32
    return %c0_i32, %c0_i32_0 : i32, i32
  }
  func.func @transform_3(%arg0: i32) -> (i32, i32) {
    %c0_i32 = arith.constant 0 : i32
    %c0_i32_0 = arith.constant 0 : i32
    return %c0_i32, %arg0 : i32, i32
  }
}

module attributes {stable_mosaic.version = 11 : i64} {
  func.func @_conv_head_kernel(%arg0: i32, %arg1: memref<4x128xf32, #tpu.memory_space<vmem>>, %arg2: memref<4x128xf32, #tpu.memory_space<vmem>>, %arg3: memref<4x128xf32, #tpu.memory_space<vmem>>, %arg4: memref<8x8xf32, #tpu.memory_space<vmem>>, %arg5: memref<8x128xf32, #tpu.memory_space<vmem>>, %arg6: memref<1x8x1xf32, #tpu.memory_space<vmem>>, %arg7: memref<1x8x1xf32, #tpu.memory_space<vmem>>) attributes {dimension_semantics = [#tpu.dimension_semantics<parallel>], iteration_bounds = array<i64: 1>, scalar_prefetch = 0 : i64, scratch_operands = 0 : i64, tpu.core_type = #tpu.core_type<tc>, window_params = [{transform_indices = @transform_0, window_bounds = array<i64: 4, 128>}, {transform_indices = @transform_1, window_bounds = array<i64: 4, 128>}, {transform_indices = @transform_2, window_bounds = array<i64: 4, 128>}, {pipeline_mode = #tpu.pipeline_mode<synchronous>, transform_indices = @transform_3, window_bounds = array<i64: 8, 8>}, {transform_indices = @transform_4, window_bounds = array<i64: 8, 128>}, {transform_indices = @transform_5, window_bounds = array<i64: 1, 8, 1>}, {transform_indices = @transform_6, window_bounds = array<i64: 1, 8, 1>}]} {
    %c0 = arith.constant 0 : index
    %c0_0 = arith.constant 0 : index
    %0 = vector.load %arg1[%c0, %c0_0] : memref<4x128xf32, #tpu.memory_space<vmem>>, vector<4x128xf32>
    %c0_1 = arith.constant 0 : index
    %c0_2 = arith.constant 0 : index
    %1 = vector.load %arg2[%c0_1, %c0_2] : memref<4x128xf32, #tpu.memory_space<vmem>>, vector<4x128xf32>
    %2 = arith.addf %0, %1 : vector<4x128xf32>
    %cst = arith.constant 0.000000e+00 : f32
    %3 = vector.broadcast %cst : f32 to vector<4x128xf32>
    %4 = arith.maximumf %2, %3 : vector<4x128xf32>
    %c0_3 = arith.constant 0 : index
    %c0_4 = arith.constant 0 : index
    %5 = vector.load %arg4[%c0_3, %c0_4] : memref<8x8xf32, #tpu.memory_space<vmem>>, vector<8x8xf32>
    %6 = vector.extract_strided_slice %5 {offsets = [0, 0], sizes = [8, 4], strides = [1, 1]} : vector<8x8xf32> to vector<8x4xf32>
    %cst_5 = arith.constant dense<0.000000e+00> : vector<8x128xf32>
    %7 = tpu.matmul %6, %4, %cst_5 {dimension_numbers = #tpu.dot_dimension_numbers<[1], [0], [0], [1], [0, 0, 1, 1], [], []>} : vector<8x4xf32>, vector<4x128xf32>, vector<8x128xf32> -> vector<8x128xf32>
    %8 = vector.extract_strided_slice %5 {offsets = [0, 4], sizes = [8, 4], strides = [1, 1]} : vector<8x8xf32> to vector<8x4xf32>
    %c0_6 = arith.constant 0 : index
    %c0_7 = arith.constant 0 : index
    %9 = vector.load %arg3[%c0_6, %c0_7] : memref<4x128xf32, #tpu.memory_space<vmem>>, vector<4x128xf32>
    %cst_8 = arith.constant dense<0.000000e+00> : vector<8x128xf32>
    %10 = tpu.matmul %8, %9, %cst_8 {dimension_numbers = #tpu.dot_dimension_numbers<[1], [0], [0], [1], [0, 0, 1, 1], [], []>} : vector<8x4xf32>, vector<4x128xf32>, vector<8x128xf32> -> vector<8x128xf32>
    %11 = arith.addf %7, %10 : vector<8x128xf32>
    %cst_9 = arith.constant 0.000000e+00 : f32
    %12 = vector.broadcast %cst_9 : f32 to vector<8x128xf32>
    %13 = arith.maximumf %11, %12 : vector<8x128xf32>
    %c0_10 = arith.constant 0 : index
    %c0_11 = arith.constant 0 : index
    %14 = vector.load %arg5[%c0_10, %c0_11] : memref<8x128xf32, #tpu.memory_space<vmem>>, vector<8x128xf32>
    tpu.vector_store %arg5[%c0_10, %c0_11], %13 {strides = array<i32>} : memref<8x128xf32, #tpu.memory_space<vmem>>, vector<8x128xf32>,
    %cst_12 = arith.constant dense<0.000000e+00> : vector<8xf32>
    %15 = vector.multi_reduction <add>, %13, %cst_12 [1] : vector<8x128xf32> to vector<8xf32>
    %16 = vector.shape_cast %15 : vector<8xf32> to vector<8x1xf32>
    %17 = vector.shape_cast %16 : vector<8x1xf32> to vector<1x8x1xf32>
    %c0_13 = arith.constant 0 : index
    %c0_14 = arith.constant 0 : index
    %c0_15 = arith.constant 0 : index
    %18 = vector.load %arg6[%c0_13, %c0_14, %c0_15] : memref<1x8x1xf32, #tpu.memory_space<vmem>>, vector<1x8x1xf32>
    tpu.vector_store %arg6[%c0_13, %c0_14, %c0_15], %17 {strides = array<i32>} : memref<1x8x1xf32, #tpu.memory_space<vmem>>, vector<1x8x1xf32>,
    %19 = arith.mulf %13, %13 : vector<8x128xf32>
    %cst_16 = arith.constant dense<0.000000e+00> : vector<8xf32>
    %20 = vector.multi_reduction <add>, %19, %cst_16 [1] : vector<8x128xf32> to vector<8xf32>
    %21 = vector.shape_cast %20 : vector<8xf32> to vector<8x1xf32>
    %22 = vector.shape_cast %21 : vector<8x1xf32> to vector<1x8x1xf32>
    %c0_17 = arith.constant 0 : index
    %c0_18 = arith.constant 0 : index
    %c0_19 = arith.constant 0 : index
    %23 = vector.load %arg7[%c0_17, %c0_18, %c0_19] : memref<1x8x1xf32, #tpu.memory_space<vmem>>, vector<1x8x1xf32>
    tpu.vector_store %arg7[%c0_17, %c0_18, %c0_19], %22 {strides = array<i32>} : memref<1x8x1xf32, #tpu.memory_space<vmem>>, vector<1x8x1xf32>,
    return
  }
  func.func @transform_0(%arg0: i32) -> (i32, i32) {
    %c0_i32 = arith.constant 0 : i32
    %c0_i32_0 = arith.constant 0 : i32
    return %c0_i32, %arg0 : i32, i32
  }
  func.func @transform_1(%arg0: i32) -> (i32, i32) {
    %c0_i32 = arith.constant 0 : i32
    %c0_i32_0 = arith.constant 0 : i32
    return %c0_i32, %arg0 : i32, i32
  }
  func.func @transform_2(%arg0: i32) -> (i32, i32) {
    %c0_i32 = arith.constant 0 : i32
    %c0_i32_0 = arith.constant 0 : i32
    return %c0_i32, %arg0 : i32, i32
  }
  func.func @transform_3(%arg0: i32) -> (i32, i32) {
    %c0_i32 = arith.constant 0 : i32
    %c0_i32_0 = arith.constant 0 : i32
    %c0_i32_1 = arith.constant 0 : i32
    return %c0_i32, %c0_i32_0 : i32, i32
  }
  func.func @transform_4(%arg0: i32) -> (i32, i32) {
    %c0_i32 = arith.constant 0 : i32
    %c0_i32_0 = arith.constant 0 : i32
    return %c0_i32, %arg0 : i32, i32
  }
  func.func @transform_5(%arg0: i32) -> (i32, i32, i32) {
    %c0_i32 = arith.constant 0 : i32
    %c0_i32_0 = arith.constant 0 : i32
    %c0_i32_1 = arith.constant 0 : i32
    return %arg0, %c0_i32, %c0_i32_0 : i32, i32, i32
  }
  func.func @transform_6(%arg0: i32) -> (i32, i32, i32) {
    %c0_i32 = arith.constant 0 : i32
    %c0_i32_0 = arith.constant 0 : i32
    %c0_i32_1 = arith.constant 0 : i32
    return %arg0, %c0_i32, %c0_i32_0 : i32, i32, i32
  }
}

</mosaic_0001>

<llo_original>
// kernel: squeeze.3
$region0: #{squeeze.3}
  %s0 = inlined_call_operand.vmem [shape: f32[1,4,128], index: 0, kind: input, shape index: {}]
  %s1 = inlined_call_operand.vmem [shape: f32[4,2,8,8], index: 1, kind: output, shape index: {}]
  $region1: #{squeeze.3} parent=0
    #allocation0 [shape = 'u8[4096]{0}', space=vmem, size = 0x1000, scoped, tag = 'scoped mem for input reshape']
    %s3 = sshllo.u32 0, 4
    %v4 = vld [vmem:[%s0] sm:%s3]
    %5 = vst [vmem:[#allocation0] sm:%s3] %v4
    %v6 = vld [vmem:[#allocation0] sm:$0xf]
    %vm7 = vcmask 64512
    %8 = vst.msk [vmem:[%s1] ss:$16 sm:$0x3] %vm7, %v6
    %9 = vst.msk [vmem:[%s1] ss:$16 sm:$0xc] %vm7, %v6
    %v10 = vld [vmem:[#allocation0] sm:$0xf]
    %11 = vrot.lane.b32.xlu0 %v10, 120
    %v12 = vpop.permute.xlu0 %11
    %vm13 = vcmask 64512
    %s14 = scalar_lea.vmem %s1, 1
    %15 = vst.msk [vmem:[%s14] ss:$16 sm:$0x3] %vm13, %v12
    %s16 = scalar_lea.vmem %s1, 1
    %17 = vst.msk [vmem:[%s16] ss:$16 sm:$0xc] %vm13, %v12
    %v18 = vld [vmem:[#allocation0] sm:$0xf]
    %19 = vrot.lane.b32.xlu0 %v18, 112
    %v20 = vpop.permute.xlu0 %19
    %vm21 = vcmask 64512
    %s22 = scalar_lea.vmem %s1, 2
    %23 = vst.msk [vmem:[%s22] ss:$16 sm:$0x3] %vm21, %v20
    %s24 = scalar_lea.vmem %s1, 2
    %25 = vst.msk [vmem:[%s24] ss:$16 sm:$0xc] %vm21, %v20
    %v26 = vld [vmem:[#allocation0] sm:$0xf]
    %27 = vrot.lane.b32.xlu0 %v26, 104
    %v28 = vpop.permute.xlu0 %27
    %vm29 = vcmask 64512
    %s30 = scalar_lea.vmem %s1, 3
    %31 = vst.msk [vmem:[%s30] ss:$16 sm:$0x3] %vm29, %v28
    %s32 = scalar_lea.vmem %s1, 3
    %33 = vst.msk [vmem:[%s32] ss:$16 sm:$0xc] %vm29, %v28
    %v34 = vld [vmem:[#allocation0] sm:$0xf]
    %35 = vrot.lane.b32.xlu0 %v34, 96
    %v36 = vpop.permute.xlu0 %35
    %vm37 = vcmask 64512
    %s38 = scalar_lea.vmem %s1, 4
    %39 = vst.msk [vmem:[%s38] ss:$16 sm:$0x3] %vm37, %v36
    %s40 = scalar_lea.vmem %s1, 4
    %41 = vst.msk [vmem:[%s40] ss:$16 sm:$0xc] %vm37, %v36
    %v42 = vld [vmem:[#allocation0] sm:$0xf]
    %43 = vrot.lane.b32.xlu0 %v42, 88
    %v44 = vpop.permute.xlu0 %43
    %vm45 = vcmask 64512
    %s46 = scalar_lea.vmem %s1, 5
    %47 = vst.msk [vmem:[%s46] ss:$16 sm:$0x3] %vm45, %v44
    %s48 = scalar_lea.vmem %s1, 5
    %49 = vst.msk [vmem:[%s48] ss:$16 sm:$0xc] %vm45, %v44
    %v50 = vld [vmem:[#allocation0] sm:$0xf]
    %51 = vrot.lane.b32.xlu0 %v50, 80
    %v52 = vpop.permute.xlu0 %51
    %vm53 = vcmask 64512
    %s54 = scalar_lea.vmem %s1, 6
    %55 = vst.msk [vmem:[%s54] ss:$16 sm:$0x3] %vm53, %v52
    %s56 = scalar_lea.vmem %s1, 6
    %57 = vst.msk [vmem:[%s56] ss:$16 sm:$0xc] %vm53, %v52
    %v58 = vld [vmem:[#allocation0] sm:$0xf]
    %59 = vrot.lane.b32.xlu0 %v58, 72
    %v60 = vpop.permute.xlu0 %59
    %vm61 = vcmask 64512
    %s62 = scalar_lea.vmem %s1, 7
    %63 = vst.msk [vmem:[%s62] ss:$16 sm:$0x3] %vm61, %v60
    %s64 = scalar_lea.vmem %s1, 7
    %65 = vst.msk [vmem:[%s64] ss:$16 sm:$0xc] %vm61, %v60
    %v66 = vld [vmem:[#allocation0] sm:$0xf]
    %67 = vrot.lane.b32.xlu0 %v66, 64
    %v68 = vpop.permute.xlu0 %67
    %vm69 = vcmask 64512
    %s70 = scalar_lea.vmem %s1, 8
    %71 = vst.msk [vmem:[%s70] ss:$16 sm:$0x3] %vm69, %v68
    %s72 = scalar_lea.vmem %s1, 8
    %73 = vst.msk [vmem:[%s72] ss:$16 sm:$0xc] %vm69, %v68
    %v74 = vld [vmem:[#allocation0] sm:$0xf]
    %75 = vrot.lane.b32.xlu0 %v74, 56
    %v76 = vpop.permute.xlu0 %75
    %vm77 = vcmask 64512
    %s78 = scalar_lea.vmem %s1, 9
    %79 = vst.msk [vmem:[%s78] ss:$16 sm:$0x3] %vm77, %v76
    %s80 = scalar_lea.vmem %s1, 9
    %81 = vst.msk [vmem:[%s80] ss:$16 sm:$0xc] %vm77, %v76
    %v82 = vld [vmem:[#allocation0] sm:$0xf]
    %83 = vrot.lane.b32.xlu0 %v82, 48
    %v84 = vpop.permute.xlu0 %83
    %vm85 = vcmask 64512
    %s86 = scalar_lea.vmem %s1, 10
    %87 = vst.msk [vmem:[%s86] ss:$16 sm:$0x3] %vm85, %v84
    %s88 = scalar_lea.vmem %s1, 10
    %89 = vst.msk [vmem:[%s88] ss:$16 sm:$0xc] %vm85, %v84
    %v90 = vld [vmem:[#allocation0] sm:$0xf]
    %91 = vrot.lane.b32.xlu0 %v90, 40
    %v92 = vpop.permute.xlu0 %91
    %vm93 = vcmask 64512
    %s94 = scalar_lea.vmem %s1, 11
    %95 = vst.msk [vmem:[%s94] ss:$16 sm:$0x3] %vm93, %v92
    %s96 = scalar_lea.vmem %s1, 11
    %97 = vst.msk [vmem:[%s96] ss:$16 sm:$0xc] %vm93, %v92
    %v98 = vld [vmem:[#allocation0] sm:$0xf]
    %99 = vrot.lane.b32.xlu0 %v98, 32
    %v100 = vpop.permute.xlu0 %99
    %vm101 = vcmask 64512
    %s102 = scalar_lea.vmem %s1, 12
    %103 = vst.msk [vmem:[%s102] ss:$16 sm:$0x3] %vm101, %v100
    %s104 = scalar_lea.vmem %s1, 12
    %105 = vst.msk [vmem:[%s104] ss:$16 sm:$0xc] %vm101, %v100
    %v106 = vld [vmem:[#allocation0] sm:$0xf]
    %107 = vrot.lane.b32.xlu0 %v106, 24
    %v108 = vpop.permute.xlu0 %107
    %vm109 = vcmask 64512
    %s110 = scalar_lea.vmem %s1, 13
    %111 = vst.msk [vmem:[%s110] ss:$16 sm:$0x3] %vm109, %v108
    %s112 = scalar_lea.vmem %s1, 13
    %113 = vst.msk [vmem:[%s112] ss:$16 sm:$0xc] %vm109, %v108
    %v114 = vld [vmem:[#allocation0] sm:$0xf]
    %115 = vrot.lane.b32.xlu0 %v114, 16
    %v116 = vpop.permute.xlu0 %115
    %vm117 = vcmask 64512
    %s118 = scalar_lea.vmem %s1, 14
    %119 = vst.msk [vmem:[%s118] ss:$16 sm:$0x3] %vm117, %v116
    %s120 = scalar_lea.vmem %s1, 14
    %121 = vst.msk [vmem:[%s120] ss:$16 sm:$0xc] %vm117, %v116
    %v122 = vld [vmem:[#allocation0] sm:$0xf]
    %123 = vrot.lane.b32.xlu0 %v122, 8
    %v124 = vpop.permute.xlu0 %123
    %vm125 = vcmask 64512
    %s126 = scalar_lea.vmem %s1, 15
    %127 = vst.msk [vmem:[%s126] ss:$16 sm:$0x3] %vm125, %v124
    %s128 = scalar_lea.vmem %s1, 15
    %129 = vst.msk [vmem:[%s128] ss:$16 sm:$0xc] %vm125, %v124

// kernel: _lambda_.4
$region0: #{_lambda_.4}
  #allocation0 [shape = 'u32[]', space=smem, size = 0x4, offset = 0x4, fixed_abs, tag = 'smem constant byte address 0x4 - core index']
  #allocation1 [shape = 'u32[144,128]{1,0:T(1,128)}', space=vmem, size = 0x12000, scoped, tag = 'internal scratch']
  %s0 = inlined_call_operand.vmem [shape: f32[2,4,8,32], index: 0, kind: input, shape index: {}]
  %s1 = inlined_call_operand.vmem [shape: f32[4,2,8,8], index: 1, kind: output, shape index: {}]
  %s2 = sld [smem:[#allocation0]]
  $region71: #{_lambda_.4} parent=0
    _
  %s4 = ssub.s32 1, %s2
  %s5 = scalar_select 0, %s4, %s2
  $region1: #{_lambda_.4} parent=0
    #allocation2 [shape = 'u8[32768]{0}', space=vmem, size = 0x8000, scoped, tag = 'output window, operand 0']
    loop: start=0, step=1, limit=4
    $region2: #{_lambda_.4} parent=1 // loop_pre_header
      _
    $region3: #{_lambda_.4} parent=1 // loop_header
      %s7 = sphi 0, %s11
      %p8 = scmp.ge.s32.totalorder %s7, 4
      %s14 = sphi 0, %s26
      %s15 = sphi 0, %s22
      %s16 = sphi 0, %s14
      %s17 = sphi 0, %s15
      %s18 = sphi 0, %s16
      %s19 = sphi 0, %s17
      %s31 = sphi 0, %s33
      %s34 = sphi 0, %s31
      %s35 = sphi 0, %s34
      %s51 = sphi 0, %s35
      %s59 = sphi 0, %s61
      %s62 = sphi 0, %s59
      %s63 = sphi 0, %s62
      %s79 = sphi 0, %s63
    $region4: #{_lambda_.4} parent=1 // loop_header_branch
      %10 = sbr.rel (%p8) target = $region8
    $region5: #{_lambda_.4} parent=1 // loop_body
      %s12 = ssub.s32 %s7, 1
      %s13 = ssub.s32 %s7, 2
      %s20 = sadd.s32 1, %s15
      %p21 = scmp.ge.s32.totalorder %s20, 1
      %s22 = scalar_select %p21, 0, %s20
      %s23 = sadd.s32 1, %s14
      %s24 = scalar_select %p21, %s23, %s14
      %p25 = scmp.ge.s32.totalorder %s24, 2
      %s26 = scalar_select %p25, 0, %s24
      %s27 = ssub.s32 %s14, %s26
      %s28 = ssub.s32 %s15, %s22
      %s29 = sor.u32 %s27, %s28
      %p30 = scmp.eq.s32.totalorder %s29, 0
      %s32 = sadd.s32 %s31, 1
      %s33 = scalar_select %p30, %s31, %s32
      %p36 = pneg %p30
      %p37 = scmp.eq.s32.totalorder %s7, 1
      %p38 = por %p36, %p37
      %p39 = scmp.ne.s32.totalorder %s31, %s34
      %p40 = scmp.eq.s32.totalorder %s7, 0
      %p41 = por %p39, %p40
      %p42 = scmp.ne.s32.totalorder %s31, %s34
      %p43 = scmp.eq.s32.totalorder %s12, 1
      %p44 = por %p42, %p43
      %p45 = scmp.ne.s32.totalorder %s34, %s35
      %p46 = scmp.eq.s32.totalorder %s12, 0
      %p47 = por %p45, %p46
      %p48 = scmp.ne.s32.totalorder %s34, %s35
      %p49 = scmp.eq.s32.totalorder %s13, 1
      %p50 = por %p48, %p49
      %p52 = scmp.ne.s32.totalorder %s35, %s51
      %p53 = scmp.eq.s32.totalorder %s13, 0
      %p54 = por %p52, %p53
      %s55 = ssub.s32 %s15, %s22
      %s56 = ssub.s32 %s14, %s26
      %s57 = sor.u32 %s55, %s56
      %p58 = scmp.eq.s32.totalorder %s57, 0
      %s60 = sadd.s32 %s59, 1
      %s61 = scalar_select %p58, %s59, %s60
      %p64 = pneg %p58
      %p65 = scmp.eq.s32.totalorder %s7, 1
      %p66 = por %p64, %p65
      %p67 = scmp.ne.s32.totalorder %s59, %s62
      %p68 = scmp.eq.s32.totalorder %s7, 0
      %p69 = por %p67, %p68
      %p70 = scmp.ne.s32.totalorder %s59, %s62
      %p71 = scmp.eq.s32.totalorder %s12, 1
      %p72 = por %p70, %p71
      %p73 = scmp.ne.s32.totalorder %s62, %s63
      %p74 = scmp.eq.s32.totalorder %s12, 0
      %p75 = por %p73, %p74
      %p76 = scmp.ne.s32.totalorder %s62, %s63
      %p77 = scmp.eq.s32.totalorder %s13, 1
      %p78 = por %p76, %p77
      %p80 = scmp.ne.s32.totalorder %s63, %s79
      %p81 = scmp.eq.s32.totalorder %s13, 0
      %p82 = por %p80, %p81
      %p83 = scmp.le.s32.totalorder 1, %s7
      %p84 = scmp.lt.s32.totalorder %s7, 3
      %p85 = pnand %p83, %p84
      %p86 = pneg %p85
      // Predicated region
      $region9: #{_lambda_.4} parent=5 // pred_check
        _
      $region10: #{_lambda_.4} parent=5 // pred_check_branch
        %88 = sbr.rel (%p85) target = $region12
      $region11: #{_lambda_.4} parent=5 // pred_region
        %s89 = ssub.s32 %s7, 1
      $region12: #{_lambda_.4} parent=5 // pred_fallthru
        _
      %p90 = scmp.lt.s32.totalorder %s7, 2
      // Predicated region
      $region13: #{_lambda_.4} parent=5 // pred_check
        %p91 = pneg %p90
      $region14: #{_lambda_.4} parent=5 // pred_check_branch
        %93 = sbr.rel (%p91) target = $region16
      $region15: #{_lambda_.4} parent=5 // pred_region
        // Predicated region
        $region17: #{_lambda_.4} parent=15 // pred_check
          %p94 = pneg %p41
        $region18: #{_lambda_.4} parent=15 // pred_check_branch
          %96 = sbr.rel (%p94) target = $region20
        $region19: #{_lambda_.4} parent=15 // pred_region
          %s97 = smul.u32 4, %s15
          %p98 = scmp.lt.s32.totalorder %s14, 1
          %s99 = scalar_select %p98, %s14, 1
          %p100 = scmp.lt.s32.totalorder %s97, 3
          %s101 = scalar_select %p100, %s97, 3
          %s102 = smul.addr %s99, 4
          %s103 = sadd.s32 %s101, %s102
          %s104 = smul.addr %s103, 8
          %s105 = scalar_lea.vmem %s0, %s104
          %s106 = smul.u32 4, %s15
        $region20: #{_lambda_.4} parent=15 // pred_fallthru
          _
      $region16: #{_lambda_.4} parent=5 // pred_fallthru
        _
      %p107 = scmp.le.s32.totalorder 1, %s7
      %p108 = scmp.lt.s32.totalorder %s7, 3
      %p109 = pnand %p107, %p108
      %p110 = pneg %p109
      // Predicated region
      $region21: #{_lambda_.4} parent=5 // pred_check
        _
      $region22: #{_lambda_.4} parent=5 // pred_check_branch
        %112 = sbr.rel (%p109) target = $region24
      $region23: #{_lambda_.4} parent=5 // pred_region
        %s113 = ssub.s32 %s7, 1
        %s114 = smul.u32 4, %s17
        %p115 = scmp.lt.s32.totalorder %s16, 1
        %s116 = scalar_select %p115, %s16, 1
        %p117 = scmp.lt.s32.totalorder %s114, 3
        %s118 = scalar_select %p117, %s114, 3
        %s119 = smul.addr %s116, 4
        %s120 = sadd.s32 %s118, %s119
        %s121 = smul.addr %s120, 8
        %s122 = scalar_lea.vmem %s0, %s121
        %p123 = pneg %p47
        %p124 = pneg %p44
        %p125 = pneg %p75
        %p126 = pneg %p72
        %s127 = sand.u32 %s62, 1
        %s128 = sand.u32 %s62, 1
        %s129 = smul.addr %s128, 32
        %s130 = scalar_lea.vmem [#allocation2], %s129
        %s131 = smul.u32 4, %s17
        %p132 = scmp.lt.s32.totalorder %s16, 1
        %s133 = scalar_select %p132, %s16, 1
        %p134 = scmp.lt.s32.totalorder %s131, 3
        %s135 = scalar_select %p134, %s131, 3
        %s136 = smul.addr %s133, 4
        %s137 = sadd.s32 %s135, %s136
        %s138 = smul.addr %s137, 8
        %s139 = scalar_lea.vmem %s0, %s138
        %s140 = smul.u32 4, %s17
        %s141 = smul.u32 4, %s17
        %v142 = vld [vmem:[%s139] sm:$0xff]
        %v143 = vld [vmem:[%s139 + $0x8] sm:$0xff]
        %v144 = vld [vmem:[%s139 + $0x10] sm:$0xff]
        %v145 = vld [vmem:[%s139 + $0x18] sm:$0xff]
        %150 = vrot.lane.b32.xlu0 %v142, 112
        %v151 = vpop.permute.xlu0 %150
        %152 = vrot.lane.b32.xlu0 %v143, 112
        %v153 = vpop.permute.xlu0 %152
        %154 = vrot.lane.b32.xlu0 %v144, 112
        %v155 = vpop.permute.xlu0 %154
        %156 = vrot.lane.b32.xlu0 %v145, 112
        %v157 = vpop.permute.xlu0 %156
        %v162 = vmax.f32 %v142, %v151
        %v163 = vmax.f32 %v143, %v153
        %v164 = vmax.f32 %v144, %v155
        %v165 = vmax.f32 %v145, %v157
        %v166 = vlaneseq
        %v167 = vshrl.u32 %v166, 7
        %v168 = vadd.s32 %v167, 8
        %v169 = vlaneseq
        %v170 = vand.u32 %v169, 127
        %v171 = vmul.u32 %v170, 2
        %vm172 = vcmp.eq.s32.totalorder %v167, %v171
        %vm173 = vcmp.eq.s32.totalorder %v168, %v171
        %v174 = vsel %vm172, 1, 0
        %v175 = vsel %vm173, 1, 0
        %v176 = vcvt.s32.f32 %v174
        %v177 = vcvt.s32.f32 %v175
        %v178 = vadd.s32 %v171, 1
        %vm179 = vcmp.eq.s32.totalorder %v167, %v178
        %vm180 = vcmp.eq.s32.totalorder %v168, %v178
        %v181 = vsel %vm179, 1, 0
        %v182 = vsel %vm180, 1, 0
        %v183 = vcvt.s32.f32 %v181
        %v184 = vcvt.s32.f32 %v182
        %vm185 = vcmask 130048
        %v187 = vsel %vm185, %v162, 0
        %v190 = vsel %vm185, %v163, 0
        %v193 = vsel %vm185, %v164, 0
        %v196 = vsel %vm185, %v165, 0
        %198 = vmatprep.subr.mxu0 0.0
        %199 = vmatpush1.msra.mxu0 %v176
        %200 = vmatprep.subr.mxu0 0.0
        %201 = vmatpush1.msra.mxu0 %v177
        %202 = vmatprep.subr.mxu0 0.0
        %203 = vmatpush1.msra.mxu0 0.0
        %204 = vmatprep.subr.mxu0 0.0
        %205 = vmatpush1.msra.mxu0 0.0
        %206 = vmatprep.subr.mxu0 0.0
        %207 = vmatpush1.msra.mxu0 0.0
        %208 = vmatprep.subr.mxu0 0.0
        %209 = vmatpush1.msra.mxu0 0.0
        %210 = vmatprep.subr.mxu0 0.0
        %211 = vmatpush1.msra.mxu0 0.0
        %212 = vmatprep.subr.mxu0 0.0
        %213 = vmatpush1.msra.mxu0 0.0
        %214 = vmatprep.subr.mxu0 0.0
        %215 = vmatpush1.msra.mxu0 0.0
        %216 = vmatprep.subr.mxu0 0.0
        %217 = vmatpush1.msra.mxu0 0.0
        %218 = vmatprep.subr.mxu0 0.0
        %219 = vmatpush1.msra.mxu0 0.0
        %220 = vmatprep.subr.mxu0 0.0
        %221 = vmatpush1.msra.mxu0 0.0
        %222 = vmatprep.subr.mxu0 0.0
        %223 = vmatpush1.msra.mxu0 0.0
        %224 = vmatprep.subr.mxu0 0.0
        %225 = vmatpush1.msra.mxu0 0.0
        %226 = vmatprep.subr.mxu0 0.0
        %227 = vmatpush1.msra.mxu0 0.0
        %228 = vmatprep.subr.mxu0 0.0
        %229 = vmatpush1.msra.mxu0 0.0
        %230 = vmatprep.subr.mxu0 0.0
        %231 = vmatpush1.msra.mxu0 0.0
        %232 = vmatprep.subr.mxu0 0.0
        %233 = vmatpush1.msra.mxu0 0.0
        %234 = vmatprep.subr.mxu0 0.0
        %235 = vmatpush1.msra.mxu0 0.0
        %236 = vmatprep.subr.mxu0 0.0
        %237 = vmatpush1.msra.mxu0 0.0
        %238 = vmatprep.subr.mxu0 0.0
        %239 = vmatpush1.msra.mxu0 0.0
        %240 = vmatprep.subr.mxu0 0.0
        %241 = vmatpush1.msra.mxu0 0.0
        %242 = vmatprep.subr.mxu0 0.0
        %243 = vmatpush1.msra.mxu0 0.0
        %244 = vmatprep.subr.mxu0 0.0
        %245 = vmatpush1.msra.mxu0 0.0
        %246 = vmatprep.subr.mxu0 0.0
        %247 = vmatpush1.msra.mxu0 0.0
        %248 = vmatprep.subr.mxu0 0.0
        %249 = vmatpush1.msra.mxu0 0.0
        %250 = vmatprep.subr.mxu0 0.0
        %251 = vmatpush1.msra.mxu0 0.0
        %252 = vmatprep.subr.mxu0 0.0
        %253 = vmatpush1.msra.mxu0 0.0
        %254 = vmatprep.subr.mxu0 0.0
        %255 = vmatpush1.msra.mxu0 0.0
        %256 = vmatprep.subr.mxu0 0.0
        %257 = vmatpush1.msra.mxu0 0.0
        %258 = vmatprep.subr.mxu0 0.0
        %259 = vmatpush1.msra.mxu0 0.0
        %260 = vmatprep.subr.mxu0 0.0
        %261 = vmatpush1.msra.mxu0 0.0
        %262 = vmatprep.mubr.f32.mxu0 0.0
        %263 = vmatmul.mubr.f32.gmra.mrb[0].mxu0 %v187
        %v264 = vpop.f32.mrb[0].mxu0
        %v265 = vadd.f32 0.0, %v264
        %v266 = vpop.f32.mrb[0].mxu0
        %267 = vmatprep.mubr.f32.mxu0 0.0
        %268 = vmatmul.mubr.f32.gmra.mrb[0].mxu0 %v190
        %v269 = vpop.f32.mrb[0].mxu0
        %v270 = vadd.f32 0.0, %v269
        %v271 = vpop.f32.mrb[0].mxu0
        %272 = vmatprep.mubr.f32.mxu0 0.0
        %273 = vmatmul.mubr.f32.gmra.mrb[0].mxu0 %v193
        %v274 = vpop.f32.mrb[0].mxu0
        %v275 = vadd.f32 0.0, %v274
        %v276 = vpop.f32.mrb[0].mxu0
        %277 = vmatprep.mubr.f32.mxu0 0.0
        %278 = vmatmul.mubr.f32.gmra.mrb[0].mxu0 %v196
        %v279 = vpop.f32.mrb[0].mxu0
        %v280 = vadd.f32 0.0, %v279
        %v281 = vpop.f32.mrb[0].mxu0
        %282 = vdwg.mxu0
        %283 = vmatprep.subr.mxu0 0.0
        %284 = vmatpush1.msra.mxu0 %v183
        %285 = vmatprep.subr.mxu0 0.0
        %286 = vmatpush1.msra.mxu0 %v184
        %287 = vmatprep.subr.mxu0 0.0
        %288 = vmatpush1.msra.mxu0 0.0
        %289 = vmatprep.subr.mxu0 0.0
        %290 = vmatpush1.msra.mxu0 0.0
        %291 = vmatprep.subr.mxu0 0.0
        %292 = vmatpush1.msra.mxu0 0.0
        %293 = vmatprep.subr.mxu0 0.0
        %294 = vmatpush1.msra.mxu0 0.0
        %295 = vmatprep.subr.mxu0 0.0
        %296 = vmatpush1.msra.mxu0 0.0
        %297 = vmatprep.subr.mxu0 0.0
        %298 = vmatpush1.msra.mxu0 0.0
        %299 = vmatprep.subr.mxu0 0.0
        %300 = vmatpush1.msra.mxu0 0.0
        %301 = vmatprep.subr.mxu0 0.0
        %302 = vmatpush1.msra.mxu0 0.0
        %303 = vmatprep.subr.mxu0 0.0
        %304 = vmatpush1.msra.mxu0 0.0
        %305 = vmatprep.subr.mxu0 0.0
        %306 = vmatpush1.msra.mxu0 0.0
        %307 = vmatprep.subr.mxu0 0.0
        %308 = vmatpush1.msra.mxu0 0.0
        %309 = vmatprep.subr.mxu0 0.0
        %310 = vmatpush1.msra.mxu0 0.0
        %311 = vmatprep.subr.mxu0 0.0
        %312 = vmatpush1.msra.mxu0 0.0
        %313 = vmatprep.subr.mxu0 0.0
        %314 = vmatpush1.msra.mxu0 0.0
        %315 = vmatprep.subr.mxu0 0.0
        %316 = vmatpush1.msra.mxu0 0.0
        %317 = vmatprep.subr.mxu0 0.0
        %318 = vmatpush1.msra.mxu0 0.0
        %319 = vmatprep.subr.mxu0 0.0
        %320 = vmatpush1.msra.mxu0 0.0
        %321 = vmatprep.subr.mxu0 0.0
        %322 = vmatpush1.msra.mxu0 0.0
        %323 = vmatprep.subr.mxu0 0.0
        %324 = vmatpush1.msra.mxu0 0.0
        %325 = vmatprep.subr.mxu0 0.0
        %326 = vmatpush1.msra.mxu0 0.0
        %327 = vmatprep.subr.mxu0 0.0
        %328 = vmatpush1.msra.mxu0 0.0
        %329 = vmatprep.subr.mxu0 0.0
        %330 = vmatpush1.msra.mxu0 0.0
        %331 = vmatprep.subr.mxu0 0.0
        %332 = vmatpush1.msra.mxu0 0.0
        %333 = vmatprep.subr.mxu0 0.0
        %334 = vmatpush1.msra.mxu0 0.0
        %335 = vmatprep.subr.mxu0 0.0
        %336 = vmatpush1.msra.mxu0 0.0
        %337 = vmatprep.subr.mxu0 0.0
        %338 = vmatpush1.msra.mxu0 0.0
        %339 = vmatprep.subr.mxu0 0.0
        %340 = vmatpush1.msra.mxu0 0.0
        %341 = vmatprep.subr.mxu0 0.0
        %342 = vmatpush1.msra.mxu0 0.0
        %343 = vmatprep.subr.mxu0 0.0
        %344 = vmatpush1.msra.mxu0 0.0
        %345 = vmatprep.subr.mxu0 0.0
        %346 = vmatpush1.msra.mxu0 0.0
        %347 = vmatprep.mubr.f32.mxu0 0.0
        %348 = vmatmul.mubr.f32.gmra.mrb[0].mxu0 %v187
        %v349 = vpop.f32.mrb[0].mxu0
        %v350 = vadd.f32 0.0, %v349
        %v351 = vpop.f32.mrb[0].mxu0
        %352 = vmatprep.mubr.f32.mxu0 0.0
        %353 = vmatmul.mubr.f32.gmra.mrb[0].mxu0 %v190
        %v354 = vpop.f32.mrb[0].mxu0
        %v355 = vadd.f32 0.0, %v354
        %v356 = vpop.f32.mrb[0].mxu0
        %357 = vmatprep.mubr.f32.mxu0 0.0
        %358 = vmatmul.mubr.f32.gmra.mrb[0].mxu0 %v193
        %v359 = vpop.f32.mrb[0].mxu0
        %v360 = vadd.f32 0.0, %v359
        %v361 = vpop.f32.mrb[0].mxu0
        %362 = vmatprep.mubr.f32.mxu0 0.0
        %363 = vmatmul.mubr.f32.gmra.mrb[0].mxu0 %v196
        %v364 = vpop.f32.mrb[0].mxu0
        %v365 = vadd.f32 0.0, %v364
        %v366 = vpop.f32.mrb[0].mxu0
        %367 = vdwg.mxu0
        %v368 = vmax.f32 %v265, %v350
        %v369 = vmax.f32 %v270, %v355
        %v370 = vmax.f32 %v275, %v360
        %v371 = vmax.f32 %v280, %v365
        %vm372 = vcmask 64512
        %373 = vst.msk [vmem:[%s130] sm:$0xff] %vm372, %v368
        %374 = vst.msk [vmem:[%s130 + $0x8] sm:$0xff] %vm372, %v369
        %375 = vst.msk [vmem:[%s130 + $0x10] sm:$0xff] %vm372, %v370
        %376 = vst.msk [vmem:[%s130 + $0x18] sm:$0xff] %vm372, %v371
        %s377 = sand.u32 %s62, 1
        %s378 = sand.u32 %s62, 1
        %s379 = smul.addr %s378, 32
        %s380 = scalar_lea.vmem [#allocation2], %s379
        // Predicated region
        $region25: #{_lambda_.4} parent=23 // pred_check
          %p381 = pneg %p72
        $region26: #{_lambda_.4} parent=23 // pred_check_branch
          %383 = sbr.rel (%p381) target = $region28
        $region27: #{_lambda_.4} parent=23 // pred_region
          %s384 = smul.u32 4, %s17
          %s385 = smul.addr %s384, 2
          %s386 = sadd.s32 %s16, %s385
          %s387 = smul.addr %s386, 8
          %s388 = scalar_lea.vmem %s1, %s387
          // Predicated region
          $region29: #{_lambda_.4} parent=27 // pred_check
            _
          $region30: #{_lambda_.4} parent=27 // pred_check_branch
            %390 = sbr.rel (0) target = $region32
          $region31: #{_lambda_.4} parent=27 // pred_region
            // Predicated region
            $region33: #{_lambda_.4} parent=31 // pred_check
              _
            $region34: #{_lambda_.4} parent=31 // pred_check_branch
              %392 = sbr.rel (0) target = $region36
            $region35: #{_lambda_.4} parent=31 // pred_region
              // Predicated region
              $region48: #{_lambda_.4} parent=35 // pred_check
                _
              $region49: #{_lambda_.4} parent=35 // pred_check_branch
                %413 = sbr.rel (0) target = $region51
              $region50: #{_lambda_.4} parent=35 // pred_region
                loop: start=0, step=1, limit=1
                $region52: #{_lambda_.4} parent=50 // loop_pre_header
                  _
                $region53: #{_lambda_.4} parent=50 // loop_header
                  %s415 = sphi 0, %s419
                  %p416 = scmp.ge.s32.totalorder %s415, 1
                  %s420 = sphi %s380, %s380
                  %s421 = sphi %s388, %s388
                $region54: #{_lambda_.4} parent=50 // loop_header_branch
                  %418 = sbr.rel (%p416) target = $region58
                $region55: #{_lambda_.4} parent=50 // loop_body
                  %v422 = vld [vmem:[%s420] sm:$0xff]
                  %423 = vst [vmem:[%s421] sm:$0xff] %v422
                  %v424 = vld [vmem:[%s420 + $0x8] sm:$0xff]
                  %425 = vst [vmem:[%s421 + $0x10] sm:$0xff] %v424
                  %v426 = vld [vmem:[%s420 + $0x10] sm:$0xff]
                  %427 = vst [vmem:[%s421 + $0x20] sm:$0xff] %v426
                  %v428 = vld [vmem:[%s420 + $0x18] sm:$0xff]
                  %429 = vst [vmem:[%s421 + $0x30] sm:$0xff] %v428
                $region56: #{_lambda_.4} parent=50 // loop_footer
                  %s419 = sadd.s32 1, %s415
                $region57: #{_lambda_.4} parent=50 // loop_footer_branch
                  %414 = sbr.rel target = $region53
                $region58: #{_lambda_.4} parent=50 // loop_exit
                  _
              $region51: #{_lambda_.4} parent=35 // pred_fallthru
                _
              // Predicated region
              $region59: #{_lambda_.4} parent=35 // pred_check
                _
              $region60: #{_lambda_.4} parent=35 // pred_check_branch
                %431 = sbr.rel target = $region62
              $region61: #{_lambda_.4} parent=35 // pred_region
                _
              $region62: #{_lambda_.4} parent=35 // pred_fallthru
                _
            $region36: #{_lambda_.4} parent=31 // pred_fallthru
              _
            // Predicated region
            $region37: #{_lambda_.4} parent=31 // pred_check
              _
            $region38: #{_lambda_.4} parent=31 // pred_check_branch
              %394 = sbr.rel target = $region40
            $region39: #{_lambda_.4} parent=31 // pred_region
              loop: start=0, step=1, limit=1
              $region41: #{_lambda_.4} parent=39 // loop_pre_header
                _
              $region42: #{_lambda_.4} parent=39 // loop_header
                %s397 = sphi 0, %s401
                %p398 = scmp.ge.s32.totalorder %s397, 1
                %s402 = sphi %s380, %s380
                %s403 = sphi %s388, %s388
              $region43: #{_lambda_.4} parent=39 // loop_header_branch
                %400 = sbr.rel (%p398) target = $region47
              $region44: #{_lambda_.4} parent=39 // loop_body
                %v404 = vld [vmem:[%s402] sm:$0xff]
                %405 = vst [vmem:[%s403] sm:$0xff] %v404
                %v406 = vld [vmem:[%s402 + $0x8] sm:$0xff]
                %407 = vst [vmem:[%s403 + $0x10] sm:$0xff] %v406
                %v408 = vld [vmem:[%s402 + $0x10] sm:$0xff]
                %409 = vst [vmem:[%s403 + $0x20] sm:$0xff] %v408
                %v410 = vld [vmem:[%s402 + $0x18] sm:$0xff]
                %411 = vst [vmem:[%s403 + $0x30] sm:$0xff] %v410
              $region45: #{_lambda_.4} parent=39 // loop_footer
                %s401 = sadd.s32 1, %s397
              $region46: #{_lambda_.4} parent=39 // loop_footer_branch
                %396 = sbr.rel target = $region42
              $region47: #{_lambda_.4} parent=39 // loop_exit
                _
            $region40: #{_lambda_.4} parent=31 // pred_fallthru
              _
          $region32: #{_lambda_.4} parent=27 // pred_fallthru
            _
          %432 = vnop
        $region28: #{_lambda_.4} parent=23 // pred_fallthru
          _
      $region24: #{_lambda_.4} parent=5 // pred_fallthru
        _
      %p433 = scmp.le.s32.totalorder 2, %s7
      // Predicated region
      $region63: #{_lambda_.4} parent=5 // pred_check
        %p434 = pneg %p433
      $region64: #{_lambda_.4} parent=5 // pred_check_branch
        %436 = sbr.rel (%p434) target = $region66
      $region65: #{_lambda_.4} parent=5 // pred_region
        %s437 = ssub.s32 %s7, 2
        // Predicated region
        $region67: #{_lambda_.4} parent=65 // pred_check
          %p438 = pneg %p78
        $region68: #{_lambda_.4} parent=65 // pred_check_branch
          %440 = sbr.rel (%p438) target = $region70
        $region69: #{_lambda_.4} parent=65 // pred_region
          %s441 = sand.u32 %s63, 1
          %s442 = sand.u32 %s63, 1
          %s443 = smul.addr %s442, 32
          %s444 = scalar_lea.vmem [#allocation2], %s443
        $region70: #{_lambda_.4} parent=65 // pred_fallthru
          _
      $region66: #{_lambda_.4} parent=5 // pred_fallthru
        _
    $region6: #{_lambda_.4} parent=1 // loop_footer
      %s11 = sadd.s32 1, %s7
    $region7: #{_lambda_.4} parent=1 // loop_footer_branch
      %6 = sbr.rel target = $region3
    $region8: #{_lambda_.4} parent=1 // loop_exit
      _

// kernel: _lambda_.7
$region0: #{_lambda_.7}
  #allocation0 [shape = 'u32[]', space=smem, size = 0x4, offset = 0x4, fixed_abs, tag = 'smem constant byte address 0x4 - core index']
  #allocation1 [shape = 'u32[144,128]{1,0:T(1,128)}', space=vmem, size = 0x12000, scoped, tag = 'internal scratch']
  %s0 = inlined_call_operand.vmem [shape: f32[8,128], index: 0, kind: input, shape index: {}]
  %s1 = inlined_call_operand.vmem [shape: f32[8,1], index: 1, kind: input, shape index: {}]
  %s2 = inlined_call_operand.vmem [shape: f32[8,1], index: 2, kind: input, shape index: {}]
  %s3 = inlined_call_operand.vmem [shape: f32[8,128], index: 3, kind: output, shape index: {}]
  %s4 = sld [smem:[#allocation0]]
  $region22: #{_lambda_.7} parent=0
    _
  %s6 = ssub.s32 1, %s4
  %s7 = scalar_select 0, %s6, %s4
  // Predicated region
  $region2: #{_lambda_.7} parent=0 // pred_check
    _
  $region3: #{_lambda_.7} parent=0 // pred_check_branch
    %9 = sbr.rel (0) target = $region5
  $region4: #{_lambda_.7} parent=0 // pred_region
    _
  $region5: #{_lambda_.7} parent=0 // pred_fallthru
    _
  // Predicated region
  $region6: #{_lambda_.7} parent=0 // pred_check
    _
  $region7: #{_lambda_.7} parent=0 // pred_check_branch
    %11 = sbr.rel (0) target = $region9
  $region8: #{_lambda_.7} parent=0 // pred_region
    _
  $region9: #{_lambda_.7} parent=0 // pred_fallthru
    _
  // Predicated region
  $region10: #{_lambda_.7} parent=0 // pred_check
    _
  $region11: #{_lambda_.7} parent=0 // pred_check_branch
    %13 = sbr.rel (0) target = $region13
  $region12: #{_lambda_.7} parent=0 // pred_region
    _
  $region13: #{_lambda_.7} parent=0 // pred_fallthru
    _
  %v14 = vld [vmem:[%s0] sm:$0xff]
  %v15 = vld [vmem:[%s1] sm:$0xff]
  %17 = vset.pattern.permute.xlu0 0
  %18 = vperm.xlu0 %17, %v15
  %v19 = vpop.permute.xlu0 %18
  %v21 = vmul.f32 %v14, %v19
  %v22 = vld [vmem:[%s2] sm:$0xff]
  %24 = vset.pattern.permute.xlu0 0
  %25 = vperm.xlu0 %24, %v22
  %v26 = vpop.permute.xlu0 %25
  %v28 = vadd.f32 %v21, %v26
  %29 = vst [vmem:[%s3] sm:$0xff] %v28
  // Predicated region
  $region14: #{_lambda_.7} parent=0 // pred_check
    _
  $region15: #{_lambda_.7} parent=0 // pred_check_branch
    %31 = sbr.rel (0) target = $region17
  $region16: #{_lambda_.7} parent=0 // pred_region
    _
  $region17: #{_lambda_.7} parent=0 // pred_fallthru
    _
  // Predicated region
  $region18: #{_lambda_.7} parent=0 // pred_check
    _
  $region19: #{_lambda_.7} parent=0 // pred_check_branch
    %33 = sbr.rel (0) target = $region21
  $region20: #{_lambda_.7} parent=0 // pred_region
    _
  $region21: #{_lambda_.7} parent=0 // pred_fallthru
    _

// kernel: _lambda_.6
$region0: #{_lambda_.6}
  #allocation0 [shape = 'u32[]', space=smem, size = 0x4, offset = 0x4, fixed_abs, tag = 'smem constant byte address 0x4 - core index']
  #allocation1 [shape = 'u32[144,128]{1,0:T(1,128)}', space=vmem, size = 0x12000, scoped, tag = 'internal scratch']
  %s0 = inlined_call_operand.vmem [shape: f32[4,128], index: 0, kind: input, shape index: {}]
  %s1 = inlined_call_operand.vmem [shape: f32[4,128], index: 1, kind: input, shape index: {}]
  %s2 = inlined_call_operand.vmem [shape: f32[4,128], index: 2, kind: input, shape index: {}]
  %s3 = inlined_call_operand.vmem [shape: f32[8,8], index: 3, kind: input, shape index: {}]
  %s4 = inlined_call_operand.vmem [shape: f32[8,128], index: 4, kind: output, shape index: {0}]
  %s5 = inlined_call_operand.vmem [shape: f32[1,8,1], index: 5, kind: output, shape index: {1}]
  %s6 = inlined_call_operand.vmem [shape: f32[1,8,1], index: 6, kind: output, shape index: {2}]
  %7 = xla_tuple %s4, %s5, %s6
  %s8 = sld [smem:[#allocation0]]
  $region42: #{_lambda_.6} parent=0
    _
  %s10 = ssub.s32 1, %s8
  %s11 = scalar_select 0, %s10, %s8
  // Predicated region
  $region2: #{_lambda_.6} parent=0 // pred_check
    _
  $region3: #{_lambda_.6} parent=0 // pred_check_branch
    %13 = sbr.rel (0) target = $region5
  $region4: #{_lambda_.6} parent=0 // pred_region
    _
  $region5: #{_lambda_.6} parent=0 // pred_fallthru
    _
  // Predicated region
  $region6: #{_lambda_.6} parent=0 // pred_check
    _
  $region7: #{_lambda_.6} parent=0 // pred_check_branch
    %15 = sbr.rel (0) target = $region9
  $region8: #{_lambda_.6} parent=0 // pred_region
    _
  $region9: #{_lambda_.6} parent=0 // pred_fallthru
    _
  // Predicated region
  $region10: #{_lambda_.6} parent=0 // pred_check
    _
  $region11: #{_lambda_.6} parent=0 // pred_check_branch
    %17 = sbr.rel (0) target = $region13
  $region12: #{_lambda_.6} parent=0 // pred_region
    _
  $region13: #{_lambda_.6} parent=0 // pred_fallthru
    _
  // Predicated region
  $region14: #{_lambda_.6} parent=0 // pred_check
    _
  $region15: #{_lambda_.6} parent=0 // pred_check_branch
    %19 = sbr.rel (0) target = $region17
  $region16: #{_lambda_.6} parent=0 // pred_region
    _
  $region17: #{_lambda_.6} parent=0 // pred_fallthru
    _
  %v20 = vld [vmem:[%s0] sm:$0xf]
  %v21 = vld [vmem:[%s1] sm:$0xf]
  %v22 = vadd.f32 %v20, %v21
  %v23 = vmax.f32 %v22, 0.0
  %v24 = vld [vmem:[%s3] sm:$0xff]
  %v25 = vld [vmem:[%s2] sm:$0xf]
  %27 = vrot.lane.b32.xlu0 %v24, 124
  %v28 = vpop.permute.xlu0 %27
  %vm29 = vcmask 31744
  %v30 = vsel %vm29, %v28, 0
  %vm32 = vcmask 1043456
  %v34 = vsel %vm32, %v25, 0
  %36 = vmatprep.subr.mxu0 0.0
  %37 = vmatpush1.msra.mxu0 %v34
  %38 = vmatprep.subr.mxu0 0.0
  %39 = vmatpush1.msra.mxu0 0.0
  %40 = vmatprep.subr.mxu0 0.0
  %41 = vmatpush1.msra.mxu0 0.0
  %42 = vmatprep.subr.mxu0 0.0
  %43 = vmatpush1.msra.mxu0 0.0
  %44 = vmatprep.subr.mxu0 0.0
  %45 = vmatpush1.msra.mxu0 0.0
  %46 = vmatprep.subr.mxu0 0.0
  %47 = vmatpush1.msra.mxu0 0.0
  %48 = vmatprep.subr.mxu0 0.0
  %49 = vmatpush1.msra.mxu0 0.0
  %50 = vmatprep.subr.mxu0 0.0
  %51 = vmatpush1.msra.mxu0 0.0
  %52 = vmatprep.subr.mxu0 0.0
  %53 = vmatpush1.msra.mxu0 0.0
  %54 = vmatprep.subr.mxu0 0.0
  %55 = vmatpush1.msra.mxu0 0.0
  %56 = vmatprep.subr.mxu0 0.0
  %57 = vmatpush1.msra.mxu0 0.0
  %58 = vmatprep.subr.mxu0 0.0
  %59 = vmatpush1.msra.mxu0 0.0
  %60 = vmatprep.subr.mxu0 0.0
  %61 = vmatpush1.msra.mxu0 0.0
  %62 = vmatprep.subr.mxu0 0.0
  %63 = vmatpush1.msra.mxu0 0.0
  %64 = vmatprep.subr.mxu0 0.0
  %65 = vmatpush1.msra.mxu0 0.0
  %66 = vmatprep.subr.mxu0 0.0
  %67 = vmatpush1.msra.mxu0 0.0
  %68 = vmatprep.subr.mxu0 0.0
  %69 = vmatpush1.msra.mxu0 0.0
  %70 = vmatprep.subr.mxu0 0.0
  %71 = vmatpush1.msra.mxu0 0.0
  %72 = vmatprep.subr.mxu0 0.0
  %73 = vmatpush1.msra.mxu0 0.0
  %74 = vmatprep.subr.mxu0 0.0
  %75 = vmatpush1.msra.mxu0 0.0
  %76 = vmatprep.subr.mxu0 0.0
  %77 = vmatpush1.msra.mxu0 0.0
  %78 = vmatprep.subr.mxu0 0.0
  %79 = vmatpush1.msra.mxu0 0.0
  %80 = vmatprep.subr.mxu0 0.0
  %81 = vmatpush1.msra.mxu0 0.0
  %82 = vmatprep.subr.mxu0 0.0
  %83 = vmatpush1.msra.mxu0 0.0
  %84 = vmatprep.subr.mxu0 0.0
  %85 = vmatpush1.msra.mxu0 0.0
  %86 = vmatprep.subr.mxu0 0.0
  %87 = vmatpush1.msra.mxu0 0.0
  %88 = vmatprep.subr.mxu0 0.0
  %89 = vmatpush1.msra.mxu0 0.0
  %90 = vmatprep.subr.mxu0 0.0
  %91 = vmatpush1.msra.mxu0 0.0
  %92 = vmatprep.subr.mxu0 0.0
  %93 = vmatpush1.msra.mxu0 0.0
  %94 = vmatprep.subr.mxu0 0.0
  %95 = vmatpush1.msra.mxu0 0.0
  %96 = vmatprep.subr.mxu0 0.0
  %97 = vmatpush1.msra.mxu0 0.0
  %98 = vmatprep.subr.mxu0 0.0
  %99 = vmatpush1.msra.mxu0 0.0
  %100 = vmatprep.mubr.f32.mxu0 0.0
  %101 = vmatmul.mubr.f32.gmra.mrb[0].mxu0 %v30
  %v102 = vpop.f32.mrb[0].mxu0
  %v103 = vadd.f32 0.0, %v102
  %v104 = vpop.f32.mrb[0].mxu0
  %105 = vdwg.mxu0
  %v106 = vsel %vm29, %v24, 0
  %v109 = vsel %vm32, %v23, 0
  %111 = vmatprep.subr.mxu0 0.0
  %112 = vmatpush1.msra.mxu0 %v109
  %113 = vmatprep.subr.mxu0 0.0
  %114 = vmatpush1.msra.mxu0 0.0
  %115 = vmatprep.subr.mxu0 0.0
  %116 = vmatpush1.msra.mxu0 0.0
  %117 = vmatprep.subr.mxu0 0.0
  %118 = vmatpush1.msra.mxu0 0.0
  %119 = vmatprep.subr.mxu0 0.0
  %120 = vmatpush1.msra.mxu0 0.0
  %121 = vmatprep.subr.mxu0 0.0
  %122 = vmatpush1.msra.mxu0 0.0
  %123 = vmatprep.subr.mxu0 0.0
  %124 = vmatpush1.msra.mxu0 0.0
  %125 = vmatprep.subr.mxu0 0.0
  %126 = vmatpush1.msra.mxu0 0.0
  %127 = vmatprep.subr.mxu0 0.0
  %128 = vmatpush1.msra.mxu0 0.0
  %129 = vmatprep.subr.mxu0 0.0
  %130 = vmatpush1.msra.mxu0 0.0
  %131 = vmatprep.subr.mxu0 0.0
  %132 = vmatpush1.msra.mxu0 0.0
  %133 = vmatprep.subr.mxu0 0.0
  %134 = vmatpush1.msra.mxu0 0.0
  %135 = vmatprep.subr.mxu0 0.0
  %136 = vmatpush1.msra.mxu0 0.0
  %137 = vmatprep.subr.mxu0 0.0
  %138 = vmatpush1.msra.mxu0 0.0
  %139 = vmatprep.subr.mxu0 0.0
  %140 = vmatpush1.msra.mxu0 0.0
  %141 = vmatprep.subr.mxu0 0.0
  %142 = vmatpush1.msra.mxu0 0.0
  %143 = vmatprep.subr.mxu0 0.0
  %144 = vmatpush1.msra.mxu0 0.0
  %145 = vmatprep.subr.mxu0 0.0
  %146 = vmatpush1.msra.mxu0 0.0
  %147 = vmatprep.subr.mxu0 0.0
  %148 = vmatpush1.msra.mxu0 0.0
  %149 = vmatprep.subr.mxu0 0.0
  %150 = vmatpush1.msra.mxu0 0.0
  %151 = vmatprep.subr.mxu0 0.0
  %152 = vmatpush1.msra.mxu0 0.0
  %153 = vmatprep.subr.mxu0 0.0
  %154 = vmatpush1.msra.mxu0 0.0
  %155 = vmatprep.subr.mxu0 0.0
  %156 = vmatpush1.msra.mxu0 0.0
  %157 = vmatprep.subr.mxu0 0.0
  %158 = vmatpush1.msra.mxu0 0.0
  %159 = vmatprep.subr.mxu0 0.0
  %160 = vmatpush1.msra.mxu0 0.0
  %161 = vmatprep.subr.mxu0 0.0
  %162 = vmatpush1.msra.mxu0 0.0
  %163 = vmatprep.subr.mxu0 0.0
  %164 = vmatpush1.msra.mxu0 0.0
  %165 = vmatprep.subr.mxu0 0.0
  %166 = vmatpush1.msra.mxu0 0.0
  %167 = vmatprep.subr.mxu0 0.0
  %168 = vmatpush1.msra.mxu0 0.0
  %169 = vmatprep.subr.mxu0 0.0
  %170 = vmatpush1.msra.mxu0 0.0
  %171 = vmatprep.subr.mxu0 0.0
  %172 = vmatpush1.msra.mxu0 0.0
  %173 = vmatprep.subr.mxu0 0.0
  %174 = vmatpush1.msra.mxu0 0.0
  %175 = vmatprep.mubr.f32.mxu0 0.0
  %176 = vmatmul.mubr.f32.gmra.mrb[0].mxu0 %v106
  %v177 = vpop.f32.mrb[0].mxu0
  %v178 = vadd.f32 %v103, %v177
  %v179 = vpop.f32.mrb[0].mxu0
  %180 = vdwg.mxu0
  %v181 = vmax.f32 %v178, 0.0
  %182 = vst [vmem:[%s4] sm:$0xff] %v181
  %183 = vadd.xlane.f32.xlu0 %v181
  %v184 = vpop.xlane.xlu0 %183
  %vm185 = vcmask 7168
  %186 = vst.msk [vmem:[%s5] sm:$0xff] %vm185, %v184
  %v187 = vmul.f32 %v181, %v181
  %188 = vadd.xlane.f32.xlu0 %v187
  %v189 = vpop.xlane.xlu0 %188
  %190 = vst.msk [vmem:[%s6] sm:$0xff] %vm185, %v189
  // Predicated region
  $region18: #{_lambda_.6} parent=0 // pred_check
    _
  $region19: #{_lambda_.6} parent=0 // pred_check_branch
    %192 = sbr.rel (0) target = $region21
  $region20: #{_lambda_.6} parent=0 // pred_region
    _
  $region21: #{_lambda_.6} parent=0 // pred_fallthru
    _
  // Predicated region
  $region22: #{_lambda_.6} parent=0 // pred_check
    _
  $region23: #{_lambda_.6} parent=0 // pred_check_branch
    %194 = sbr.rel (0) target = $region25
  $region24: #{_lambda_.6} parent=0 // pred_region
    _
  $region25: #{_lambda_.6} parent=0 // pred_fallthru
    _
  // Predicated region
  $region26: #{_lambda_.6} parent=0 // pred_check
    _
  $region27: #{_lambda_.6} parent=0 // pred_check_branch
    %196 = sbr.rel (0) target = $region29
  $region28: #{_lambda_.6} parent=0 // pred_region
    _
  $region29: #{_lambda_.6} parent=0 // pred_fallthru
    _
  // Predicated region
  $region30: #{_lambda_.6} parent=0 // pred_check
    _
  $region31: #{_lambda_.6} parent=0 // pred_check_branch
    %198 = sbr.rel (0) target = $region33
  $region32: #{_lambda_.6} parent=0 // pred_region
    _
  $region33: #{_lambda_.6} parent=0 // pred_fallthru
    _
  // Predicated region
  $region34: #{_lambda_.6} parent=0 // pred_check
    _
  $region35: #{_lambda_.6} parent=0 // pred_check_branch
    %200 = sbr.rel (0) target = $region37
  $region36: #{_lambda_.6} parent=0 // pred_region
    _
  $region37: #{_lambda_.6} parent=0 // pred_fallthru
    _
  // Predicated region
  $region38: #{_lambda_.6} parent=0 // pred_check
    _
  $region39: #{_lambda_.6} parent=0 // pred_check_branch
    %202 = sbr.rel (0) target = $region41
  $region40: #{_lambda_.6} parent=0 // pred_region
    _
  $region41: #{_lambda_.6} parent=0 // pred_fallthru
    _

// kernel: _lambda_.5
$region0: #{_lambda_.5}
  #allocation0 [shape = 'u32[]', space=smem, size = 0x4, offset = 0x4, fixed_abs, tag = 'smem constant byte address 0x4 - core index']
  #allocation1 [shape = 'u32[144,128]{1,0:T(1,128)}', space=vmem, size = 0x12000, scoped, tag = 'internal scratch']
  %s0 = inlined_call_operand.vmem [shape: f32[2,16,8,4], index: 0, kind: input, shape index: {}]
  %s1 = inlined_call_operand.vmem [shape: f32[2,2,4,6], index: 1, kind: input, shape index: {}]
  %s2 = inlined_call_operand.vmem [shape: f32[2,2,4,2], index: 2, kind: input, shape index: {}]
  %s3 = inlined_call_operand.vmem [shape: f32[2,4,1], index: 3, kind: input, shape index: {}]
  %s4 = inlined_call_operand.vmem [shape: f32[2,4,128], index: 4, kind: output, shape index: {}]
  %s5 = sld [smem:[#allocation0]]
  $region57: #{_lambda_.5} parent=0
    _
  %s7 = ssub.s32 1, %s5
  %s8 = scalar_select 0, %s7, %s5
  loop: start=0, step=1, limit=6
  $region2: #{_lambda_.5} parent=0 // loop_pre_header
    _
  $region3: #{_lambda_.5} parent=0 // loop_header
    %s10 = sphi 0, %s14
    %p11 = scmp.ge.s32.totalorder %s10, 6
    %s17 = sphi 0, %s36
    %s18 = sphi 0, %s32
    %s19 = sphi 0, %s28
    %s20 = sphi 0, %s17
    %s21 = sphi 0, %s18
    %s22 = sphi 0, %s19
    %s23 = sphi 0, %s20
    %s24 = sphi 0, %s21
    %s25 = sphi 0, %s22
    %s41 = sphi 0, %s43
    %s44 = sphi 0, %s41
    %s45 = sphi 0, %s44
    %s61 = sphi 0, %s45
    %s69 = sphi 0, %s71
    %s72 = sphi 0, %s69
    %s73 = sphi 0, %s72
    %s89 = sphi 0, %s73
    %s97 = sphi 0, %s99
    %s100 = sphi 0, %s97
    %s101 = sphi 0, %s100
    %s117 = sphi 0, %s101
    %s123 = sphi 0, %s125
    %s126 = sphi 0, %s123
    %s127 = sphi 0, %s126
    %s143 = sphi 0, %s127
    %s151 = sphi 0, %s153
    %s154 = sphi 0, %s151
    %s155 = sphi 0, %s154
    %s171 = sphi 0, %s155
  $region4: #{_lambda_.5} parent=0 // loop_header_branch
    %13 = sbr.rel (%p11) target = $region8
  $region5: #{_lambda_.5} parent=0 // loop_body
    %s15 = ssub.s32 %s10, 1
    %s16 = ssub.s32 %s10, 2
    %s26 = sadd.s32 1, %s19
    %p27 = scmp.ge.s32.totalorder %s26, 2
    %s28 = scalar_select %p27, 0, %s26
    %s29 = sadd.s32 1, %s18
    %s30 = scalar_select %p27, %s29, %s18
    %p31 = scmp.ge.s32.totalorder %s30, 1
    %s32 = scalar_select %p31, 0, %s30
    %s33 = sadd.s32 1, %s17
    %s34 = scalar_select %p31, %s33, %s17
    %p35 = scmp.ge.s32.totalorder %s34, 2
    %s36 = scalar_select %p35, 0, %s34
    %s37 = ssub.s32 %s17, %s36
    %s38 = ssub.s32 %s18, %s32
    %s39 = sor.u32 %s37, %s38
    %p40 = scmp.eq.s32.totalorder %s39, 0
    %s42 = sadd.s32 %s41, 1
    %s43 = scalar_select %p40, %s41, %s42
    %p46 = pneg %p40
    %p47 = scmp.eq.s32.totalorder %s10, 3
    %p48 = por %p46, %p47
    %p49 = scmp.ne.s32.totalorder %s41, %s44
    %p50 = scmp.eq.s32.totalorder %s10, 0
    %p51 = por %p49, %p50
    %p52 = scmp.ne.s32.totalorder %s41, %s44
    %p53 = scmp.eq.s32.totalorder %s15, 3
    %p54 = por %p52, %p53
    %p55 = scmp.ne.s32.totalorder %s44, %s45
    %p56 = scmp.eq.s32.totalorder %s15, 0
    %p57 = por %p55, %p56
    %p58 = scmp.ne.s32.totalorder %s44, %s45
    %p59 = scmp.eq.s32.totalorder %s16, 3
    %p60 = por %p58, %p59
    %p62 = scmp.ne.s32.totalorder %s45, %s61
    %p63 = scmp.eq.s32.totalorder %s16, 0
    %p64 = por %p62, %p63
    %s65 = ssub.s32 %s17, %s36
    %s66 = ssub.s32 %s19, %s28
    %s67 = sor.u32 %s65, %s66
    %p68 = scmp.eq.s32.totalorder %s67, 0
    %s70 = sadd.s32 %s69, 1
    %s71 = scalar_select %p68, %s69, %s70
    %p74 = pneg %p68
    %p75 = scmp.eq.s32.totalorder %s10, 3
    %p76 = por %p74, %p75
    %p77 = scmp.ne.s32.totalorder %s69, %s72
    %p78 = scmp.eq.s32.totalorder %s10, 0
    %p79 = por %p77, %p78
    %p80 = scmp.ne.s32.totalorder %s69, %s72
    %p81 = scmp.eq.s32.totalorder %s15, 3
    %p82 = por %p80, %p81
    %p83 = scmp.ne.s32.totalorder %s72, %s73
    %p84 = scmp.eq.s32.totalorder %s15, 0
    %p85 = por %p83, %p84
    %p86 = scmp.ne.s32.totalorder %s72, %s73
    %p87 = scmp.eq.s32.totalorder %s16, 3
    %p88 = por %p86, %p87
    %p90 = scmp.ne.s32.totalorder %s73, %s89
    %p91 = scmp.eq.s32.totalorder %s16, 0
    %p92 = por %p90, %p91
    %s93 = ssub.s32 %s17, %s36
    %s94 = ssub.s32 %s19, %s28
    %s95 = sor.u32 %s93, %s94
    %p96 = scmp.eq.s32.totalorder %s95, 0
    %s98 = sadd.s32 %s97, 1
    %s99 = scalar_select %p96, %s97, %s98
    %p102 = pneg %p96
    %p103 = scmp.eq.s32.totalorder %s10, 3
    %p104 = por %p102, %p103
    %p105 = scmp.ne.s32.totalorder %s97, %s100
    %p106 = scmp.eq.s32.totalorder %s10, 0
    %p107 = por %p105, %p106
    %p108 = scmp.ne.s32.totalorder %s97, %s100
    %p109 = scmp.eq.s32.totalorder %s15, 3
    %p110 = por %p108, %p109
    %p111 = scmp.ne.s32.totalorder %s100, %s101
    %p112 = scmp.eq.s32.totalorder %s15, 0
    %p113 = por %p111, %p112
    %p114 = scmp.ne.s32.totalorder %s100, %s101
    %p115 = scmp.eq.s32.totalorder %s16, 3
    %p116 = por %p114, %p115
    %p118 = scmp.ne.s32.totalorder %s101, %s117
    %p119 = scmp.eq.s32.totalorder %s16, 0
    %p120 = por %p118, %p119
    %s121 = ssub.s32 %s17, %s36
    %p122 = scmp.eq.s32.totalorder %s121, 0
    %s124 = sadd.s32 %s123, 1
    %s125 = scalar_select %p122, %s123, %s124
    %p128 = pneg %p122
    %p129 = scmp.eq.s32.totalorder %s10, 3
    %p130 = por %p128, %p129
    %p131 = scmp.ne.s32.totalorder %s123, %s126
    %p132 = scmp.eq.s32.totalorder %s10, 0
    %p133 = por %p131, %p132
    %p134 = scmp.ne.s32.totalorder %s123, %s126
    %p135 = scmp.eq.s32.totalorder %s15, 3
    %p136 = por %p134, %p135
    %p137 = scmp.ne.s32.totalorder %s126, %s127
    %p138 = scmp.eq.s32.totalorder %s15, 0
    %p139 = por %p137, %p138
    %p140 = scmp.ne.s32.totalorder %s126, %s127
    %p141 = scmp.eq.s32.totalorder %s16, 3
    %p142 = por %p140, %p141
    %p144 = scmp.ne.s32.totalorder %s127, %s143
    %p145 = scmp.eq.s32.totalorder %s16, 0
    %p146 = por %p144, %p145
    %s147 = ssub.s32 %s17, %s36
    %s148 = ssub.s32 %s18, %s32
    %s149 = sor.u32 %s147, %s148
    %p150 = scmp.eq.s32.totalorder %s149, 0
    %s152 = sadd.s32 %s151, 1
    %s153 = scalar_select %p150, %s151, %s152
    %p156 = pneg %p150
    %p157 = scmp.eq.s32.totalorder %s10, 3
    %p158 = por %p156, %p157
    %p159 = scmp.ne.s32.totalorder %s151, %s154
    %p160 = scmp.eq.s32.totalorder %s10, 0
    %p161 = por %p159, %p160
    %p162 = scmp.ne.s32.totalorder %s151, %s154
    %p163 = scmp.eq.s32.totalorder %s15, 3
    %p164 = por %p162, %p163
    %p165 = scmp.ne.s32.totalorder %s154, %s155
    %p166 = scmp.eq.s32.totalorder %s15, 0
    %p167 = por %p165, %p166
    %p168 = scmp.ne.s32.totalorder %s154, %s155
    %p169 = scmp.eq.s32.totalorder %s16, 3
    %p170 = por %p168, %p169
    %p172 = scmp.ne.s32.totalorder %s155, %s171
    %p173 = scmp.eq.s32.totalorder %s16, 0
    %p174 = por %p172, %p173
    %p175 = scmp.le.s32.totalorder 1, %s10
    %p176 = scmp.lt.s32.totalorder %s10, 5
    %p177 = pnand %p175, %p176
    %p178 = pneg %p177
    // Predicated region
    $region9: #{_lambda_.5} parent=5 // pred_check
      _
    $region10: #{_lambda_.5} parent=5 // pred_check_branch
      %180 = sbr.rel (%p177) target = $region12
    $region11: #{_lambda_.5} parent=5 // pred_region
      %s181 = ssub.s32 %s10, 1
    $region12: #{_lambda_.5} parent=5 // pred_fallthru
      _
    %p182 = scmp.lt.s32.totalorder %s10, 4
    // Predicated region
    $region13: #{_lambda_.5} parent=5 // pred_check
      %p183 = pneg %p182
    $region14: #{_lambda_.5} parent=5 // pred_check_branch
      %185 = sbr.rel (%p183) target = $region16
    $region15: #{_lambda_.5} parent=5 // pred_region
      // Predicated region
      $region17: #{_lambda_.5} parent=15 // pred_check
        %p186 = pneg %p51
      $region18: #{_lambda_.5} parent=15 // pred_check_branch
        %188 = sbr.rel (%p186) target = $region20
      $region19: #{_lambda_.5} parent=15 // pred_region
        %s189 = smul.u32 16, %s18
        %p190 = scmp.lt.s32.totalorder %s17, 1
        %s191 = scalar_select %p190, %s17, 1
        %p192 = scmp.lt.s32.totalorder %s189, 15
        %s193 = scalar_select %p192, %s189, 15
        %s194 = smul.addr %s191, 16
        %s195 = sadd.s32 %s193, %s194
        %s196 = smul.addr %s195, 8
        %s197 = scalar_lea.vmem %s0, %s196
        %s198 = smul.u32 16, %s18
      $region20: #{_lambda_.5} parent=15 // pred_fallthru
        _
      // Predicated region
      $region21: #{_lambda_.5} parent=15 // pred_check
        %p199 = pneg %p79
      $region22: #{_lambda_.5} parent=15 // pred_check_branch
        %201 = sbr.rel (%p199) target = $region24
      $region23: #{_lambda_.5} parent=15 // pred_region
        %p202 = scmp.lt.s32.totalorder %s17, 1
        %s203 = scalar_select %p202, %s17, 1
        %p204 = scmp.lt.s32.totalorder %s19, 1
        %s205 = scalar_select %p204, %s19, 1
        %s206 = smul.addr %s203, 2
        %s207 = sadd.s32 %s205, %s206
        %s208 = smul.addr %s207, 4
        %s209 = scalar_lea.vmem %s1, %s208
      $region24: #{_lambda_.5} parent=15 // pred_fallthru
        _
      // Predicated region
      $region25: #{_lambda_.5} parent=15 // pred_check
        %p210 = pneg %p107
      $region26: #{_lambda_.5} parent=15 // pred_check_branch
        %212 = sbr.rel (%p210) target = $region28
      $region27: #{_lambda_.5} parent=15 // pred_region
        %p213 = scmp.lt.s32.totalorder %s17, 1
        %s214 = scalar_select %p213, %s17, 1
        %p215 = scmp.lt.s32.totalorder %s19, 1
        %s216 = scalar_select %p215, %s19, 1
        %s217 = smul.addr %s214, 2
        %s218 = sadd.s32 %s216, %s217
        %s219 = smul.addr %s218, 4
        %s220 = scalar_lea.vmem %s2, %s219
      $region28: #{_lambda_.5} parent=15 // pred_fallthru
        _
      // Predicated region
      $region29: #{_lambda_.5} parent=15 // pred_check
        %p221 = pneg %p133
      $region30: #{_lambda_.5} parent=15 // pred_check_branch
        %223 = sbr.rel (%p221) target = $region32
      $region31: #{_lambda_.5} parent=15 // pred_region
        %p224 = scmp.lt.s32.totalorder %s17, 1
        %s225 = scalar_select %p224, %s17, 1
        %s226 = smul.addr %s225, 4
        %s227 = scalar_lea.vmem %s3, %s226
      $region32: #{_lambda_.5} parent=15 // pred_fallthru
        _
    $region16: #{_lambda_.5} parent=5 // pred_fallthru
      _
    %p228 = scmp.le.s32.totalorder 1, %s10
    %p229 = scmp.lt.s32.totalorder %s10, 5
    %p230 = pnand %p228, %p229
    %p231 = pneg %p230
    // Predicated region
    $region33: #{_lambda_.5} parent=5 // pred_check
      _
    $region34: #{_lambda_.5} parent=5 // pred_check_branch
      %233 = sbr.rel (%p230) target = $region36
    $region35: #{_lambda_.5} parent=5 // pred_region
      %s234 = ssub.s32 %s10, 1
      %s235 = smul.u32 16, %s21
      %p236 = scmp.lt.s32.totalorder %s20, 1
      %s237 = scalar_select %p236, %s20, 1
      %p238 = scmp.lt.s32.totalorder %s235, 15
      %s239 = scalar_select %p238, %s235, 15
      %s240 = smul.addr %s237, 16
      %s241 = sadd.s32 %s239, %s240
      %s242 = smul.addr %s241, 8
      %s243 = scalar_lea.vmem %s0, %s242
      %p244 = pneg %p57
      %p245 = pneg %p54
      %p246 = scmp.lt.s32.totalorder %s20, 1
      %s247 = scalar_select %p246, %s20, 1
      %p248 = scmp.lt.s32.totalorder %s22, 1
      %s249 = scalar_select %p248, %s22, 1
      %s250 = smul.addr %s247, 2
      %s251 = sadd.s32 %s249, %s250
      %s252 = smul.addr %s251, 4
      %s253 = scalar_lea.vmem %s1, %s252
      %p254 = pneg %p85
      %p255 = pneg %p82
      %p256 = scmp.lt.s32.totalorder %s20, 1
      %s257 = scalar_select %p256, %s20, 1
      %p258 = scmp.lt.s32.totalorder %s22, 1
      %s259 = scalar_select %p258, %s22, 1
      %s260 = smul.addr %s257, 2
      %s261 = sadd.s32 %s259, %s260
      %s262 = smul.addr %s261, 4
      %s263 = scalar_lea.vmem %s2, %s262
      %p264 = pneg %p113
      %p265 = pneg %p110
      %p266 = scmp.lt.s32.totalorder %s20, 1
      %s267 = scalar_select %p266, %s20, 1
      %s268 = smul.addr %s267, 4
      %s269 = scalar_lea.vmem %s3, %s268
      %p270 = pneg %p139
      %p271 = pneg %p136
      %p272 = pneg %p167
      %p273 = pneg %p164
      %p274 = scmp.lt.s32.totalorder %s20, 1
      %s275 = scalar_select %p274, %s20, 1
      %p276 = scmp.lt.s32.totalorder %s21, 0
      %s277 = scalar_select %p276, %s21, 0
      %s278 = sadd.s32 %s277, %s275
      %s279 = smul.addr %s278, 4
      %s280 = scalar_lea.vmem %s4, %s279
      %s281 = smul.u32 16, %s21
      %p282 = scmp.lt.s32.totalorder %s20, 1
      %s283 = scalar_select %p282, %s20, 1
      %p284 = scmp.lt.s32.totalorder %s281, 15
      %s285 = scalar_select %p284, %s281, 15
      %s286 = smul.addr %s283, 16
      %s287 = sadd.s32 %s285, %s286
      %s288 = smul.addr %s287, 8
      %s289 = scalar_lea.vmem %s0, %s288
      %s290 = smul.u32 16, %s21
      %p291 = scmp.lt.s32.totalorder %s20, 1
      %s292 = scalar_select %p291, %s20, 1
      %p293 = scmp.lt.s32.totalorder %s22, 1
      %s294 = scalar_select %p293, %s22, 1
      %s295 = smul.addr %s292, 2
      %s296 = sadd.s32 %s294, %s295
      %s297 = smul.addr %s296, 4
      %s298 = scalar_lea.vmem %s1, %s297
      %p299 = scmp.lt.s32.totalorder %s20, 1
      %s300 = scalar_select %p299, %s20, 1
      %p301 = scmp.lt.s32.totalorder %s22, 1
      %s302 = scalar_select %p301, %s22, 1
      %s303 = smul.addr %s300, 2
      %s304 = sadd.s32 %s302, %s303
      %s305 = smul.addr %s304, 4
      %s306 = scalar_lea.vmem %s2, %s305
      %p307 = scmp.lt.s32.totalorder %s20, 1
      %s308 = scalar_select %p307, %s20, 1
      %s309 = smul.addr %s308, 4
      %s310 = scalar_lea.vmem %s3, %s309
      %p311 = scmp.lt.s32.totalorder %s20, 1
      %s312 = scalar_select %p311, %s20, 1
      %p313 = scmp.lt.s32.totalorder %s21, 0
      %s314 = scalar_select %p313, %s21, 0
      %s315 = sadd.s32 %s314, %s312
      %s316 = smul.addr %s315, 4
      %s317 = scalar_lea.vmem %s4, %s316
      %v318 = vld [vmem:[%s289] sm:$0xff]
      %v319 = vld [vmem:[%s289 + $0x8] sm:$0xff]
      %v320 = vld [vmem:[%s289 + $0x10] sm:$0xff]
      %v321 = vld [vmem:[%s289 + $0x18] sm:$0xff]
      %v322 = vld [vmem:[%s289 + $0x20] sm:$0xff]
      %v323 = vld [vmem:[%s289 + $0x28] sm:$0xff]
      %v324 = vld [vmem:[%s289 + $0x30] sm:$0xff]
      %v325 = vld [vmem:[%s289 + $0x38] sm:$0xff]
      %v326 = vld [vmem:[%s289 + $0x40] sm:$0xff]
      %v327 = vld [vmem:[%s289 + $0x48] sm:$0xff]
      %v328 = vld [vmem:[%s289 + $0x50] sm:$0xff]
      %v329 = vld [vmem:[%s289 + $0x58] sm:$0xff]
      %v330 = vld [vmem:[%s289 + $0x60] sm:$0xff]
      %v331 = vld [vmem:[%s289 + $0x68] sm:$0xff]
      %v332 = vld [vmem:[%s289 + $0x70] sm:$0xff]
      %v333 = vld [vmem:[%s289 + $0x78] sm:$0xff]
      %v334 = vld [vmem:[%s298] sm:$0xf]
      %vm335 = vcmask 31744
      %v337 = vsel %vm335, %v318, 0
      %v340 = vsel %vm335, %v319, 0
      %v343 = vsel %vm335, %v320, 0
      %v346 = vsel %vm335, %v321, 0
      %v349 = vsel %vm335, %v322, 0
      %v352 = vsel %vm335, %v323, 0
      %v355 = vsel %vm335, %v324, 0
      %v358 = vsel %vm335, %v325, 0
      %v361 = vsel %vm335, %v326, 0
      %v364 = vsel %vm335, %v327, 0
      %v367 = vsel %vm335, %v328, 0
      %v370 = vsel %vm335, %v329, 0
      %v373 = vsel %vm335, %v330, 0
      %v376 = vsel %vm335, %v331, 0
      %v379 = vsel %vm335, %v332, 0
      %v382 = vsel %vm335, %v333, 0
      %vm384 = vcmask 1043456
      %v386 = vsel %vm384, %v334, 0
      %388 = vmatprep.subr.mxu0 0.0
      %389 = vmatpush1.msra.mxu0 %v386
      %390 = vmatprep.subr.mxu0 0.0
      %391 = vmatpush1.msra.mxu0 0.0
      %392 = vmatprep.subr.mxu0 0.0
      %393 = vmatpush1.msra.mxu0 0.0
      %394 = vmatprep.subr.mxu0 0.0
      %395 = vmatpush1.msra.mxu0 0.0
      %396 = vmatprep.subr.mxu0 0.0
      %397 = vmatpush1.msra.mxu0 0.0
      %398 = vmatprep.subr.mxu0 0.0
      %399 = vmatpush1.msra.mxu0 0.0
      %400 = vmatprep.subr.mxu0 0.0
      %401 = vmatpush1.msra.mxu0 0.0
      %402 = vmatprep.subr.mxu0 0.0
      %403 = vmatpush1.msra.mxu0 0.0
      %404 = vmatprep.subr.mxu0 0.0
      %405 = vmatpush1.msra.mxu0 0.0
      %406 = vmatprep.subr.mxu0 0.0
      %407 = vmatpush1.msra.mxu0 0.0
      %408 = vmatprep.subr.mxu0 0.0
      %409 = vmatpush1.msra.mxu0 0.0
      %410 = vmatprep.subr.mxu0 0.0
      %411 = vmatpush1.msra.mxu0 0.0
      %412 = vmatprep.subr.mxu0 0.0
      %413 = vmatpush1.msra.mxu0 0.0
      %414 = vmatprep.subr.mxu0 0.0
      %415 = vmatpush1.msra.mxu0 0.0
      %416 = vmatprep.subr.mxu0 0.0
      %417 = vmatpush1.msra.mxu0 0.0
      %418 = vmatprep.subr.mxu0 0.0
      %419 = vmatpush1.msra.mxu0 0.0
      %420 = vmatprep.subr.mxu0 0.0
      %421 = vmatpush1.msra.mxu0 0.0
      %422 = vmatprep.subr.mxu0 0.0
      %423 = vmatpush1.msra.mxu0 0.0
      %424 = vmatprep.subr.mxu0 0.0
      %425 = vmatpush1.msra.mxu0 0.0
      %426 = vmatprep.subr.mxu0 0.0
      %427 = vmatpush1.msra.mxu0 0.0
      %428 = vmatprep.subr.mxu0 0.0
      %429 = vmatpush1.msra.mxu0 0.0
      %430 = vmatprep.subr.mxu0 0.0
      %431 = vmatpush1.msra.mxu0 0.0
      %432 = vmatprep.subr.mxu0 0.0
      %433 = vmatpush1.msra.mxu0 0.0
      %434 = vmatprep.subr.mxu0 0.0
      %435 = vmatpush1.msra.mxu0 0.0
      %436 = vmatprep.subr.mxu0 0.0
      %437 = vmatpush1.msra.mxu0 0.0
      %438 = vmatprep.subr.mxu0 0.0
      %439 = vmatpush1.msra.mxu0 0.0
      %440 = vmatprep.subr.mxu0 0.0
      %441 = vmatpush1.msra.mxu0 0.0
      %442 = vmatprep.subr.mxu0 0.0
      %443 = vmatpush1.msra.mxu0 0.0
      %444 = vmatprep.subr.mxu0 0.0
      %445 = vmatpush1.msra.mxu0 0.0
      %446 = vmatprep.subr.mxu0 0.0
      %447 = vmatpush1.msra.mxu0 0.0
      %448 = vmatprep.subr.mxu0 0.0
      %449 = vmatpush1.msra.mxu0 0.0
      %450 = vmatprep.subr.mxu0 0.0
      %451 = vmatpush1.msra.mxu0 0.0
      %452 = vmatprep.mubr.f32.mxu0 0.0
      %453 = vmatmul.mubr.f32.gmra.mrb[0].mxu0 %v337
      %v454 = vpop.f32.mrb[0].mxu0
      %v455 = vadd.f32 0.0, %v454
      %v456 = vpop.f32.mrb[0].mxu0
      %457 = vmatprep.mubr.f32.mxu0 0.0
      %458 = vmatmul.mubr.f32.gmra.mrb[0].mxu0 %v340
      %v459 = vpop.f32.mrb[0].mxu0
      %v460 = vadd.f32 0.0, %v459
      %v461 = vpop.f32.mrb[0].mxu0
      %462 = vmatprep.mubr.f32.mxu0 0.0
      %463 = vmatmul.mubr.f32.gmra.mrb[0].mxu0 %v343
      %v464 = vpop.f32.mrb[0].mxu0
      %v465 = vadd.f32 0.0, %v464
      %v466 = vpop.f32.mrb[0].mxu0
      %467 = vmatprep.mubr.f32.mxu0 0.0
      %468 = vmatmul.mubr.f32.gmra.mrb[0].mxu0 %v346
      %v469 = vpop.f32.mrb[0].mxu0
      %v470 = vadd.f32 0.0, %v469
      %v471 = vpop.f32.mrb[0].mxu0
      %472 = vmatprep.mubr.f32.mxu0 0.0
      %473 = vmatmul.mubr.f32.gmra.mrb[0].mxu0 %v349
      %v474 = vpop.f32.mrb[0].mxu0
      %v475 = vadd.f32 0.0, %v474
      %v476 = vpop.f32.mrb[0].mxu0
      %477 = vmatprep.mubr.f32.mxu0 0.0
      %478 = vmatmul.mubr.f32.gmra.mrb[0].mxu0 %v352
      %v479 = vpop.f32.mrb[0].mxu0
      %v480 = vadd.f32 0.0, %v479
      %v481 = vpop.f32.mrb[0].mxu0
      %482 = vmatprep.mubr.f32.mxu0 0.0
      %483 = vmatmul.mubr.f32.gmra.mrb[0].mxu0 %v355
      %v484 = vpop.f32.mrb[0].mxu0
      %v485 = vadd.f32 0.0, %v484
      %v486 = vpop.f32.mrb[0].mxu0
      %487 = vmatprep.mubr.f32.mxu0 0.0
      %488 = vmatmul.mubr.f32.gmra.mrb[0].mxu0 %v358
      %v489 = vpop.f32.mrb[0].mxu0
      %v490 = vadd.f32 0.0, %v489
      %v491 = vpop.f32.mrb[0].mxu0
      %492 = vmatprep.mubr.f32.mxu0 0.0
      %493 = vmatmul.mubr.f32.gmra.mrb[0].mxu0 %v361
      %v494 = vpop.f32.mrb[0].mxu0
      %v495 = vadd.f32 0.0, %v494
      %v496 = vpop.f32.mrb[0].mxu0
      %497 = vmatprep.mubr.f32.mxu0 0.0
      %498 = vmatmul.mubr.f32.gmra.mrb[0].mxu0 %v364
      %v499 = vpop.f32.mrb[0].mxu0
      %v500 = vadd.f32 0.0, %v499
      %v501 = vpop.f32.mrb[0].mxu0
      %502 = vmatprep.mubr.f32.mxu0 0.0
      %503 = vmatmul.mubr.f32.gmra.mrb[0].mxu0 %v367
      %v504 = vpop.f32.mrb[0].mxu0
      %v505 = vadd.f32 0.0, %v504
      %v506 = vpop.f32.mrb[0].mxu0
      %507 = vmatprep.mubr.f32.mxu0 0.0
      %508 = vmatmul.mubr.f32.gmra.mrb[0].mxu0 %v370
      %v509 = vpop.f32.mrb[0].mxu0
      %v510 = vadd.f32 0.0, %v509
      %v511 = vpop.f32.mrb[0].mxu0
      %512 = vmatprep.mubr.f32.mxu0 0.0
      %513 = vmatmul.mubr.f32.gmra.mrb[0].mxu0 %v373
      %v514 = vpop.f32.mrb[0].mxu0
      %v515 = vadd.f32 0.0, %v514
      %v516 = vpop.f32.mrb[0].mxu0
      %517 = vmatprep.mubr.f32.mxu0 0.0
      %518 = vmatmul.mubr.f32.gmra.mrb[0].mxu0 %v376
      %v519 = vpop.f32.mrb[0].mxu0
      %v520 = vadd.f32 0.0, %v519
      %v521 = vpop.f32.mrb[0].mxu0
      %522 = vmatprep.mubr.f32.mxu0 0.0
      %523 = vmatmul.mubr.f32.gmra.mrb[0].mxu0 %v379
      %v524 = vpop.f32.mrb[0].mxu0
      %v525 = vadd.f32 0.0, %v524
      %v526 = vpop.f32.mrb[0].mxu0
      %527 = vmatprep.mubr.f32.mxu0 0.0
      %528 = vmatmul.mubr.f32.gmra.mrb[0].mxu0 %v382
      %v529 = vpop.f32.mrb[0].mxu0
      %v530 = vadd.f32 0.0, %v529
      %v531 = vpop.f32.mrb[0].mxu0
      %532 = vdwg.mxu0
      %534 = vrot.lane.b32.xlu0 %v455, 126
      %v535 = vpop.permute.xlu0 %534
      %vm536 = vcmask 15360
      %v537 = vsel %vm536, %v455, 0
      %v539 = vsel %vm536, %v535, 0
      %541 = vmatprep.subr.mxu0 0.0
      %542 = vmatpush1.xpose.msra.mxu0 %v539
      %543 = vmatprep.subr.mxu0 0.0
      %544 = vmatpush1.xpose.msra.mxu0 0.0
      %545 = vmatprep.subr.mxu0 0.0
      %546 = vmatpush1.xpose.msra.mxu0 0.0
      %547 = vmatprep.subr.mxu0 0.0
      %548 = vmatpush1.xpose.msra.mxu0 0.0
      %549 = vmatprep.subr.mxu0 0.0
      %550 = vmatpush1.xpose.msra.mxu0 0.0
      %551 = vmatprep.subr.mxu0 0.0
      %552 = vmatpush1.xpose.msra.mxu0 0.0
      %553 = vmatprep.subr.mxu0 0.0
      %554 = vmatpush1.xpose.msra.mxu0 0.0
      %555 = vmatprep.subr.mxu0 0.0
      %556 = vmatpush1.xpose.msra.mxu0 0.0
      %557 = vmatprep.subr.mxu0 0.0
      %558 = vmatpush1.xpose.msra.mxu0 0.0
      %559 = vmatprep.subr.mxu0 0.0
      %560 = vmatpush1.xpose.msra.mxu0 0.0
      %561 = vmatprep.subr.mxu0 0.0
      %562 = vmatpush1.xpose.msra.mxu0 0.0
      %563 = vmatprep.subr.mxu0 0.0
      %564 = vmatpush1.xpose.msra.mxu0 0.0
      %565 = vmatprep.subr.mxu0 0.0
      %566 = vmatpush1.xpose.msra.mxu0 0.0
      %567 = vmatprep.subr.mxu0 0.0
      %568 = vmatpush1.xpose.msra.mxu0 0.0
      %569 = vmatprep.subr.mxu0 0.0
      %570 = vmatpush1.xpose.msra.mxu0 0.0
      %571 = vmatprep.subr.mxu0 0.0
      %572 = vmatpush1.xpose.msra.mxu0 0.0
      %573 = vmatprep.subr.mxu0 0.0
      %574 = vmatpush1.xpose.msra.mxu0 0.0
      %575 = vmatprep.subr.mxu0 0.0
      %576 = vmatpush1.xpose.msra.mxu0 0.0
      %577 = vmatprep.subr.mxu0 0.0
      %578 = vmatpush1.xpose.msra.mxu0 0.0
      %579 = vmatprep.subr.mxu0 0.0
      %580 = vmatpush1.xpose.msra.mxu0 0.0
      %581 = vmatprep.subr.mxu0 0.0
      %582 = vmatpush1.xpose.msra.mxu0 0.0
      %583 = vmatprep.subr.mxu0 0.0
      %584 = vmatpush1.xpose.msra.mxu0 0.0
      %585 = vmatprep.subr.mxu0 0.0
      %586 = vmatpush1.xpose.msra.mxu0 0.0
      %587 = vmatprep.subr.mxu0 0.0
      %588 = vmatpush1.xpose.msra.mxu0 0.0
      %589 = vmatprep.subr.mxu0 0.0
      %590 = vmatpush1.xpose.msra.mxu0 0.0
      %591 = vmatprep.subr.mxu0 0.0
      %592 = vmatpush1.xpose.msra.mxu0 0.0
      %593 = vmatprep.subr.mxu0 0.0
      %594 = vmatpush1.xpose.msra.mxu0 0.0
      %595 = vmatprep.subr.mxu0 0.0
      %596 = vmatpush1.xpose.msra.mxu0 0.0
      %597 = vmatprep.subr.mxu0 0.0
      %598 = vmatpush1.xpose.msra.mxu0 0.0
      %599 = vmatprep.subr.mxu0 0.0
      %600 = vmatpush1.xpose.msra.mxu0 0.0
      %601 = vmatprep.subr.mxu0 0.0
      %602 = vmatpush1.xpose.msra.mxu0 0.0
      %603 = vmatprep.subr.mxu0 0.0
      %604 = vmatpush1.xpose.msra.mxu0 0.0
      %605 = vmatprep.mubr.f32.mxu0 0.0
      %606 = vmatmul.mubr.f32.gmra.mrb[0].mxu0 %v537
      %v607 = vpop.f32.mrb[0].mxu0
      %v608 = vadd.f32 0.0, %v607
      %v609 = vpop.f32.mrb[0].mxu0
      %610 = vdwg.mxu0
      %612 = vrot.lane.b32.xlu0 %v460, 126
      %v613 = vpop.permute.xlu0 %612
      %v614 = vsel %vm536, %v460, 0
      %v616 = vsel %vm536, %v613, 0
      %618 = vmatprep.subr.mxu0 0.0
      %619 = vmatpush1.xpose.msra.mxu0 %v616
      %620 = vmatprep.subr.mxu0 0.0
      %621 = vmatpush1.xpose.msra.mxu0 0.0
      %622 = vmatprep.subr.mxu0 0.0
      %623 = vmatpush1.xpose.msra.mxu0 0.0
      %624 = vmatprep.subr.mxu0 0.0
      %625 = vmatpush1.xpose.msra.mxu0 0.0
      %626 = vmatprep.subr.mxu0 0.0
      %627 = vmatpush1.xpose.msra.mxu0 0.0
      %628 = vmatprep.subr.mxu0 0.0
      %629 = vmatpush1.xpose.msra.mxu0 0.0
      %630 = vmatprep.subr.mxu0 0.0
      %631 = vmatpush1.xpose.msra.mxu0 0.0
      %632 = vmatprep.subr.mxu0 0.0
      %633 = vmatpush1.xpose.msra.mxu0 0.0
      %634 = vmatprep.subr.mxu0 0.0
      %635 = vmatpush1.xpose.msra.mxu0 0.0
      %636 = vmatprep.subr.mxu0 0.0
      %637 = vmatpush1.xpose.msra.mxu0 0.0
      %638 = vmatprep.subr.mxu0 0.0
      %639 = vmatpush1.xpose.msra.mxu0 0.0
      %640 = vmatprep.subr.mxu0 0.0
      %641 = vmatpush1.xpose.msra.mxu0 0.0
      %642 = vmatprep.subr.mxu0 0.0
      %643 = vmatpush1.xpose.msra.mxu0 0.0
      %644 = vmatprep.subr.mxu0 0.0
      %645 = vmatpush1.xpose.msra.mxu0 0.0
      %646 = vmatprep.subr.mxu0 0.0
      %647 = vmatpush1.xpose.msra.mxu0 0.0
      %648 = vmatprep.subr.mxu0 0.0
      %649 = vmatpush1.xpose.msra.mxu0 0.0
      %650 = vmatprep.subr.mxu0 0.0
      %651 = vmatpush1.xpose.msra.mxu0 0.0
      %652 = vmatprep.subr.mxu0 0.0
      %653 = vmatpush1.xpose.msra.mxu0 0.0
      %654 = vmatprep.subr.mxu0 0.0
      %655 = vmatpush1.xpose.msra.mxu0 0.0
      %656 = vmatprep.subr.mxu0 0.0
      %657 = vmatpush1.xpose.msra.mxu0 0.0
      %658 = vmatprep.subr.mxu0 0.0
      %659 = vmatpush1.xpose.msra.mxu0 0.0
      %660 = vmatprep.subr.mxu0 0.0
      %661 = vmatpush1.xpose.msra.mxu0 0.0
      %662 = vmatprep.subr.mxu0 0.0
      %663 = vmatpush1.xpose.msra.mxu0 0.0
      %664 = vmatprep.subr.mxu0 0.0
      %665 = vmatpush1.xpose.msra.mxu0 0.0
      %666 = vmatprep.subr.mxu0 0.0
      %667 = vmatpush1.xpose.msra.mxu0 0.0
      %668 = vmatprep.subr.mxu0 0.0
      %669 = vmatpush1.xpose.msra.mxu0 0.0
      %670 = vmatprep.subr.mxu0 0.0
      %671 = vmatpush1.xpose.msra.mxu0 0.0
      %672 = vmatprep.subr.mxu0 0.0
      %673 = vmatpush1.xpose.msra.mxu0 0.0
      %674 = vmatprep.subr.mxu0 0.0
      %675 = vmatpush1.xpose.msra.mxu0 0.0
      %676 = vmatprep.subr.mxu0 0.0
      %677 = vmatpush1.xpose.msra.mxu0 0.0
      %678 = vmatprep.subr.mxu0 0.0
      %679 = vmatpush1.xpose.msra.mxu0 0.0
      %680 = vmatprep.subr.mxu0 0.0
      %681 = vmatpush1.xpose.msra.mxu0 0.0
      %682 = vmatprep.mubr.f32.mxu0 0.0
      %683 = vmatmul.mubr.f32.gmra.mrb[0].mxu0 %v614
      %v684 = vpop.f32.mrb[0].mxu0
      %v685 = vadd.f32 0.0, %v684
      %v686 = vpop.f32.mrb[0].mxu0
      %687 = vdwg.mxu0
      %689 = vrot.lane.b32.xlu0 %v465, 126
      %v690 = vpop.permute.xlu0 %689
      %v691 = vsel %vm536, %v465, 0
      %v693 = vsel %vm536, %v690, 0
      %695 = vmatprep.subr.mxu0 0.0
      %696 = vmatpush1.xpose.msra.mxu0 %v693
      %697 = vmatprep.subr.mxu0 0.0
      %698 = vmatpush1.xpose.msra.mxu0 0.0
      %699 = vmatprep.subr.mxu0 0.0
      %700 = vmatpush1.xpose.msra.mxu0 0.0
      %701 = vmatprep.subr.mxu0 0.0
      %702 = vmatpush1.xpose.msra.mxu0 0.0
      %703 = vmatprep.subr.mxu0 0.0
      %704 = vmatpush1.xpose.msra.mxu0 0.0
      %705 = vmatprep.subr.mxu0 0.0
      %706 = vmatpush1.xpose.msra.mxu0 0.0
      %707 = vmatprep.subr.mxu0 0.0
      %708 = vmatpush1.xpose.msra.mxu0 0.0
      %709 = vmatprep.subr.mxu0 0.0
      %710 = vmatpush1.xpose.msra.mxu0 0.0
      %711 = vmatprep.subr.mxu0 0.0
      %712 = vmatpush1.xpose.msra.mxu0 0.0
      %713 = vmatprep.subr.mxu0 0.0
      %714 = vmatpush1.xpose.msra.mxu0 0.0
      %715 = vmatprep.subr.mxu0 0.0
      %716 = vmatpush1.xpose.msra.mxu0 0.0
      %717 = vmatprep.subr.mxu0 0.0
      %718 = vmatpush1.xpose.msra.mxu0 0.0
      %719 = vmatprep.subr.mxu0 0.0
      %720 = vmatpush1.xpose.msra.mxu0 0.0
      %721 = vmatprep.subr.mxu0 0.0
      %722 = vmatpush1.xpose.msra.mxu0 0.0
      %723 = vmatprep.subr.mxu0 0.0
      %724 = vmatpush1.xpose.msra.mxu0 0.0
      %725 = vmatprep.subr.mxu0 0.0
      %726 = vmatpush1.xpose.msra.mxu0 0.0
      %727 = vmatprep.subr.mxu0 0.0
      %728 = vmatpush1.xpose.msra.mxu0 0.0
      %729 = vmatprep.subr.mxu0 0.0
      %730 = vmatpush1.xpose.msra.mxu0 0.0
      %731 = vmatprep.subr.mxu0 0.0
      %732 = vmatpush1.xpose.msra.mxu0 0.0
      %733 = vmatprep.subr.mxu0 0.0
      %734 = vmatpush1.xpose.msra.mxu0 0.0
      %735 = vmatprep.subr.mxu0 0.0
      %736 = vmatpush1.xpose.msra.mxu0 0.0
      %737 = vmatprep.subr.mxu0 0.0
      %738 = vmatpush1.xpose.msra.mxu0 0.0
      %739 = vmatprep.subr.mxu0 0.0
      %740 = vmatpush1.xpose.msra.mxu0 0.0
      %741 = vmatprep.subr.mxu0 0.0
      %742 = vmatpush1.xpose.msra.mxu0 0.0
      %743 = vmatprep.subr.mxu0 0.0
      %744 = vmatpush1.xpose.msra.mxu0 0.0
      %745 = vmatprep.subr.mxu0 0.0
      %746 = vmatpush1.xpose.msra.mxu0 0.0
      %747 = vmatprep.subr.mxu0 0.0
      %748 = vmatpush1.xpose.msra.mxu0 0.0
      %749 = vmatprep.subr.mxu0 0.0
      %750 = vmatpush1.xpose.msra.mxu0 0.0
      %751 = vmatprep.subr.mxu0 0.0
      %752 = vmatpush1.xpose.msra.mxu0 0.0
      %753 = vmatprep.subr.mxu0 0.0
      %754 = vmatpush1.xpose.msra.mxu0 0.0
      %755 = vmatprep.subr.mxu0 0.0
      %756 = vmatpush1.xpose.msra.mxu0 0.0
      %757 = vmatprep.subr.mxu0 0.0
      %758 = vmatpush1.xpose.msra.mxu0 0.0
      %759 = vmatprep.mubr.f32.mxu0 0.0
      %760 = vmatmul.mubr.f32.gmra.mrb[0].mxu0 %v691
      %v761 = vpop.f32.mrb[0].mxu0
      %v762 = vadd.f32 0.0, %v761
      %v763 = vpop.f32.mrb[0].mxu0
      %764 = vdwg.mxu0
      %766 = vrot.lane.b32.xlu0 %v470, 126
      %v767 = vpop.permute.xlu0 %766
      %v768 = vsel %vm536, %v470, 0
      %v770 = vsel %vm536, %v767, 0
      %772 = vmatprep.subr.mxu0 0.0
      %773 = vmatpush1.xpose.msra.mxu0 %v770
      %774 = vmatprep.subr.mxu0 0.0
      %775 = vmatpush1.xpose.msra.mxu0 0.0
      %776 = vmatprep.subr.mxu0 0.0
      %777 = vmatpush1.xpose.msra.mxu0 0.0
      %778 = vmatprep.subr.mxu0 0.0
      %779 = vmatpush1.xpose.msra.mxu0 0.0
      %780 = vmatprep.subr.mxu0 0.0
      %781 = vmatpush1.xpose.msra.mxu0 0.0
      %782 = vmatprep.subr.mxu0 0.0
      %783 = vmatpush1.xpose.msra.mxu0 0.0
      %784 = vmatprep.subr.mxu0 0.0
      %785 = vmatpush1.xpose.msra.mxu0 0.0
      %786 = vmatprep.subr.mxu0 0.0
      %787 = vmatpush1.xpose.msra.mxu0 0.0
      %788 = vmatprep.subr.mxu0 0.0
      %789 = vmatpush1.xpose.msra.mxu0 0.0
      %790 = vmatprep.subr.mxu0 0.0
      %791 = vmatpush1.xpose.msra.mxu0 0.0
      %792 = vmatprep.subr.mxu0 0.0
      %793 = vmatpush1.xpose.msra.mxu0 0.0
      %794 = vmatprep.subr.mxu0 0.0
      %795 = vmatpush1.xpose.msra.mxu0 0.0
      %796 = vmatprep.subr.mxu0 0.0
      %797 = vmatpush1.xpose.msra.mxu0 0.0
      %798 = vmatprep.subr.mxu0 0.0
      %799 = vmatpush1.xpose.msra.mxu0 0.0
      %800 = vmatprep.subr.mxu0 0.0
      %801 = vmatpush1.xpose.msra.mxu0 0.0
      %802 = vmatprep.subr.mxu0 0.0
      %803 = vmatpush1.xpose.msra.mxu0 0.0
      %804 = vmatprep.subr.mxu0 0.0
      %805 = vmatpush1.xpose.msra.mxu0 0.0
      %806 = vmatprep.subr.mxu0 0.0
      %807 = vmatpush1.xpose.msra.mxu0 0.0
      %808 = vmatprep.subr.mxu0 0.0
      %809 = vmatpush1.xpose.msra.mxu0 0.0
      %810 = vmatprep.subr.mxu0 0.0
      %811 = vmatpush1.xpose.msra.mxu0 0.0
      %812 = vmatprep.subr.mxu0 0.0
      %813 = vmatpush1.xpose.msra.mxu0 0.0
      %814 = vmatprep.subr.mxu0 0.0
      %815 = vmatpush1.xpose.msra.mxu0 0.0
      %816 = vmatprep.subr.mxu0 0.0
      %817 = vmatpush1.xpose.msra.mxu0 0.0
      %818 = vmatprep.subr.mxu0 0.0
      %819 = vmatpush1.xpose.msra.mxu0 0.0
      %820 = vmatprep.subr.mxu0 0.0
      %821 = vmatpush1.xpose.msra.mxu0 0.0
      %822 = vmatprep.subr.mxu0 0.0
      %823 = vmatpush1.xpose.msra.mxu0 0.0
      %824 = vmatprep.subr.mxu0 0.0
      %825 = vmatpush1.xpose.msra.mxu0 0.0
      %826 = vmatprep.subr.mxu0 0.0
      %827 = vmatpush1.xpose.msra.mxu0 0.0
      %828 = vmatprep.subr.mxu0 0.0
      %829 = vmatpush1.xpose.msra.mxu0 0.0
      %830 = vmatprep.subr.mxu0 0.0
      %831 = vmatpush1.xpose.msra.mxu0 0.0
      %832 = vmatprep.subr.mxu0 0.0
      %833 = vmatpush1.xpose.msra.mxu0 0.0
      %834 = vmatprep.subr.mxu0 0.0
      %835 = vmatpush1.xpose.msra.mxu0 0.0
      %836 = vmatprep.mubr.f32.mxu0 0.0
      %837 = vmatmul.mubr.f32.gmra.mrb[0].mxu0 %v768
      %v838 = vpop.f32.mrb[0].mxu0
      %v839 = vadd.f32 0.0, %v838
      %v840 = vpop.f32.mrb[0].mxu0
      %841 = vdwg.mxu0
      %843 = vrot.lane.b32.xlu0 %v475, 126
      %v844 = vpop.permute.xlu0 %843
      %v845 = vsel %vm536, %v475, 0
      %v847 = vsel %vm536, %v844, 0
      %849 = vmatprep.subr.mxu0 0.0
      %850 = vmatpush1.xpose.msra.mxu0 %v847
      %851 = vmatprep.subr.mxu0 0.0
      %852 = vmatpush1.xpose.msra.mxu0 0.0
      %853 = vmatprep.subr.mxu0 0.0
      %854 = vmatpush1.xpose.msra.mxu0 0.0
      %855 = vmatprep.subr.mxu0 0.0
      %856 = vmatpush1.xpose.msra.mxu0 0.0
      %857 = vmatprep.subr.mxu0 0.0
      %858 = vmatpush1.xpose.msra.mxu0 0.0
      %859 = vmatprep.subr.mxu0 0.0
      %860 = vmatpush1.xpose.msra.mxu0 0.0
      %861 = vmatprep.subr.mxu0 0.0
      %862 = vmatpush1.xpose.msra.mxu0 0.0
      %863 = vmatprep.subr.mxu0 0.0
      %864 = vmatpush1.xpose.msra.mxu0 0.0
      %865 = vmatprep.subr.mxu0 0.0
      %866 = vmatpush1.xpose.msra.mxu0 0.0
      %867 = vmatprep.subr.mxu0 0.0
      %868 = vmatpush1.xpose.msra.mxu0 0.0
      %869 = vmatprep.subr.mxu0 0.0
      %870 = vmatpush1.xpose.msra.mxu0 0.0
      %871 = vmatprep.subr.mxu0 0.0
      %872 = vmatpush1.xpose.msra.mxu0 0.0
      %873 = vmatprep.subr.mxu0 0.0
      %874 = vmatpush1.xpose.msra.mxu0 0.0
      %875 = vmatprep.subr.mxu0 0.0
      %876 = vmatpush1.xpose.msra.mxu0 0.0
      %877 = vmatprep.subr.mxu0 0.0
      %878 = vmatpush1.xpose.msra.mxu0 0.0
      %879 = vmatprep.subr.mxu0 0.0
      %880 = vmatpush1.xpose.msra.mxu0 0.0
      %881 = vmatprep.subr.mxu0 0.0
      %882 = vmatpush1.xpose.msra.mxu0 0.0
      %883 = vmatprep.subr.mxu0 0.0
      %884 = vmatpush1.xpose.msra.mxu0 0.0
      %885 = vmatprep.subr.mxu0 0.0
      %886 = vmatpush1.xpose.msra.mxu0 0.0
      %887 = vmatprep.subr.mxu0 0.0
      %888 = vmatpush1.xpose.msra.mxu0 0.0
      %889 = vmatprep.subr.mxu0 0.0
      %890 = vmatpush1.xpose.msra.mxu0 0.0
      %891 = vmatprep.subr.mxu0 0.0
      %892 = vmatpush1.xpose.msra.mxu0 0.0
      %893 = vmatprep.subr.mxu0 0.0
      %894 = vmatpush1.xpose.msra.mxu0 0.0
      %895 = vmatprep.subr.mxu0 0.0
      %896 = vmatpush1.xpose.msra.mxu0 0.0
      %897 = vmatprep.subr.mxu0 0.0
      %898 = vmatpush1.xpose.msra.mxu0 0.0
      %899 = vmatprep.subr.mxu0 0.0
      %900 = vmatpush1.xpose.msra.mxu0 0.0
      %901 = vmatprep.subr.mxu0 0.0
      %902 = vmatpush1.xpose.msra.mxu0 0.0
      %903 = vmatprep.subr.mxu0 0.0
      %904 = vmatpush1.xpose.msra.mxu0 0.0
      %905 = vmatprep.subr.mxu0 0.0
      %906 = vmatpush1.xpose.msra.mxu0 0.0
      %907 = vmatprep.subr.mxu0 0.0
      %908 = vmatpush1.xpose.msra.mxu0 0.0
      %909 = vmatprep.subr.mxu0 0.0
      %910 = vmatpush1.xpose.msra.mxu0 0.0
      %911 = vmatprep.subr.mxu0 0.0
      %912 = vmatpush1.xpose.msra.mxu0 0.0
      %913 = vmatprep.mubr.f32.mxu0 0.0
      %914 = vmatmul.mubr.f32.gmra.mrb[0].mxu0 %v845
      %v915 = vpop.f32.mrb[0].mxu0
      %v916 = vadd.f32 0.0, %v915
      %v917 = vpop.f32.mrb[0].mxu0
      %918 = vdwg.mxu0
      %920 = vrot.lane.b32.xlu0 %v480, 126
      %v921 = vpop.permute.xlu0 %920
      %v922 = vsel %vm536, %v480, 0
      %v924 = vsel %vm536, %v921, 0
      %926 = vmatprep.subr.mxu0 0.0
      %927 = vmatpush1.xpose.msra.mxu0 %v924
      %928 = vmatprep.subr.mxu0 0.0
      %929 = vmatpush1.xpose.msra.mxu0 0.0
      %930 = vmatprep.subr.mxu0 0.0
      %931 = vmatpush1.xpose.msra.mxu0 0.0
      %932 = vmatprep.subr.mxu0 0.0
      %933 = vmatpush1.xpose.msra.mxu0 0.0
      %934 = vmatprep.subr.mxu0 0.0
      %935 = vmatpush1.xpose.msra.mxu0 0.0
      %936 = vmatprep.subr.mxu0 0.0
      %937 = vmatpush1.xpose.msra.mxu0 0.0
      %938 = vmatprep.subr.mxu0 0.0
      %939 = vmatpush1.xpose.msra.mxu0 0.0
      %940 = vmatprep.subr.mxu0 0.0
      %941 = vmatpush1.xpose.msra.mxu0 0.0
      %942 = vmatprep.subr.mxu0 0.0
      %943 = vmatpush1.xpose.msra.mxu0 0.0
      %944 = vmatprep.subr.mxu0 0.0
      %945 = vmatpush1.xpose.msra.mxu0 0.0
      %946 = vmatprep.subr.mxu0 0.0
      %947 = vmatpush1.xpose.msra.mxu0 0.0
      %948 = vmatprep.subr.mxu0 0.0
      %949 = vmatpush1.xpose.msra.mxu0 0.0
      %950 = vmatprep.subr.mxu0 0.0
      %951 = vmatpush1.xpose.msra.mxu0 0.0
      %952 = vmatprep.subr.mxu0 0.0
      %953 = vmatpush1.xpose.msra.mxu0 0.0
      %954 = vmatprep.subr.mxu0 0.0
      %955 = vmatpush1.xpose.msra.mxu0 0.0
      %956 = vmatprep.subr.mxu0 0.0
      %957 = vmatpush1.xpose.msra.mxu0 0.0
      %958 = vmatprep.subr.mxu0 0.0
      %959 = vmatpush1.xpose.msra.mxu0 0.0
      %960 = vmatprep.subr.mxu0 0.0
      %961 = vmatpush1.xpose.msra.mxu0 0.0
      %962 = vmatprep.subr.mxu0 0.0
      %963 = vmatpush1.xpose.msra.mxu0 0.0
      %964 = vmatprep.subr.mxu0 0.0
      %965 = vmatpush1.xpose.msra.mxu0 0.0
      %966 = vmatprep.subr.mxu0 0.0
      %967 = vmatpush1.xpose.msra.mxu0 0.0
      %968 = vmatprep.subr.mxu0 0.0
      %969 = vmatpush1.xpose.msra.mxu0 0.0
      %970 = vmatprep.subr.mxu0 0.0
      %971 = vmatpush1.xpose.msra.mxu0 0.0
      %972 = vmatprep.subr.mxu0 0.0
      %973 = vmatpush1.xpose.msra.mxu0 0.0
      %974 = vmatprep.subr.mxu0 0.0
      %975 = vmatpush1.xpose.msra.mxu0 0.0
      %976 = vmatprep.subr.mxu0 0.0
      %977 = vmatpush1.xpose.msra.mxu0 0.0
      %978 = vmatprep.subr.mxu0 0.0
      %979 = vmatpush1.xpose.msra.mxu0 0.0
      %980 = vmatprep.subr.mxu0 0.0
      %981 = vmatpush1.xpose.msra.mxu0 0.0
      %982 = vmatprep.subr.mxu0 0.0
      %983 = vmatpush1.xpose.msra.mxu0 0.0
      %984 = vmatprep.subr.mxu0 0.0
      %985 = vmatpush1.xpose.msra.mxu0 0.0
      %986 = vmatprep.subr.mxu0 0.0
      %987 = vmatpush1.xpose.msra.mxu0 0.0
      %988 = vmatprep.subr.mxu0 0.0
      %989 = vmatpush1.xpose.msra.mxu0 0.0
      %990 = vmatprep.mubr.f32.mxu0 0.0
      %991 = vmatmul.mubr.f32.gmra.mrb[0].mxu0 %v922
      %v992 = vpop.f32.mrb[0].mxu0
      %v993 = vadd.f32 0.0, %v992
      %v994 = vpop.f32.mrb[0].mxu0
      %995 = vdwg.mxu0
      %997 = vrot.lane.b32.xlu0 %v485, 126
      %v998 = vpop.permute.xlu0 %997
      %v999 = vsel %vm536, %v485, 0
      %v1001 = vsel %vm536, %v998, 0
      %1003 = vmatprep.subr.mxu0 0.0
      %1004 = vmatpush1.xpose.msra.mxu0 %v1001
      %1005 = vmatprep.subr.mxu0 0.0
      %1006 = vmatpush1.xpose.msra.mxu0 0.0
      %1007 = vmatprep.subr.mxu0 0.0
      %1008 = vmatpush1.xpose.msra.mxu0 0.0
      %1009 = vmatprep.subr.mxu0 0.0
      %1010 = vmatpush1.xpose.msra.mxu0 0.0
      %1011 = vmatprep.subr.mxu0 0.0
      %1012 = vmatpush1.xpose.msra.mxu0 0.0
      %1013 = vmatprep.subr.mxu0 0.0
      %1014 = vmatpush1.xpose.msra.mxu0 0.0
      %1015 = vmatprep.subr.mxu0 0.0
      %1016 = vmatpush1.xpose.msra.mxu0 0.0
      %1017 = vmatprep.subr.mxu0 0.0
      %1018 = vmatpush1.xpose.msra.mxu0 0.0
      %1019 = vmatprep.subr.mxu0 0.0
      %1020 = vmatpush1.xpose.msra.mxu0 0.0
      %1021 = vmatprep.subr.mxu0 0.0
      %1022 = vmatpush1.xpose.msra.mxu0 0.0
      %1023 = vmatprep.subr.mxu0 0.0
      %1024 = vmatpush1.xpose.msra.mxu0 0.0
      %1025 = vmatprep.subr.mxu0 0.0
      %1026 = vmatpush1.xpose.msra.mxu0 0.0
      %1027 = vmatprep.subr.mxu0 0.0
      %1028 = vmatpush1.xpose.msra.mxu0 0.0
      %1029 = vmatprep.subr.mxu0 0.0
      %1030 = vmatpush1.xpose.msra.mxu0 0.0
      %1031 = vmatprep.subr.mxu0 0.0
      %1032 = vmatpush1.xpose.msra.mxu0 0.0
      %1033 = vmatprep.subr.mxu0 0.0
      %1034 = vmatpush1.xpose.msra.mxu0 0.0
      %1035 = vmatprep.subr.mxu0 0.0
      %1036 = vmatpush1.xpose.msra.mxu0 0.0
      %1037 = vmatprep.subr.mxu0 0.0
      %1038 = vmatpush1.xpose.msra.mxu0 0.0
      %1039 = vmatprep.subr.mxu0 0.0
      %1040 = vmatpush1.xpose.msra.mxu0 0.0
      %1041 = vmatprep.subr.mxu0 0.0
      %1042 = vmatpush1.xpose.msra.mxu0 0.0
      %1043 = vmatprep.subr.mxu0 0.0
      %1044 = vmatpush1.xpose.msra.mxu0 0.0
      %1045 = vmatprep.subr.mxu0 0.0
      %1046 = vmatpush1.xpose.msra.mxu0 0.0
      %1047 = vmatprep.subr.mxu0 0.0
      %1048 = vmatpush1.xpose.msra.mxu0 0.0
      %1049 = vmatprep.subr.mxu0 0.0
      %1050 = vmatpush1.xpose.msra.mxu0 0.0
      %1051 = vmatprep.subr.mxu0 0.0
      %1052 = vmatpush1.xpose.msra.mxu0 0.0
      %1053 = vmatprep.subr.mxu0 0.0
      %1054 = vmatpush1.xpose.msra.mxu0 0.0
      %1055 = vmatprep.subr.mxu0 0.0
      %1056 = vmatpush1.xpose.msra.mxu0 0.0
      %1057 = vmatprep.subr.mxu0 0.0
      %1058 = vmatpush1.xpose.msra.mxu0 0.0
      %1059 = vmatprep.subr.mxu0 0.0
      %1060 = vmatpush1.xpose.msra.mxu0 0.0
      %1061 = vmatprep.subr.mxu0 0.0
      %1062 = vmatpush1.xpose.msra.mxu0 0.0
      %1063 = vmatprep.subr.mxu0 0.0
      %1064 = vmatpush1.xpose.msra.mxu0 0.0
      %1065 = vmatprep.subr.mxu0 0.0
      %1066 = vmatpush1.xpose.msra.mxu0 0.0
      %1067 = vmatprep.mubr.f32.mxu0 0.0
      %1068 = vmatmul.mubr.f32.gmra.mrb[0].mxu0 %v999
      %v1069 = vpop.f32.mrb[0].mxu0
      %v1070 = vadd.f32 0.0, %v1069
      %v1071 = vpop.f32.mrb[0].mxu0
      %1072 = vdwg.mxu0
      %1074 = vrot.lane.b32.xlu0 %v490, 126
      %v1075 = vpop.permute.xlu0 %1074
      %v1076 = vsel %vm536, %v490, 0
      %v1078 = vsel %vm536, %v1075, 0
      %1080 = vmatprep.subr.mxu0 0.0
      %1081 = vmatpush1.xpose.msra.mxu0 %v1078
      %1082 = vmatprep.subr.mxu0 0.0
      %1083 = vmatpush1.xpose.msra.mxu0 0.0
      %1084 = vmatprep.subr.mxu0 0.0
      %1085 = vmatpush1.xpose.msra.mxu0 0.0
      %1086 = vmatprep.subr.mxu0 0.0
      %1087 = vmatpush1.xpose.msra.mxu0 0.0
      %1088 = vmatprep.subr.mxu0 0.0
      %1089 = vmatpush1.xpose.msra.mxu0 0.0
      %1090 = vmatprep.subr.mxu0 0.0
      %1091 = vmatpush1.xpose.msra.mxu0 0.0
      %1092 = vmatprep.subr.mxu0 0.0
      %1093 = vmatpush1.xpose.msra.mxu0 0.0
      %1094 = vmatprep.subr.mxu0 0.0
      %1095 = vmatpush1.xpose.msra.mxu0 0.0
      %1096 = vmatprep.subr.mxu0 0.0
      %1097 = vmatpush1.xpose.msra.mxu0 0.0
      %1098 = vmatprep.subr.mxu0 0.0
      %1099 = vmatpush1.xpose.msra.mxu0 0.0
      %1100 = vmatprep.subr.mxu0 0.0
      %1101 = vmatpush1.xpose.msra.mxu0 0.0
      %1102 = vmatprep.subr.mxu0 0.0
      %1103 = vmatpush1.xpose.msra.mxu0 0.0
      %1104 = vmatprep.subr.mxu0 0.0
      %1105 = vmatpush1.xpose.msra.mxu0 0.0
      %1106 = vmatprep.subr.mxu0 0.0
      %1107 = vmatpush1.xpose.msra.mxu0 0.0
      %1108 = vmatprep.subr.mxu0 0.0
      %1109 = vmatpush1.xpose.msra.mxu0 0.0
      %1110 = vmatprep.subr.mxu0 0.0
      %1111 = vmatpush1.xpose.msra.mxu0 0.0
      %1112 = vmatprep.subr.mxu0 0.0
      %1113 = vmatpush1.xpose.msra.mxu0 0.0
      %1114 = vmatprep.subr.mxu0 0.0
      %1115 = vmatpush1.xpose.msra.mxu0 0.0
      %1116 = vmatprep.subr.mxu0 0.0
      %1117 = vmatpush1.xpose.msra.mxu0 0.0
      %1118 = vmatprep.subr.mxu0 0.0
      %1119 = vmatpush1.xpose.msra.mxu0 0.0
      %1120 = vmatprep.subr.mxu0 0.0
      %1121 = vmatpush1.xpose.msra.mxu0 0.0
      %1122 = vmatprep.subr.mxu0 0.0
      %1123 = vmatpush1.xpose.msra.mxu0 0.0
      %1124 = vmatprep.subr.mxu0 0.0
      %1125 = vmatpush1.xpose.msra.mxu0 0.0
      %1126 = vmatprep.subr.mxu0 0.0
      %1127 = vmatpush1.xpose.msra.mxu0 0.0
      %1128 = vmatprep.subr.mxu0 0.0
      %1129 = vmatpush1.xpose.msra.mxu0 0.0
      %1130 = vmatprep.subr.mxu0 0.0
      %1131 = vmatpush1.xpose.msra.mxu0 0.0
      %1132 = vmatprep.subr.mxu0 0.0
      %1133 = vmatpush1.xpose.msra.mxu0 0.0
      %1134 = vmatprep.subr.mxu0 0.0
      %1135 = vmatpush1.xpose.msra.mxu0 0.0
      %1136 = vmatprep.subr.mxu0 0.0
      %1137 = vmatpush1.xpose.msra.mxu0 0.0
      %1138 = vmatprep.subr.mxu0 0.0
      %1139 = vmatpush1.xpose.msra.mxu0 0.0
      %1140 = vmatprep.subr.mxu0 0.0
      %1141 = vmatpush1.xpose.msra.mxu0 0.0
      %1142 = vmatprep.subr.mxu0 0.0
      %1143 = vmatpush1.xpose.msra.mxu0 0.0
      %1144 = vmatprep.mubr.f32.mxu0 0.0
      %1145 = vmatmul.mubr.f32.gmra.mrb[0].mxu0 %v1076
      %v1146 = vpop.f32.mrb[0].mxu0
      %v1147 = vadd.f32 0.0, %v1146
      %v1148 = vpop.f32.mrb[0].mxu0
      %1149 = vdwg.mxu0
      %1151 = vrot.lane.b32.xlu0 %v495, 126
      %v1152 = vpop.permute.xlu0 %1151
      %v1153 = vsel %vm536, %v495, 0
      %v1155 = vsel %vm536, %v1152, 0
      %1157 = vmatprep.subr.mxu0 0.0
      %1158 = vmatpush1.xpose.msra.mxu0 %v1155
      %1159 = vmatprep.subr.mxu0 0.0
      %1160 = vmatpush1.xpose.msra.mxu0 0.0
      %1161 = vmatprep.subr.mxu0 0.0
      %1162 = vmatpush1.xpose.msra.mxu0 0.0
      %1163 = vmatprep.subr.mxu0 0.0
      %1164 = vmatpush1.xpose.msra.mxu0 0.0
      %1165 = vmatprep.subr.mxu0 0.0
      %1166 = vmatpush1.xpose.msra.mxu0 0.0
      %1167 = vmatprep.subr.mxu0 0.0
      %1168 = vmatpush1.xpose.msra.mxu0 0.0
      %1169 = vmatprep.subr.mxu0 0.0
      %1170 = vmatpush1.xpose.msra.mxu0 0.0
      %1171 = vmatprep.subr.mxu0 0.0
      %1172 = vmatpush1.xpose.msra.mxu0 0.0
      %1173 = vmatprep.subr.mxu0 0.0
      %1174 = vmatpush1.xpose.msra.mxu0 0.0
      %1175 = vmatprep.subr.mxu0 0.0
      %1176 = vmatpush1.xpose.msra.mxu0 0.0
      %1177 = vmatprep.subr.mxu0 0.0
      %1178 = vmatpush1.xpose.msra.mxu0 0.0
      %1179 = vmatprep.subr.mxu0 0.0
      %1180 = vmatpush1.xpose.msra.mxu0 0.0
      %1181 = vmatprep.subr.mxu0 0.0
      %1182 = vmatpush1.xpose.msra.mxu0 0.0
      %1183 = vmatprep.subr.mxu0 0.0
      %1184 = vmatpush1.xpose.msra.mxu0 0.0
      %1185 = vmatprep.subr.mxu0 0.0
      %1186 = vmatpush1.xpose.msra.mxu0 0.0
      %1187 = vmatprep.subr.mxu0 0.0
      %1188 = vmatpush1.xpose.msra.mxu0 0.0
      %1189 = vmatprep.subr.mxu0 0.0
      %1190 = vmatpush1.xpose.msra.mxu0 0.0
      %1191 = vmatprep.subr.mxu0 0.0
      %1192 = vmatpush1.xpose.msra.mxu0 0.0
      %1193 = vmatprep.subr.mxu0 0.0
      %1194 = vmatpush1.xpose.msra.mxu0 0.0
      %1195 = vmatprep.subr.mxu0 0.0
      %1196 = vmatpush1.xpose.msra.mxu0 0.0
      %1197 = vmatprep.subr.mxu0 0.0
      %1198 = vmatpush1.xpose.msra.mxu0 0.0
      %1199 = vmatprep.subr.mxu0 0.0
      %1200 = vmatpush1.xpose.msra.mxu0 0.0
      %1201 = vmatprep.subr.mxu0 0.0
      %1202 = vmatpush1.xpose.msra.mxu0 0.0
      %1203 = vmatprep.subr.mxu0 0.0
      %1204 = vmatpush1.xpose.msra.mxu0 0.0
      %1205 = vmatprep.subr.mxu0 0.0
      %1206 = vmatpush1.xpose.msra.mxu0 0.0
      %1207 = vmatprep.subr.mxu0 0.0
      %1208 = vmatpush1.xpose.msra.mxu0 0.0
      %1209 = vmatprep.subr.mxu0 0.0
      %1210 = vmatpush1.xpose.msra.mxu0 0.0
      %1211 = vmatprep.subr.mxu0 0.0
      %1212 = vmatpush1.xpose.msra.mxu0 0.0
      %1213 = vmatprep.subr.mxu0 0.0
      %1214 = vmatpush1.xpose.msra.mxu0 0.0
      %1215 = vmatprep.subr.mxu0 0.0
      %1216 = vmatpush1.xpose.msra.mxu0 0.0
      %1217 = vmatprep.subr.mxu0 0.0
      %1218 = vmatpush1.xpose.msra.mxu0 0.0
      %1219 = vmatprep.subr.mxu0 0.0
      %1220 = vmatpush1.xpose.msra.mxu0 0.0
      %1221 = vmatprep.mubr.f32.mxu0 0.0
      %1222 = vmatmul.mubr.f32.gmra.mrb[0].mxu0 %v1153
      %v1223 = vpop.f32.mrb[0].mxu0
      %v1224 = vadd.f32 0.0, %v1223
      %v1225 = vpop.f32.mrb[0].mxu0
      %1226 = vdwg.mxu0
      %1228 = vrot.lane.b32.xlu0 %v500, 126
      %v1229 = vpop.permute.xlu0 %1228
      %v1230 = vsel %vm536, %v500, 0
      %v1232 = vsel %vm536, %v1229, 0
      %1234 = vmatprep.subr.mxu0 0.0
      %1235 = vmatpush1.xpose.msra.mxu0 %v1232
      %1236 = vmatprep.subr.mxu0 0.0
      %1237 = vmatpush1.xpose.msra.mxu0 0.0
      %1238 = vmatprep.subr.mxu0 0.0
      %1239 = vmatpush1.xpose.msra.mxu0 0.0
      %1240 = vmatprep.subr.mxu0 0.0
      %1241 = vmatpush1.xpose.msra.mxu0 0.0
      %1242 = vmatprep.subr.mxu0 0.0
      %1243 = vmatpush1.xpose.msra.mxu0 0.0
      %1244 = vmatprep.subr.mxu0 0.0
      %1245 = vmatpush1.xpose.msra.mxu0 0.0
      %1246 = vmatprep.subr.mxu0 0.0
      %1247 = vmatpush1.xpose.msra.mxu0 0.0
      %1248 = vmatprep.subr.mxu0 0.0
      %1249 = vmatpush1.xpose.msra.mxu0 0.0
      %1250 = vmatprep.subr.mxu0 0.0
      %1251 = vmatpush1.xpose.msra.mxu0 0.0
      %1252 = vmatprep.subr.mxu0 0.0
      %1253 = vmatpush1.xpose.msra.mxu0 0.0
      %1254 = vmatprep.subr.mxu0 0.0
      %1255 = vmatpush1.xpose.msra.mxu0 0.0
      %1256 = vmatprep.subr.mxu0 0.0
      %1257 = vmatpush1.xpose.msra.mxu0 0.0
      %1258 = vmatprep.subr.mxu0 0.0
      %1259 = vmatpush1.xpose.msra.mxu0 0.0
      %1260 = vmatprep.subr.mxu0 0.0
      %1261 = vmatpush1.xpose.msra.mxu0 0.0
      %1262 = vmatprep.subr.mxu0 0.0
      %1263 = vmatpush1.xpose.msra.mxu0 0.0
      %1264 = vmatprep.subr.mxu0 0.0
      %1265 = vmatpush1.xpose.msra.mxu0 0.0
      %1266 = vmatprep.subr.mxu0 0.0
      %1267 = vmatpush1.xpose.msra.mxu0 0.0
      %1268 = vmatprep.subr.mxu0 0.0
      %1269 = vmatpush1.xpose.msra.mxu0 0.0
      %1270 = vmatprep.subr.mxu0 0.0
      %1271 = vmatpush1.xpose.msra.mxu0 0.0
      %1272 = vmatprep.subr.mxu0 0.0
      %1273 = vmatpush1.xpose.msra.mxu0 0.0
      %1274 = vmatprep.subr.mxu0 0.0
      %1275 = vmatpush1.xpose.msra.mxu0 0.0
      %1276 = vmatprep.subr.mxu0 0.0
      %1277 = vmatpush1.xpose.msra.mxu0 0.0
      %1278 = vmatprep.subr.mxu0 0.0
      %1279 = vmatpush1.xpose.msra.mxu0 0.0
      %1280 = vmatprep.subr.mxu0 0.0
      %1281 = vmatpush1.xpose.msra.mxu0 0.0
      %1282 = vmatprep.subr.mxu0 0.0
      %1283 = vmatpush1.xpose.msra.mxu0 0.0
      %1284 = vmatprep.subr.mxu0 0.0
      %1285 = vmatpush1.xpose.msra.mxu0 0.0
      %1286 = vmatprep.subr.mxu0 0.0
      %1287 = vmatpush1.xpose.msra.mxu0 0.0
      %1288 = vmatprep.subr.mxu0 0.0
      %1289 = vmatpush1.xpose.msra.mxu0 0.0
      %1290 = vmatprep.subr.mxu0 0.0
      %1291 = vmatpush1.xpose.msra.mxu0 0.0
      %1292 = vmatprep.subr.mxu0 0.0
      %1293 = vmatpush1.xpose.msra.mxu0 0.0
      %1294 = vmatprep.subr.mxu0 0.0
      %1295 = vmatpush1.xpose.msra.mxu0 0.0
      %1296 = vmatprep.subr.mxu0 0.0
      %1297 = vmatpush1.xpose.msra.mxu0 0.0
      %1298 = vmatprep.mubr.f32.mxu0 0.0
      %1299 = vmatmul.mubr.f32.gmra.mrb[0].mxu0 %v1230
      %v1300 = vpop.f32.mrb[0].mxu0
      %v1301 = vadd.f32 0.0, %v1300
      %v1302 = vpop.f32.mrb[0].mxu0
      %1303 = vdwg.mxu0
      %1305 = vrot.lane.b32.xlu0 %v505, 126
      %v1306 = vpop.permute.xlu0 %1305
      %v1307 = vsel %vm536, %v505, 0
      %v1309 = vsel %vm536, %v1306, 0
      %1311 = vmatprep.subr.mxu0 0.0
      %1312 = vmatpush1.xpose.msra.mxu0 %v1309
      %1313 = vmatprep.subr.mxu0 0.0
      %1314 = vmatpush1.xpose.msra.mxu0 0.0
      %1315 = vmatprep.subr.mxu0 0.0
      %1316 = vmatpush1.xpose.msra.mxu0 0.0
      %1317 = vmatprep.subr.mxu0 0.0
      %1318 = vmatpush1.xpose.msra.mxu0 0.0
      %1319 = vmatprep.subr.mxu0 0.0
      %1320 = vmatpush1.xpose.msra.mxu0 0.0
      %1321 = vmatprep.subr.mxu0 0.0
      %1322 = vmatpush1.xpose.msra.mxu0 0.0
      %1323 = vmatprep.subr.mxu0 0.0
      %1324 = vmatpush1.xpose.msra.mxu0 0.0
      %1325 = vmatprep.subr.mxu0 0.0
      %1326 = vmatpush1.xpose.msra.mxu0 0.0
      %1327 = vmatprep.subr.mxu0 0.0
      %1328 = vmatpush1.xpose.msra.mxu0 0.0
      %1329 = vmatprep.subr.mxu0 0.0
      %1330 = vmatpush1.xpose.msra.mxu0 0.0
      %1331 = vmatprep.subr.mxu0 0.0
      %1332 = vmatpush1.xpose.msra.mxu0 0.0
      %1333 = vmatprep.subr.mxu0 0.0
      %1334 = vmatpush1.xpose.msra.mxu0 0.0
      %1335 = vmatprep.subr.mxu0 0.0
      %1336 = vmatpush1.xpose.msra.mxu0 0.0
      %1337 = vmatprep.subr.mxu0 0.0
      %1338 = vmatpush1.xpose.msra.mxu0 0.0
      %1339 = vmatprep.subr.mxu0 0.0
      %1340 = vmatpush1.xpose.msra.mxu0 0.0
      %1341 = vmatprep.subr.mxu0 0.0
      %1342 = vmatpush1.xpose.msra.mxu0 0.0
      %1343 = vmatprep.subr.mxu0 0.0
      %1344 = vmatpush1.xpose.msra.mxu0 0.0
      %1345 = vmatprep.subr.mxu0 0.0
      %1346 = vmatpush1.xpose.msra.mxu0 0.0
      %1347 = vmatprep.subr.mxu0 0.0
      %1348 = vmatpush1.xpose.msra.mxu0 0.0
      %1349 = vmatprep.subr.mxu0 0.0
      %1350 = vmatpush1.xpose.msra.mxu0 0.0
      %1351 = vmatprep.subr.mxu0 0.0
      %1352 = vmatpush1.xpose.msra.mxu0 0.0
      %1353 = vmatprep.subr.mxu0 0.0
      %1354 = vmatpush1.xpose.msra.mxu0 0.0
      %1355 = vmatprep.subr.mxu0 0.0
      %1356 = vmatpush1.xpose.msra.mxu0 0.0
      %1357 = vmatprep.subr.mxu0 0.0
      %1358 = vmatpush1.xpose.msra.mxu0 0.0
      %1359 = vmatprep.subr.mxu0 0.0
      %1360 = vmatpush1.xpose.msra.mxu0 0.0
      %1361 = vmatprep.subr.mxu0 0.0
      %1362 = vmatpush1.xpose.msra.mxu0 0.0
      %1363 = vmatprep.subr.mxu0 0.0
      %1364 = vmatpush1.xpose.msra.mxu0 0.0
      %1365 = vmatprep.subr.mxu0 0.0
      %1366 = vmatpush1.xpose.msra.mxu0 0.0
      %1367 = vmatprep.subr.mxu0 0.0
      %1368 = vmatpush1.xpose.msra.mxu0 0.0
      %1369 = vmatprep.subr.mxu0 0.0
      %1370 = vmatpush1.xpose.msra.mxu0 0.0
      %1371 = vmatprep.subr.mxu0 0.0
      %1372 = vmatpush1.xpose.msra.mxu0 0.0
      %1373 = vmatprep.subr.mxu0 0.0
      %1374 = vmatpush1.xpose.msra.mxu0 0.0
      %1375 = vmatprep.mubr.f32.mxu0 0.0
      %1376 = vmatmul.mubr.f32.gmra.mrb[0].mxu0 %v1307
      %v1377 = vpop.f32.mrb[0].mxu0
      %v1378 = vadd.f32 0.0, %v1377
      %v1379 = vpop.f32.mrb[0].mxu0
      %1380 = vdwg.mxu0
      %1382 = vrot.lane.b32.xlu0 %v510, 126
      %v1383 = vpop.permute.xlu0 %1382
      %v1384 = vsel %vm536, %v510, 0
      %v1386 = vsel %vm536, %v1383, 0
      %1388 = vmatprep.subr.mxu0 0.0
      %1389 = vmatpush1.xpose.msra.mxu0 %v1386
      %1390 = vmatprep.subr.mxu0 0.0
      %1391 = vmatpush1.xpose.msra.mxu0 0.0
      %1392 = vmatprep.subr.mxu0 0.0
      %1393 = vmatpush1.xpose.msra.mxu0 0.0
      %1394 = vmatprep.subr.mxu0 0.0
      %1395 = vmatpush1.xpose.msra.mxu0 0.0
      %1396 = vmatprep.subr.mxu0 0.0
      %1397 = vmatpush1.xpose.msra.mxu0 0.0
      %1398 = vmatprep.subr.mxu0 0.0
      %1399 = vmatpush1.xpose.msra.mxu0 0.0
      %1400 = vmatprep.subr.mxu0 0.0
      %1401 = vmatpush1.xpose.msra.mxu0 0.0
      %1402 = vmatprep.subr.mxu0 0.0
      %1403 = vmatpush1.xpose.msra.mxu0 0.0
      %1404 = vmatprep.subr.mxu0 0.0
      %1405 = vmatpush1.xpose.msra.mxu0 0.0
      %1406 = vmatprep.subr.mxu0 0.0
      %1407 = vmatpush1.xpose.msra.mxu0 0.0
      %1408 = vmatprep.subr.mxu0 0.0
      %1409 = vmatpush1.xpose.msra.mxu0 0.0
      %1410 = vmatprep.subr.mxu0 0.0
      %1411 = vmatpush1.xpose.msra.mxu0 0.0
      %1412 = vmatprep.subr.mxu0 0.0
      %1413 = vmatpush1.xpose.msra.mxu0 0.0
      %1414 = vmatprep.subr.mxu0 0.0
      %1415 = vmatpush1.xpose.msra.mxu0 0.0
      %1416 = vmatprep.subr.mxu0 0.0
      %1417 = vmatpush1.xpose.msra.mxu0 0.0
      %1418 = vmatprep.subr.mxu0 0.0
      %1419 = vmatpush1.xpose.msra.mxu0 0.0
      %1420 = vmatprep.subr.mxu0 0.0
      %1421 = vmatpush1.xpose.msra.mxu0 0.0
      %1422 = vmatprep.subr.mxu0 0.0
      %1423 = vmatpush1.xpose.msra.mxu0 0.0
      %1424 = vmatprep.subr.mxu0 0.0
      %1425 = vmatpush1.xpose.msra.mxu0 0.0
      %1426 = vmatprep.subr.mxu0 0.0
      %1427 = vmatpush1.xpose.msra.mxu0 0.0
      %1428 = vmatprep.subr.mxu0 0.0
      %1429 = vmatpush1.xpose.msra.mxu0 0.0
      %1430 = vmatprep.subr.mxu0 0.0
      %1431 = vmatpush1.xpose.msra.mxu0 0.0
      %1432 = vmatprep.subr.mxu0 0.0
      %1433 = vmatpush1.xpose.msra.mxu0 0.0
      %1434 = vmatprep.subr.mxu0 0.0
      %1435 = vmatpush1.xpose.msra.mxu0 0.0
      %1436 = vmatprep.subr.mxu0 0.0
      %1437 = vmatpush1.xpose.msra.mxu0 0.0
      %1438 = vmatprep.subr.mxu0 0.0
      %1439 = vmatpush1.xpose.msra.mxu0 0.0
      %1440 = vmatprep.subr.mxu0 0.0
      %1441 = vmatpush1.xpose.msra.mxu0 0.0
      %1442 = vmatprep.subr.mxu0 0.0
      %1443 = vmatpush1.xpose.msra.mxu0 0.0
      %1444 = vmatprep.subr.mxu0 0.0
      %1445 = vmatpush1.xpose.msra.mxu0 0.0
      %1446 = vmatprep.subr.mxu0 0.0
      %1447 = vmatpush1.xpose.msra.mxu0 0.0
      %1448 = vmatprep.subr.mxu0 0.0
      %1449 = vmatpush1.xpose.msra.mxu0 0.0
      %1450 = vmatprep.subr.mxu0 0.0
      %1451 = vmatpush1.xpose.msra.mxu0 0.0
      %1452 = vmatprep.mubr.f32.mxu0 0.0
      %1453 = vmatmul.mubr.f32.gmra.mrb[0].mxu0 %v1384
      %v1454 = vpop.f32.mrb[0].mxu0
      %v1455 = vadd.f32 0.0, %v1454
      %v1456 = vpop.f32.mrb[0].mxu0
      %1457 = vdwg.mxu0
      %1459 = vrot.lane.b32.xlu0 %v515, 126
      %v1460 = vpop.permute.xlu0 %1459
      %v1461 = vsel %vm536, %v515, 0
      %v1463 = vsel %vm536, %v1460, 0
      %1465 = vmatprep.subr.mxu0 0.0
      %1466 = vmatpush1.xpose.msra.mxu0 %v1463
      %1467 = vmatprep.subr.mxu0 0.0
      %1468 = vmatpush1.xpose.msra.mxu0 0.0
      %1469 = vmatprep.subr.mxu0 0.0
      %1470 = vmatpush1.xpose.msra.mxu0 0.0
      %1471 = vmatprep.subr.mxu0 0.0
      %1472 = vmatpush1.xpose.msra.mxu0 0.0
      %1473 = vmatprep.subr.mxu0 0.0
      %1474 = vmatpush1.xpose.msra.mxu0 0.0
      %1475 = vmatprep.subr.mxu0 0.0
      %1476 = vmatpush1.xpose.msra.mxu0 0.0
      %1477 = vmatprep.subr.mxu0 0.0
      %1478 = vmatpush1.xpose.msra.mxu0 0.0
      %1479 = vmatprep.subr.mxu0 0.0
      %1480 = vmatpush1.xpose.msra.mxu0 0.0
      %1481 = vmatprep.subr.mxu0 0.0
      %1482 = vmatpush1.xpose.msra.mxu0 0.0
      %1483 = vmatprep.subr.mxu0 0.0
      %1484 = vmatpush1.xpose.msra.mxu0 0.0
      %1485 = vmatprep.subr.mxu0 0.0
      %1486 = vmatpush1.xpose.msra.mxu0 0.0
      %1487 = vmatprep.subr.mxu0 0.0
      %1488 = vmatpush1.xpose.msra.mxu0 0.0
      %1489 = vmatprep.subr.mxu0 0.0
      %1490 = vmatpush1.xpose.msra.mxu0 0.0
      %1491 = vmatprep.subr.mxu0 0.0
      %1492 = vmatpush1.xpose.msra.mxu0 0.0
      %1493 = vmatprep.subr.mxu0 0.0
      %1494 = vmatpush1.xpose.msra.mxu0 0.0
      %1495 = vmatprep.subr.mxu0 0.0
      %1496 = vmatpush1.xpose.msra.mxu0 0.0
      %1497 = vmatprep.subr.mxu0 0.0
      %1498 = vmatpush1.xpose.msra.mxu0 0.0
      %1499 = vmatprep.subr.mxu0 0.0
      %1500 = vmatpush1.xpose.msra.mxu0 0.0
      %1501 = vmatprep.subr.mxu0 0.0
      %1502 = vmatpush1.xpose.msra.mxu0 0.0
      %1503 = vmatprep.subr.mxu0 0.0
      %1504 = vmatpush1.xpose.msra.mxu0 0.0
      %1505 = vmatprep.subr.mxu0 0.0
      %1506 = vmatpush1.xpose.msra.mxu0 0.0
      %1507 = vmatprep.subr.mxu0 0.0
      %1508 = vmatpush1.xpose.msra.mxu0 0.0
      %1509 = vmatprep.subr.mxu0 0.0
      %1510 = vmatpush1.xpose.msra.mxu0 0.0
      %1511 = vmatprep.subr.mxu0 0.0
      %1512 = vmatpush1.xpose.msra.mxu0 0.0
      %1513 = vmatprep.subr.mxu0 0.0
      %1514 = vmatpush1.xpose.msra.mxu0 0.0
      %1515 = vmatprep.subr.mxu0 0.0
      %1516 = vmatpush1.xpose.msra.mxu0 0.0
      %1517 = vmatprep.subr.mxu0 0.0
      %1518 = vmatpush1.xpose.msra.mxu0 0.0
      %1519 = vmatprep.subr.mxu0 0.0
      %1520 = vmatpush1.xpose.msra.mxu0 0.0
      %1521 = vmatprep.subr.mxu0 0.0
      %1522 = vmatpush1.xpose.msra.mxu0 0.0
      %1523 = vmatprep.subr.mxu0 0.0
      %1524 = vmatpush1.xpose.msra.mxu0 0.0
      %1525 = vmatprep.subr.mxu0 0.0
      %1526 = vmatpush1.xpose.msra.mxu0 0.0
      %1527 = vmatprep.subr.mxu0 0.0
      %1528 = vmatpush1.xpose.msra.mxu0 0.0
      %1529 = vmatprep.mubr.f32.mxu0 0.0
      %1530 = vmatmul.mubr.f32.gmra.mrb[0].mxu0 %v1461
      %v1531 = vpop.f32.mrb[0].mxu0
      %v1532 = vadd.f32 0.0, %v1531
      %v1533 = vpop.f32.mrb[0].mxu0
      %1534 = vdwg.mxu0
      %1536 = vrot.lane.b32.xlu0 %v520, 126
      %v1537 = vpop.permute.xlu0 %1536
      %v1538 = vsel %vm536, %v520, 0
      %v1540 = vsel %vm536, %v1537, 0
      %1542 = vmatprep.subr.mxu0 0.0
      %1543 = vmatpush1.xpose.msra.mxu0 %v1540
      %1544 = vmatprep.subr.mxu0 0.0
      %1545 = vmatpush1.xpose.msra.mxu0 0.0
      %1546 = vmatprep.subr.mxu0 0.0
      %1547 = vmatpush1.xpose.msra.mxu0 0.0
      %1548 = vmatprep.subr.mxu0 0.0
      %1549 = vmatpush1.xpose.msra.mxu0 0.0
      %1550 = vmatprep.subr.mxu0 0.0
      %1551 = vmatpush1.xpose.msra.mxu0 0.0
      %1552 = vmatprep.subr.mxu0 0.0
      %1553 = vmatpush1.xpose.msra.mxu0 0.0
      %1554 = vmatprep.subr.mxu0 0.0
      %1555 = vmatpush1.xpose.msra.mxu0 0.0
      %1556 = vmatprep.subr.mxu0 0.0
      %1557 = vmatpush1.xpose.msra.mxu0 0.0
      %1558 = vmatprep.subr.mxu0 0.0
      %1559 = vmatpush1.xpose.msra.mxu0 0.0
      %1560 = vmatprep.subr.mxu0 0.0
      %1561 = vmatpush1.xpose.msra.mxu0 0.0
      %1562 = vmatprep.subr.mxu0 0.0
      %1563 = vmatpush1.xpose.msra.mxu0 0.0
      %1564 = vmatprep.subr.mxu0 0.0
      %1565 = vmatpush1.xpose.msra.mxu0 0.0
      %1566 = vmatprep.subr.mxu0 0.0
      %1567 = vmatpush1.xpose.msra.mxu0 0.0
      %1568 = vmatprep.subr.mxu0 0.0
      %1569 = vmatpush1.xpose.msra.mxu0 0.0
      %1570 = vmatprep.subr.mxu0 0.0
      %1571 = vmatpush1.xpose.msra.mxu0 0.0
      %1572 = vmatprep.subr.mxu0 0.0
      %1573 = vmatpush1.xpose.msra.mxu0 0.0
      %1574 = vmatprep.subr.mxu0 0.0
      %1575 = vmatpush1.xpose.msra.mxu0 0.0
      %1576 = vmatprep.subr.mxu0 0.0
      %1577 = vmatpush1.xpose.msra.mxu0 0.0
      %1578 = vmatprep.subr.mxu0 0.0
      %1579 = vmatpush1.xpose.msra.mxu0 0.0
      %1580 = vmatprep.subr.mxu0 0.0
      %1581 = vmatpush1.xpose.msra.mxu0 0.0
      %1582 = vmatprep.subr.mxu0 0.0
      %1583 = vmatpush1.xpose.msra.mxu0 0.0
      %1584 = vmatprep.subr.mxu0 0.0
      %1585 = vmatpush1.xpose.msra.mxu0 0.0
      %1586 = vmatprep.subr.mxu0 0.0
      %1587 = vmatpush1.xpose.msra.mxu0 0.0
      %1588 = vmatprep.subr.mxu0 0.0
      %1589 = vmatpush1.xpose.msra.mxu0 0.0
      %1590 = vmatprep.subr.mxu0 0.0
      %1591 = vmatpush1.xpose.msra.mxu0 0.0
      %1592 = vmatprep.subr.mxu0 0.0
      %1593 = vmatpush1.xpose.msra.mxu0 0.0
      %1594 = vmatprep.subr.mxu0 0.0
      %1595 = vmatpush1.xpose.msra.mxu0 0.0
      %1596 = vmatprep.subr.mxu0 0.0
      %1597 = vmatpush1.xpose.msra.mxu0 0.0
      %1598 = vmatprep.subr.mxu0 0.0
      %1599 = vmatpush1.xpose.msra.mxu0 0.0
      %1600 = vmatprep.subr.mxu0 0.0
      %1601 = vmatpush1.xpose.msra.mxu0 0.0
      %1602 = vmatprep.subr.mxu0 0.0
      %1603 = vmatpush1.xpose.msra.mxu0 0.0
      %1604 = vmatprep.subr.mxu0 0.0
      %1605 = vmatpush1.xpose.msra.mxu0 0.0
      %1606 = vmatprep.mubr.f32.mxu0 0.0
      %1607 = vmatmul.mubr.f32.gmra.mrb[0].mxu0 %v1538
      %v1608 = vpop.f32.mrb[0].mxu0
      %v1609 = vadd.f32 0.0, %v1608
      %v1610 = vpop.f32.mrb[0].mxu0
      %1611 = vdwg.mxu0
      %1613 = vrot.lane.b32.xlu0 %v525, 126
      %v1614 = vpop.permute.xlu0 %1613
      %v1615 = vsel %vm536, %v525, 0
      %v1617 = vsel %vm536, %v1614, 0
      %1619 = vmatprep.subr.mxu0 0.0
      %1620 = vmatpush1.xpose.msra.mxu0 %v1617
      %1621 = vmatprep.subr.mxu0 0.0
      %1622 = vmatpush1.xpose.msra.mxu0 0.0
      %1623 = vmatprep.subr.mxu0 0.0
      %1624 = vmatpush1.xpose.msra.mxu0 0.0
      %1625 = vmatprep.subr.mxu0 0.0
      %1626 = vmatpush1.xpose.msra.mxu0 0.0
      %1627 = vmatprep.subr.mxu0 0.0
      %1628 = vmatpush1.xpose.msra.mxu0 0.0
      %1629 = vmatprep.subr.mxu0 0.0
      %1630 = vmatpush1.xpose.msra.mxu0 0.0
      %1631 = vmatprep.subr.mxu0 0.0
      %1632 = vmatpush1.xpose.msra.mxu0 0.0
      %1633 = vmatprep.subr.mxu0 0.0
      %1634 = vmatpush1.xpose.msra.mxu0 0.0
      %1635 = vmatprep.subr.mxu0 0.0
      %1636 = vmatpush1.xpose.msra.mxu0 0.0
      %1637 = vmatprep.subr.mxu0 0.0
      %1638 = vmatpush1.xpose.msra.mxu0 0.0
      %1639 = vmatprep.subr.mxu0 0.0
      %1640 = vmatpush1.xpose.msra.mxu0 0.0
      %1641 = vmatprep.subr.mxu0 0.0
      %1642 = vmatpush1.xpose.msra.mxu0 0.0
      %1643 = vmatprep.subr.mxu0 0.0
      %1644 = vmatpush1.xpose.msra.mxu0 0.0
      %1645 = vmatprep.subr.mxu0 0.0
      %1646 = vmatpush1.xpose.msra.mxu0 0.0
      %1647 = vmatprep.subr.mxu0 0.0
      %1648 = vmatpush1.xpose.msra.mxu0 0.0
      %1649 = vmatprep.subr.mxu0 0.0
      %1650 = vmatpush1.xpose.msra.mxu0 0.0
      %1651 = vmatprep.subr.mxu0 0.0
      %1652 = vmatpush1.xpose.msra.mxu0 0.0
      %1653 = vmatprep.subr.mxu0 0.0
      %1654 = vmatpush1.xpose.msra.mxu0 0.0
      %1655 = vmatprep.subr.mxu0 0.0
      %1656 = vmatpush1.xpose.msra.mxu0 0.0
      %1657 = vmatprep.subr.mxu0 0.0
      %1658 = vmatpush1.xpose.msra.mxu0 0.0
      %1659 = vmatprep.subr.mxu0 0.0
      %1660 = vmatpush1.xpose.msra.mxu0 0.0
      %1661 = vmatprep.subr.mxu0 0.0
      %1662 = vmatpush1.xpose.msra.mxu0 0.0
      %1663 = vmatprep.subr.mxu0 0.0
      %1664 = vmatpush1.xpose.msra.mxu0 0.0
      %1665 = vmatprep.subr.mxu0 0.0
      %1666 = vmatpush1.xpose.msra.mxu0 0.0
      %1667 = vmatprep.subr.mxu0 0.0
      %1668 = vmatpush1.xpose.msra.mxu0 0.0
      %1669 = vmatprep.subr.mxu0 0.0
      %1670 = vmatpush1.xpose.msra.mxu0 0.0
      %1671 = vmatprep.subr.mxu0 0.0
      %1672 = vmatpush1.xpose.msra.mxu0 0.0
      %1673 = vmatprep.subr.mxu0 0.0
      %1674 = vmatpush1.xpose.msra.mxu0 0.0
      %1675 = vmatprep.subr.mxu0 0.0
      %1676 = vmatpush1.xpose.msra.mxu0 0.0
      %1677 = vmatprep.subr.mxu0 0.0
      %1678 = vmatpush1.xpose.msra.mxu0 0.0
      %1679 = vmatprep.subr.mxu0 0.0
      %1680 = vmatpush1.xpose.msra.mxu0 0.0
      %1681 = vmatprep.subr.mxu0 0.0
      %1682 = vmatpush1.xpose.msra.mxu0 0.0
      %1683 = vmatprep.mubr.f32.mxu0 0.0
      %1684 = vmatmul.mubr.f32.gmra.mrb[0].mxu0 %v1615
      %v1685 = vpop.f32.mrb[0].mxu0
      %v1686 = vadd.f32 0.0, %v1685
      %v1687 = vpop.f32.mrb[0].mxu0
      %1688 = vdwg.mxu0
      %1690 = vrot.lane.b32.xlu0 %v530, 126
      %v1691 = vpop.permute.xlu0 %1690
      %v1692 = vsel %vm536, %v530, 0
      %v1694 = vsel %vm536, %v1691, 0
      %1696 = vmatprep.subr.mxu0 0.0
      %1697 = vmatpush1.xpose.msra.mxu0 %v1694
      %1698 = vmatprep.subr.mxu0 0.0
      %1699 = vmatpush1.xpose.msra.mxu0 0.0
      %1700 = vmatprep.subr.mxu0 0.0
      %1701 = vmatpush1.xpose.msra.mxu0 0.0
      %1702 = vmatprep.subr.mxu0 0.0
      %1703 = vmatpush1.xpose.msra.mxu0 0.0
      %1704 = vmatprep.subr.mxu0 0.0
      %1705 = vmatpush1.xpose.msra.mxu0 0.0
      %1706 = vmatprep.subr.mxu0 0.0
      %1707 = vmatpush1.xpose.msra.mxu0 0.0
      %1708 = vmatprep.subr.mxu0 0.0
      %1709 = vmatpush1.xpose.msra.mxu0 0.0
      %1710 = vmatprep.subr.mxu0 0.0
      %1711 = vmatpush1.xpose.msra.mxu0 0.0
      %1712 = vmatprep.subr.mxu0 0.0
      %1713 = vmatpush1.xpose.msra.mxu0 0.0
      %1714 = vmatprep.subr.mxu0 0.0
      %1715 = vmatpush1.xpose.msra.mxu0 0.0
      %1716 = vmatprep.subr.mxu0 0.0
      %1717 = vmatpush1.xpose.msra.mxu0 0.0
      %1718 = vmatprep.subr.mxu0 0.0
      %1719 = vmatpush1.xpose.msra.mxu0 0.0
      %1720 = vmatprep.subr.mxu0 0.0
      %1721 = vmatpush1.xpose.msra.mxu0 0.0
      %1722 = vmatprep.subr.mxu0 0.0
      %1723 = vmatpush1.xpose.msra.mxu0 0.0
      %1724 = vmatprep.subr.mxu0 0.0
      %1725 = vmatpush1.xpose.msra.mxu0 0.0
      %1726 = vmatprep.subr.mxu0 0.0
      %1727 = vmatpush1.xpose.msra.mxu0 0.0
      %1728 = vmatprep.subr.mxu0 0.0
      %1729 = vmatpush1.xpose.msra.mxu0 0.0
      %1730 = vmatprep.subr.mxu0 0.0
      %1731 = vmatpush1.xpose.msra.mxu0 0.0
      %1732 = vmatprep.subr.mxu0 0.0
      %1733 = vmatpush1.xpose.msra.mxu0 0.0
      %1734 = vmatprep.subr.mxu0 0.0
      %1735 = vmatpush1.xpose.msra.mxu0 0.0
      %1736 = vmatprep.subr.mxu0 0.0
      %1737 = vmatpush1.xpose.msra.mxu0 0.0
      %1738 = vmatprep.subr.mxu0 0.0
      %1739 = vmatpush1.xpose.msra.mxu0 0.0
      %1740 = vmatprep.subr.mxu0 0.0
      %1741 = vmatpush1.xpose.msra.mxu0 0.0
      %1742 = vmatprep.subr.mxu0 0.0
      %1743 = vmatpush1.xpose.msra.mxu0 0.0
      %1744 = vmatprep.subr.mxu0 0.0
      %1745 = vmatpush1.xpose.msra.mxu0 0.0
      %1746 = vmatprep.subr.mxu0 0.0
      %1747 = vmatpush1.xpose.msra.mxu0 0.0
      %1748 = vmatprep.subr.mxu0 0.0
      %1749 = vmatpush1.xpose.msra.mxu0 0.0
      %1750 = vmatprep.subr.mxu0 0.0
      %1751 = vmatpush1.xpose.msra.mxu0 0.0
      %1752 = vmatprep.subr.mxu0 0.0
      %1753 = vmatpush1.xpose.msra.mxu0 0.0
      %1754 = vmatprep.subr.mxu0 0.0
      %1755 = vmatpush1.xpose.msra.mxu0 0.0
      %1756 = vmatprep.subr.mxu0 0.0
      %1757 = vmatpush1.xpose.msra.mxu0 0.0
      %1758 = vmatprep.subr.mxu0 0.0
      %1759 = vmatpush1.xpose.msra.mxu0 0.0
      %1760 = vmatprep.mubr.f32.mxu0 0.0
      %1761 = vmatmul.mubr.f32.gmra.mrb[0].mxu0 %v1692
      %v1762 = vpop.f32.mrb[0].mxu0
      %v1763 = vadd.f32 0.0, %v1762
      %v1764 = vpop.f32.mrb[0].mxu0
      %1765 = vdwg.mxu0
      %v1766 = vmul.f32 %v608, 0.70710677
      %v1767 = vmul.f32 %v685, 0.70710677
      %v1768 = vmul.f32 %v762, 0.70710677
      %v1769 = vmul.f32 %v839, 0.70710677
      %v1770 = vmul.f32 %v916, 0.70710677
      %v1771 = vmul.f32 %v993, 0.70710677
      %v1772 = vmul.f32 %v1070, 0.70710677
      %v1773 = vmul.f32 %v1147, 0.70710677
      %v1774 = vmul.f32 %v1224, 0.70710677
      %v1775 = vmul.f32 %v1301, 0.70710677
      %v1776 = vmul.f32 %v1378, 0.70710677
      %v1777 = vmul.f32 %v1455, 0.70710677
      %v1778 = vmul.f32 %v1532, 0.70710677
      %v1779 = vmul.f32 %v1609, 0.70710677
      %v1780 = vmul.f32 %v1686, 0.70710677
      %v1781 = vmul.f32 %v1763, 0.70710677
      %vm1782 = vcmask 64512
      %v1783 = vsel %vm1782, %v1766, -inf
      %1784 = vmax.xlane.f32.xlu0 %v1783
      %v1785 = vpop.xlane.xlu0 %1784
      %v1786 = vsel %vm1782, %v1767, -inf
      %1787 = vmax.xlane.f32.xlu0 %v1786
      %v1788 = vpop.xlane.xlu0 %1787
      %v1789 = vsel %vm1782, %v1768, -inf
      %1790 = vmax.xlane.f32.xlu0 %v1789
      %v1791 = vpop.xlane.xlu0 %1790
      %v1792 = vsel %vm1782, %v1769, -inf
      %1793 = vmax.xlane.f32.xlu0 %v1792
      %v1794 = vpop.xlane.xlu0 %1793
      %v1795 = vsel %vm1782, %v1770, -inf
      %1796 = vmax.xlane.f32.xlu0 %v1795
      %v1797 = vpop.xlane.xlu0 %1796
      %v1798 = vsel %vm1782, %v1771, -inf
      %1799 = vmax.xlane.f32.xlu0 %v1798
      %v1800 = vpop.xlane.xlu0 %1799
      %v1801 = vsel %vm1782, %v1772, -inf
      %1802 = vmax.xlane.f32.xlu0 %v1801
      %v1803 = vpop.xlane.xlu0 %1802
      %v1804 = vsel %vm1782, %v1773, -inf
      %1805 = vmax.xlane.f32.xlu0 %v1804
      %v1806 = vpop.xlane.xlu0 %1805
      %v1807 = vsel %vm1782, %v1774, -inf
      %1808 = vmax.xlane.f32.xlu0 %v1807
      %v1809 = vpop.xlane.xlu0 %1808
      %v1810 = vsel %vm1782, %v1775, -inf
      %1811 = vmax.xlane.f32.xlu0 %v1810
      %v1812 = vpop.xlane.xlu0 %1811
      %v1813 = vsel %vm1782, %v1776, -inf
      %1814 = vmax.xlane.f32.xlu0 %v1813
      %v1815 = vpop.xlane.xlu0 %1814
      %v1816 = vsel %vm1782, %v1777, -inf
      %1817 = vmax.xlane.f32.xlu0 %v1816
      %v1818 = vpop.xlane.xlu0 %1817
      %v1819 = vsel %vm1782, %v1778, -inf
      %1820 = vmax.xlane.f32.xlu0 %v1819
      %v1821 = vpop.xlane.xlu0 %1820
      %v1822 = vsel %vm1782, %v1779, -inf
      %1823 = vmax.xlane.f32.xlu0 %v1822
      %v1824 = vpop.xlane.xlu0 %1823
      %v1825 = vsel %vm1782, %v1780, -inf
      %1826 = vmax.xlane.f32.xlu0 %v1825
      %v1827 = vpop.xlane.xlu0 %1826
      %v1828 = vsel %vm1782, %v1781, -inf
      %1829 = vmax.xlane.f32.xlu0 %v1828
      %v1830 = vpop.xlane.xlu0 %1829
      %v1831 = vsub.f32 %v1766, %v1785
      %v1832 = vsub.f32 %v1767, %v1788
      %v1833 = vsub.f32 %v1768, %v1791
      %v1834 = vsub.f32 %v1769, %v1794
      %v1835 = vsub.f32 %v1770, %v1797
      %v1836 = vsub.f32 %v1771, %v1800
      %v1837 = vsub.f32 %v1772, %v1803
      %v1838 = vsub.f32 %v1773, %v1806
      %v1839 = vsub.f32 %v1774, %v1809
      %v1840 = vsub.f32 %v1775, %v1812
      %v1841 = vsub.f32 %v1776, %v1815
      %v1842 = vsub.f32 %v1777, %v1818
      %v1843 = vsub.f32 %v1778, %v1821
      %v1844 = vsub.f32 %v1779, %v1824
      %v1845 = vsub.f32 %v1780, %v1827
      %v1846 = vsub.f32 %v1781, %v1830
      %v1847 = vmul.f32 %v1831, 1.442695
      %v1848 = vpow.pop %v1847
      %v1849 = vmul.f32 %v1832, 1.442695
      %v1850 = vpow.pop %v1849
      %v1851 = vmul.f32 %v1833, 1.442695
      %v1852 = vpow.pop %v1851
      %v1853 = vmul.f32 %v1834, 1.442695
      %v1854 = vpow.pop %v1853
      %v1855 = vmul.f32 %v1835, 1.442695
      %v1856 = vpow.pop %v1855
      %v1857 = vmul.f32 %v1836, 1.442695
      %v1858 = vpow.pop %v1857
      %v1859 = vmul.f32 %v1837, 1.442695
      %v1860 = vpow.pop %v1859
      %v1861 = vmul.f32 %v1838, 1.442695
      %v1862 = vpow.pop %v1861
      %v1863 = vmul.f32 %v1839, 1.442695
      %v1864 = vpow.pop %v1863
      %v1865 = vmul.f32 %v1840, 1.442695
      %v1866 = vpow.pop %v1865
      %v1867 = vmul.f32 %v1841, 1.442695
      %v1868 = vpow.pop %v1867
      %v1869 = vmul.f32 %v1842, 1.442695
      %v1870 = vpow.pop %v1869
      %v1871 = vmul.f32 %v1843, 1.442695
      %v1872 = vpow.pop %v1871
      %v1873 = vmul.f32 %v1844, 1.442695
      %v1874 = vpow.pop %v1873
      %v1875 = vmul.f32 %v1845, 1.442695
      %v1876 = vpow.pop %v1875
      %v1877 = vmul.f32 %v1846, 1.442695
      %v1878 = vpow.pop %v1877
      %v1879 = vsel %vm1782, %v1848, 0.0
      %1880 = vadd.xlane.f32.xlu0 %v1879
      %v1881 = vpop.xlane.xlu0 %1880
      %v1882 = vsel %vm1782, %v1850, 0.0
      %1883 = vadd.xlane.f32.xlu0 %v1882
      %v1884 = vpop.xlane.xlu0 %1883
      %v1885 = vsel %vm1782, %v1852, 0.0
      %1886 = vadd.xlane.f32.xlu0 %v1885
      %v1887 = vpop.xlane.xlu0 %1886
      %v1888 = vsel %vm1782, %v1854, 0.0
      %1889 = vadd.xlane.f32.xlu0 %v1888
      %v1890 = vpop.xlane.xlu0 %1889
      %v1891 = vsel %vm1782, %v1856, 0.0
      %1892 = vadd.xlane.f32.xlu0 %v1891
      %v1893 = vpop.xlane.xlu0 %1892
      %v1894 = vsel %vm1782, %v1858, 0.0
      %1895 = vadd.xlane.f32.xlu0 %v1894
      %v1896 = vpop.xlane.xlu0 %1895
      %v1897 = vsel %vm1782, %v1860, 0.0
      %1898 = vadd.xlane.f32.xlu0 %v1897
      %v1899 = vpop.xlane.xlu0 %1898
      %v1900 = vsel %vm1782, %v1862, 0.0
      %1901 = vadd.xlane.f32.xlu0 %v1900
      %v1902 = vpop.xlane.xlu0 %1901
      %v1903 = vsel %vm1782, %v1864, 0.0
      %1904 = vadd.xlane.f32.xlu0 %v1903
      %v1905 = vpop.xlane.xlu0 %1904
      %v1906 = vsel %vm1782, %v1866, 0.0
      %1907 = vadd.xlane.f32.xlu0 %v1906
      %v1908 = vpop.xlane.xlu0 %1907
      %v1909 = vsel %vm1782, %v1868, 0.0
      %1910 = vadd.xlane.f32.xlu0 %v1909
      %v1911 = vpop.xlane.xlu0 %1910
      %v1912 = vsel %vm1782, %v1870, 0.0
      %1913 = vadd.xlane.f32.xlu0 %v1912
      %v1914 = vpop.xlane.xlu0 %1913
      %v1915 = vsel %vm1782, %v1872, 0.0
      %1916 = vadd.xlane.f32.xlu0 %v1915
      %v1917 = vpop.xlane.xlu0 %1916
      %v1918 = vsel %vm1782, %v1874, 0.0
      %1919 = vadd.xlane.f32.xlu0 %v1918
      %v1920 = vpop.xlane.xlu0 %1919
      %v1921 = vsel %vm1782, %v1876, 0.0
      %1922 = vadd.xlane.f32.xlu0 %v1921
      %v1923 = vpop.xlane.xlu0 %1922
      %v1924 = vsel %vm1782, %v1878, 0.0
      %1925 = vadd.xlane.f32.xlu0 %v1924
      %v1926 = vpop.xlane.xlu0 %1925
      %v1927 = vrcp.pop %v1881
      %v1928 = vmul.f32 %v1848, %v1927
      %v1929 = vrcp.pop %v1884
      %v1930 = vmul.f32 %v1850, %v1929
      %v1931 = vrcp.pop %v1887
      %v1932 = vmul.f32 %v1852, %v1931
      %v1933 = vrcp.pop %v1890
      %v1934 = vmul.f32 %v1854, %v1933
      %v1935 = vrcp.pop %v1893
      %v1936 = vmul.f32 %v1856, %v1935
      %v1937 = vrcp.pop %v1896
      %v1938 = vmul.f32 %v1858, %v1937
      %v1939 = vrcp.pop %v1899
      %v1940 = vmul.f32 %v1860, %v1939
      %v1941 = vrcp.pop %v1902
      %v1942 = vmul.f32 %v1862, %v1941
      %v1943 = vrcp.pop %v1905
      %v1944 = vmul.f32 %v1864, %v1943
      %v1945 = vrcp.pop %v1908
      %v1946 = vmul.f32 %v1866, %v1945
      %v1947 = vrcp.pop %v1911
      %v1948 = vmul.f32 %v1868, %v1947
      %v1949 = vrcp.pop %v1914
      %v1950 = vmul.f32 %v1870, %v1949
      %v1951 = vrcp.pop %v1917
      %v1952 = vmul.f32 %v1872, %v1951
      %v1953 = vrcp.pop %v1920
      %v1954 = vmul.f32 %v1874, %v1953
      %v1955 = vrcp.pop %v1923
      %v1956 = vmul.f32 %v1876, %v1955
      %v1957 = vrcp.pop %v1926
      %v1958 = vmul.f32 %v1878, %v1957
      %1959 = vrot.lane.b32.xlu0 %v455, 124
      %v1960 = vpop.permute.xlu0 %1959
      %v1963 = vsel %vm1782, %v1928, 0
      %1965 = vmatprep.subr.mxu0 0.0
      %1966 = vmatpush1.msra.mxu0 %v1960
      %1967 = vmatprep.subr.mxu0 0.0
      %1968 = vmatpush1.msra.mxu0 0.0
      %1969 = vmatprep.subr.mxu0 0.0
      %1970 = vmatpush1.msra.mxu0 0.0
      %1971 = vmatprep.subr.mxu0 0.0
      %1972 = vmatpush1.msra.mxu0 0.0
      %1973 = vmatprep.subr.mxu0 0.0
      %1974 = vmatpush1.msra.mxu0 0.0
      %1975 = vmatprep.subr.mxu0 0.0
      %1976 = vmatpush1.msra.mxu0 0.0
      %1977 = vmatprep.subr.mxu0 0.0
      %1978 = vmatpush1.msra.mxu0 0.0
      %1979 = vmatprep.subr.mxu0 0.0
      %1980 = vmatpush1.msra.mxu0 0.0
      %1981 = vmatprep.subr.mxu0 0.0
      %1982 = vmatpush1.msra.mxu0 0.0
      %1983 = vmatprep.subr.mxu0 0.0
      %1984 = vmatpush1.msra.mxu0 0.0
      %1985 = vmatprep.subr.mxu0 0.0
      %1986 = vmatpush1.msra.mxu0 0.0
      %1987 = vmatprep.subr.mxu0 0.0
      %1988 = vmatpush1.msra.mxu0 0.0
      %1989 = vmatprep.subr.mxu0 0.0
      %1990 = vmatpush1.msra.mxu0 0.0
      %1991 = vmatprep.subr.mxu0 0.0
      %1992 = vmatpush1.msra.mxu0 0.0
      %1993 = vmatprep.subr.mxu0 0.0
      %1994 = vmatpush1.msra.mxu0 0.0
      %1995 = vmatprep.subr.mxu0 0.0
      %1996 = vmatpush1.msra.mxu0 0.0
      %1997 = vmatprep.subr.mxu0 0.0
      %1998 = vmatpush1.msra.mxu0 0.0
      %1999 = vmatprep.subr.mxu0 0.0
      %2000 = vmatpush1.msra.mxu0 0.0
      %2001 = vmatprep.subr.mxu0 0.0
      %2002 = vmatpush1.msra.mxu0 0.0
      %2003 = vmatprep.subr.mxu0 0.0
      %2004 = vmatpush1.msra.mxu0 0.0
      %2005 = vmatprep.subr.mxu0 0.0
      %2006 = vmatpush1.msra.mxu0 0.0
      %2007 = vmatprep.subr.mxu0 0.0
      %2008 = vmatpush1.msra.mxu0 0.0
      %2009 = vmatprep.subr.mxu0 0.0
      %2010 = vmatpush1.msra.mxu0 0.0
      %2011 = vmatprep.subr.mxu0 0.0
      %2012 = vmatpush1.msra.mxu0 0.0
      %2013 = vmatprep.subr.mxu0 0.0
      %2014 = vmatpush1.msra.mxu0 0.0
      %2015 = vmatprep.subr.mxu0 0.0
      %2016 = vmatpush1.msra.mxu0 0.0
      %2017 = vmatprep.subr.mxu0 0.0
      %2018 = vmatpush1.msra.mxu0 0.0
      %2019 = vmatprep.subr.mxu0 0.0
      %2020 = vmatpush1.msra.mxu0 0.0
      %2021 = vmatprep.subr.mxu0 0.0
      %2022 = vmatpush1.msra.mxu0 0.0
      %2023 = vmatprep.subr.mxu0 0.0
      %2024 = vmatpush1.msra.mxu0 0.0
      %2025 = vmatprep.subr.mxu0 0.0
      %2026 = vmatpush1.msra.mxu0 0.0
      %2027 = vmatprep.subr.mxu0 0.0
      %2028 = vmatpush1.msra.mxu0 0.0
      %2029 = vmatprep.mubr.f32.mxu0 0.0
      %2030 = vmatmul.mubr.f32.gmra.mrb[0].mxu0 %v1963
      %v2031 = vpop.f32.mrb[0].mxu0
      %v2032 = vadd.f32 0.0, %v2031
      %v2033 = vpop.f32.mrb[0].mxu0
      %2034 = vdwg.mxu0
      %2035 = vrot.lane.b32.xlu0 %v460, 124
      %v2036 = vpop.permute.xlu0 %2035
      %v2039 = vsel %vm1782, %v1930, 0
      %2041 = vmatprep.subr.mxu0 0.0
      %2042 = vmatpush1.msra.mxu0 %v2036
      %2043 = vmatprep.subr.mxu0 0.0
      %2044 = vmatpush1.msra.mxu0 0.0
      %2045 = vmatprep.subr.mxu0 0.0
      %2046 = vmatpush1.msra.mxu0 0.0
      %2047 = vmatprep.subr.mxu0 0.0
      %2048 = vmatpush1.msra.mxu0 0.0
      %2049 = vmatprep.subr.mxu0 0.0
      %2050 = vmatpush1.msra.mxu0 0.0
      %2051 = vmatprep.subr.mxu0 0.0
      %2052 = vmatpush1.msra.mxu0 0.0
      %2053 = vmatprep.subr.mxu0 0.0
      %2054 = vmatpush1.msra.mxu0 0.0
      %2055 = vmatprep.subr.mxu0 0.0
      %2056 = vmatpush1.msra.mxu0 0.0
      %2057 = vmatprep.subr.mxu0 0.0
      %2058 = vmatpush1.msra.mxu0 0.0
      %2059 = vmatprep.subr.mxu0 0.0
      %2060 = vmatpush1.msra.mxu0 0.0
      %2061 = vmatprep.subr.mxu0 0.0
      %2062 = vmatpush1.msra.mxu0 0.0
      %2063 = vmatprep.subr.mxu0 0.0
      %2064 = vmatpush1.msra.mxu0 0.0
      %2065 = vmatprep.subr.mxu0 0.0
      %2066 = vmatpush1.msra.mxu0 0.0
      %2067 = vmatprep.subr.mxu0 0.0
      %2068 = vmatpush1.msra.mxu0 0.0
      %2069 = vmatprep.subr.mxu0 0.0
      %2070 = vmatpush1.msra.mxu0 0.0
      %2071 = vmatprep.subr.mxu0 0.0
      %2072 = vmatpush1.msra.mxu0 0.0
      %2073 = vmatprep.subr.mxu0 0.0
      %2074 = vmatpush1.msra.mxu0 0.0
      %2075 = vmatprep.subr.mxu0 0.0
      %2076 = vmatpush1.msra.mxu0 0.0
      %2077 = vmatprep.subr.mxu0 0.0
      %2078 = vmatpush1.msra.mxu0 0.0
      %2079 = vmatprep.subr.mxu0 0.0
      %2080 = vmatpush1.msra.mxu0 0.0
      %2081 = vmatprep.subr.mxu0 0.0
      %2082 = vmatpush1.msra.mxu0 0.0
      %2083 = vmatprep.subr.mxu0 0.0
      %2084 = vmatpush1.msra.mxu0 0.0
      %2085 = vmatprep.subr.mxu0 0.0
      %2086 = vmatpush1.msra.mxu0 0.0
      %2087 = vmatprep.subr.mxu0 0.0
      %2088 = vmatpush1.msra.mxu0 0.0
      %2089 = vmatprep.subr.mxu0 0.0
      %2090 = vmatpush1.msra.mxu0 0.0
      %2091 = vmatprep.subr.mxu0 0.0
      %2092 = vmatpush1.msra.mxu0 0.0
      %2093 = vmatprep.subr.mxu0 0.0
      %2094 = vmatpush1.msra.mxu0 0.0
      %2095 = vmatprep.subr.mxu0 0.0
      %2096 = vmatpush1.msra.mxu0 0.0
      %2097 = vmatprep.subr.mxu0 0.0
      %2098 = vmatpush1.msra.mxu0 0.0
      %2099 = vmatprep.subr.mxu0 0.0
      %2100 = vmatpush1.msra.mxu0 0.0
      %2101 = vmatprep.subr.mxu0 0.0
      %2102 = vmatpush1.msra.mxu0 0.0
      %2103 = vmatprep.subr.mxu0 0.0
      %2104 = vmatpush1.msra.mxu0 0.0
      %2105 = vmatprep.mubr.f32.mxu0 0.0
      %2106 = vmatmul.mubr.f32.gmra.mrb[0].mxu0 %v2039
      %v2107 = vpop.f32.mrb[0].mxu0
      %v2108 = vadd.f32 0.0, %v2107
      %v2109 = vpop.f32.mrb[0].mxu0
      %2110 = vdwg.mxu0
      %2111 = vrot.lane.b32.xlu0 %v465, 124
      %v2112 = vpop.permute.xlu0 %2111
      %v2115 = vsel %vm1782, %v1932, 0
      %2117 = vmatprep.subr.mxu0 0.0
      %2118 = vmatpush1.msra.mxu0 %v2112
      %2119 = vmatprep.subr.mxu0 0.0
      %2120 = vmatpush1.msra.mxu0 0.0
      %2121 = vmatprep.subr.mxu0 0.0
      %2122 = vmatpush1.msra.mxu0 0.0
      %2123 = vmatprep.subr.mxu0 0.0
      %2124 = vmatpush1.msra.mxu0 0.0
      %2125 = vmatprep.subr.mxu0 0.0
      %2126 = vmatpush1.msra.mxu0 0.0
      %2127 = vmatprep.subr.mxu0 0.0
      %2128 = vmatpush1.msra.mxu0 0.0
      %2129 = vmatprep.subr.mxu0 0.0
      %2130 = vmatpush1.msra.mxu0 0.0
      %2131 = vmatprep.subr.mxu0 0.0
      %2132 = vmatpush1.msra.mxu0 0.0
      %2133 = vmatprep.subr.mxu0 0.0
      %2134 = vmatpush1.msra.mxu0 0.0
      %2135 = vmatprep.subr.mxu0 0.0
      %2136 = vmatpush1.msra.mxu0 0.0
      %2137 = vmatprep.subr.mxu0 0.0
      %2138 = vmatpush1.msra.mxu0 0.0
      %2139 = vmatprep.subr.mxu0 0.0
      %2140 = vmatpush1.msra.mxu0 0.0
      %2141 = vmatprep.subr.mxu0 0.0
      %2142 = vmatpush1.msra.mxu0 0.0
      %2143 = vmatprep.subr.mxu0 0.0
      %2144 = vmatpush1.msra.mxu0 0.0
      %2145 = vmatprep.subr.mxu0 0.0
      %2146 = vmatpush1.msra.mxu0 0.0
      %2147 = vmatprep.subr.mxu0 0.0
      %2148 = vmatpush1.msra.mxu0 0.0
      %2149 = vmatprep.subr.mxu0 0.0
      %2150 = vmatpush1.msra.mxu0 0.0
      %2151 = vmatprep.subr.mxu0 0.0
      %2152 = vmatpush1.msra.mxu0 0.0
      %2153 = vmatprep.subr.mxu0 0.0
      %2154 = vmatpush1.msra.mxu0 0.0
      %2155 = vmatprep.subr.mxu0 0.0
      %2156 = vmatpush1.msra.mxu0 0.0
      %2157 = vmatprep.subr.mxu0 0.0
      %2158 = vmatpush1.msra.mxu0 0.0
      %2159 = vmatprep.subr.mxu0 0.0
      %2160 = vmatpush1.msra.mxu0 0.0
      %2161 = vmatprep.subr.mxu0 0.0
      %2162 = vmatpush1.msra.mxu0 0.0
      %2163 = vmatprep.subr.mxu0 0.0
      %2164 = vmatpush1.msra.mxu0 0.0
      %2165 = vmatprep.subr.mxu0 0.0
      %2166 = vmatpush1.msra.mxu0 0.0
      %2167 = vmatprep.subr.mxu0 0.0
      %2168 = vmatpush1.msra.mxu0 0.0
      %2169 = vmatprep.subr.mxu0 0.0
      %2170 = vmatpush1.msra.mxu0 0.0
      %2171 = vmatprep.subr.mxu0 0.0
      %2172 = vmatpush1.msra.mxu0 0.0
      %2173 = vmatprep.subr.mxu0 0.0
      %2174 = vmatpush1.msra.mxu0 0.0
      %2175 = vmatprep.subr.mxu0 0.0
      %2176 = vmatpush1.msra.mxu0 0.0
      %2177 = vmatprep.subr.mxu0 0.0
      %2178 = vmatpush1.msra.mxu0 0.0
      %2179 = vmatprep.subr.mxu0 0.0
      %2180 = vmatpush1.msra.mxu0 0.0
      %2181 = vmatprep.mubr.f32.mxu0 0.0
      %2182 = vmatmul.mubr.f32.gmra.mrb[0].mxu0 %v2115
      %v2183 = vpop.f32.mrb[0].mxu0
      %v2184 = vadd.f32 0.0, %v2183
      %v2185 = vpop.f32.mrb[0].mxu0
      %2186 = vdwg.mxu0
      %2187 = vrot.lane.b32.xlu0 %v470, 124
      %v2188 = vpop.permute.xlu0 %2187
      %v2191 = vsel %vm1782, %v1934, 0
      %2193 = vmatprep.subr.mxu0 0.0
      %2194 = vmatpush1.msra.mxu0 %v2188
      %2195 = vmatprep.subr.mxu0 0.0
      %2196 = vmatpush1.msra.mxu0 0.0
      %2197 = vmatprep.subr.mxu0 0.0
      %2198 = vmatpush1.msra.mxu0 0.0
      %2199 = vmatprep.subr.mxu0 0.0
      %2200 = vmatpush1.msra.mxu0 0.0
      %2201 = vmatprep.subr.mxu0 0.0
      %2202 = vmatpush1.msra.mxu0 0.0
      %2203 = vmatprep.subr.mxu0 0.0
      %2204 = vmatpush1.msra.mxu0 0.0
      %2205 = vmatprep.subr.mxu0 0.0
      %2206 = vmatpush1.msra.mxu0 0.0
      %2207 = vmatprep.subr.mxu0 0.0
      %2208 = vmatpush1.msra.mxu0 0.0
      %2209 = vmatprep.subr.mxu0 0.0
      %2210 = vmatpush1.msra.mxu0 0.0
      %2211 = vmatprep.subr.mxu0 0.0
      %2212 = vmatpush1.msra.mxu0 0.0
      %2213 = vmatprep.subr.mxu0 0.0
      %2214 = vmatpush1.msra.mxu0 0.0
      %2215 = vmatprep.subr.mxu0 0.0
      %2216 = vmatpush1.msra.mxu0 0.0
      %2217 = vmatprep.subr.mxu0 0.0
      %2218 = vmatpush1.msra.mxu0 0.0
      %2219 = vmatprep.subr.mxu0 0.0
      %2220 = vmatpush1.msra.mxu0 0.0
      %2221 = vmatprep.subr.mxu0 0.0
      %2222 = vmatpush1.msra.mxu0 0.0
      %2223 = vmatprep.subr.mxu0 0.0
      %2224 = vmatpush1.msra.mxu0 0.0
      %2225 = vmatprep.subr.mxu0 0.0
      %2226 = vmatpush1.msra.mxu0 0.0
      %2227 = vmatprep.subr.mxu0 0.0
      %2228 = vmatpush1.msra.mxu0 0.0
      %2229 = vmatprep.subr.mxu0 0.0
      %2230 = vmatpush1.msra.mxu0 0.0
      %2231 = vmatprep.subr.mxu0 0.0
      %2232 = vmatpush1.msra.mxu0 0.0
      %2233 = vmatprep.subr.mxu0 0.0
      %2234 = vmatpush1.msra.mxu0 0.0
      %2235 = vmatprep.subr.mxu0 0.0
      %2236 = vmatpush1.msra.mxu0 0.0
      %2237 = vmatprep.subr.mxu0 0.0
      %2238 = vmatpush1.msra.mxu0 0.0
      %2239 = vmatprep.subr.mxu0 0.0
      %2240 = vmatpush1.msra.mxu0 0.0
      %2241 = vmatprep.subr.mxu0 0.0
      %2242 = vmatpush1.msra.mxu0 0.0
      %2243 = vmatprep.subr.mxu0 0.0
      %2244 = vmatpush1.msra.mxu0 0.0
      %2245 = vmatprep.subr.mxu0 0.0
      %2246 = vmatpush1.msra.mxu0 0.0
      %2247 = vmatprep.subr.mxu0 0.0
      %2248 = vmatpush1.msra.mxu0 0.0
      %2249 = vmatprep.subr.mxu0 0.0
      %2250 = vmatpush1.msra.mxu0 0.0
      %2251 = vmatprep.subr.mxu0 0.0
      %2252 = vmatpush1.msra.mxu0 0.0
      %2253 = vmatprep.subr.mxu0 0.0
      %2254 = vmatpush1.msra.mxu0 0.0
      %2255 = vmatprep.subr.mxu0 0.0
      %2256 = vmatpush1.msra.mxu0 0.0
      %2257 = vmatprep.mubr.f32.mxu0 0.0
      %2258 = vmatmul.mubr.f32.gmra.mrb[0].mxu0 %v2191
      %v2259 = vpop.f32.mrb[0].mxu0
      %v2260 = vadd.f32 0.0, %v2259
      %v2261 = vpop.f32.mrb[0].mxu0
      %2262 = vdwg.mxu0
      %2263 = vrot.lane.b32.xlu0 %v475, 124
      %v2264 = vpop.permute.xlu0 %2263
      %v2267 = vsel %vm1782, %v1936, 0
      %2269 = vmatprep.subr.mxu0 0.0
      %2270 = vmatpush1.msra.mxu0 %v2264
      %2271 = vmatprep.subr.mxu0 0.0
      %2272 = vmatpush1.msra.mxu0 0.0
      %2273 = vmatprep.subr.mxu0 0.0
      %2274 = vmatpush1.msra.mxu0 0.0
      %2275 = vmatprep.subr.mxu0 0.0
      %2276 = vmatpush1.msra.mxu0 0.0
      %2277 = vmatprep.subr.mxu0 0.0
      %2278 = vmatpush1.msra.mxu0 0.0
      %2279 = vmatprep.subr.mxu0 0.0
      %2280 = vmatpush1.msra.mxu0 0.0
      %2281 = vmatprep.subr.mxu0 0.0
      %2282 = vmatpush1.msra.mxu0 0.0
      %2283 = vmatprep.subr.mxu0 0.0
      %2284 = vmatpush1.msra.mxu0 0.0
      %2285 = vmatprep.subr.mxu0 0.0
      %2286 = vmatpush1.msra.mxu0 0.0
      %2287 = vmatprep.subr.mxu0 0.0
      %2288 = vmatpush1.msra.mxu0 0.0
      %2289 = vmatprep.subr.mxu0 0.0
      %2290 = vmatpush1.msra.mxu0 0.0
      %2291 = vmatprep.subr.mxu0 0.0
      %2292 = vmatpush1.msra.mxu0 0.0
      %2293 = vmatprep.subr.mxu0 0.0
      %2294 = vmatpush1.msra.mxu0 0.0
      %2295 = vmatprep.subr.mxu0 0.0
      %2296 = vmatpush1.msra.mxu0 0.0
      %2297 = vmatprep.subr.mxu0 0.0
      %2298 = vmatpush1.msra.mxu0 0.0
      %2299 = vmatprep.subr.mxu0 0.0
      %2300 = vmatpush1.msra.mxu0 0.0
      %2301 = vmatprep.subr.mxu0 0.0
      %2302 = vmatpush1.msra.mxu0 0.0
      %2303 = vmatprep.subr.mxu0 0.0
      %2304 = vmatpush1.msra.mxu0 0.0
      %2305 = vmatprep.subr.mxu0 0.0
      %2306 = vmatpush1.msra.mxu0 0.0
      %2307 = vmatprep.subr.mxu0 0.0
      %2308 = vmatpush1.msra.mxu0 0.0
      %2309 = vmatprep.subr.mxu0 0.0
      %2310 = vmatpush1.msra.mxu0 0.0
      %2311 = vmatprep.subr.mxu0 0.0
      %2312 = vmatpush1.msra.mxu0 0.0
      %2313 = vmatprep.subr.mxu0 0.0
      %2314 = vmatpush1.msra.mxu0 0.0
      %2315 = vmatprep.subr.mxu0 0.0
      %2316 = vmatpush1.msra.mxu0 0.0
      %2317 = vmatprep.subr.mxu0 0.0
      %2318 = vmatpush1.msra.mxu0 0.0
      %2319 = vmatprep.subr.mxu0 0.0
      %2320 = vmatpush1.msra.mxu0 0.0
      %2321 = vmatprep.subr.mxu0 0.0
      %2322 = vmatpush1.msra.mxu0 0.0
      %2323 = vmatprep.subr.mxu0 0.0
      %2324 = vmatpush1.msra.mxu0 0.0
      %2325 = vmatprep.subr.mxu0 0.0
      %2326 = vmatpush1.msra.mxu0 0.0
      %2327 = vmatprep.subr.mxu0 0.0
      %2328 = vmatpush1.msra.mxu0 0.0
      %2329 = vmatprep.subr.mxu0 0.0
      %2330 = vmatpush1.msra.mxu0 0.0
      %2331 = vmatprep.subr.mxu0 0.0
      %2332 = vmatpush1.msra.mxu0 0.0
      %2333 = vmatprep.mubr.f32.mxu0 0.0
      %2334 = vmatmul.mubr.f32.gmra.mrb[0].mxu0 %v2267
      %v2335 = vpop.f32.mrb[0].mxu0
      %v2336 = vadd.f32 0.0, %v2335
      %v2337 = vpop.f32.mrb[0].mxu0
      %2338 = vdwg.mxu0
      %2339 = vrot.lane.b32.xlu0 %v480, 124
      %v2340 = vpop.permute.xlu0 %2339
      %v2343 = vsel %vm1782, %v1938, 0
      %2345 = vmatprep.subr.mxu0 0.0
      %2346 = vmatpush1.msra.mxu0 %v2340
      %2347 = vmatprep.subr.mxu0 0.0
      %2348 = vmatpush1.msra.mxu0 0.0
      %2349 = vmatprep.subr.mxu0 0.0
      %2350 = vmatpush1.msra.mxu0 0.0
      %2351 = vmatprep.subr.mxu0 0.0
      %2352 = vmatpush1.msra.mxu0 0.0
      %2353 = vmatprep.subr.mxu0 0.0
      %2354 = vmatpush1.msra.mxu0 0.0
      %2355 = vmatprep.subr.mxu0 0.0
      %2356 = vmatpush1.msra.mxu0 0.0
      %2357 = vmatprep.subr.mxu0 0.0
      %2358 = vmatpush1.msra.mxu0 0.0
      %2359 = vmatprep.subr.mxu0 0.0
      %2360 = vmatpush1.msra.mxu0 0.0
      %2361 = vmatprep.subr.mxu0 0.0
      %2362 = vmatpush1.msra.mxu0 0.0
      %2363 = vmatprep.subr.mxu0 0.0
      %2364 = vmatpush1.msra.mxu0 0.0
      %2365 = vmatprep.subr.mxu0 0.0
      %2366 = vmatpush1.msra.mxu0 0.0
      %2367 = vmatprep.subr.mxu0 0.0
      %2368 = vmatpush1.msra.mxu0 0.0
      %2369 = vmatprep.subr.mxu0 0.0
      %2370 = vmatpush1.msra.mxu0 0.0
      %2371 = vmatprep.subr.mxu0 0.0
      %2372 = vmatpush1.msra.mxu0 0.0
      %2373 = vmatprep.subr.mxu0 0.0
      %2374 = vmatpush1.msra.mxu0 0.0
      %2375 = vmatprep.subr.mxu0 0.0
      %2376 = vmatpush1.msra.mxu0 0.0
      %2377 = vmatprep.subr.mxu0 0.0
      %2378 = vmatpush1.msra.mxu0 0.0
      %2379 = vmatprep.subr.mxu0 0.0
      %2380 = vmatpush1.msra.mxu0 0.0
      %2381 = vmatprep.subr.mxu0 0.0
      %2382 = vmatpush1.msra.mxu0 0.0
      %2383 = vmatprep.subr.mxu0 0.0
      %2384 = vmatpush1.msra.mxu0 0.0
      %2385 = vmatprep.subr.mxu0 0.0
      %2386 = vmatpush1.msra.mxu0 0.0
      %2387 = vmatprep.subr.mxu0 0.0
      %2388 = vmatpush1.msra.mxu0 0.0
      %2389 = vmatprep.subr.mxu0 0.0
      %2390 = vmatpush1.msra.mxu0 0.0
      %2391 = vmatprep.subr.mxu0 0.0
      %2392 = vmatpush1.msra.mxu0 0.0
      %2393 = vmatprep.subr.mxu0 0.0
      %2394 = vmatpush1.msra.mxu0 0.0
      %2395 = vmatprep.subr.mxu0 0.0
      %2396 = vmatpush1.msra.mxu0 0.0
      %2397 = vmatprep.subr.mxu0 0.0
      %2398 = vmatpush1.msra.mxu0 0.0
      %2399 = vmatprep.subr.mxu0 0.0
      %2400 = vmatpush1.msra.mxu0 0.0
      %2401 = vmatprep.subr.mxu0 0.0
      %2402 = vmatpush1.msra.mxu0 0.0
      %2403 = vmatprep.subr.mxu0 0.0
      %2404 = vmatpush1.msra.mxu0 0.0
      %2405 = vmatprep.subr.mxu0 0.0
      %2406 = vmatpush1.msra.mxu0 0.0
      %2407 = vmatprep.subr.mxu0 0.0
      %2408 = vmatpush1.msra.mxu0 0.0
      %2409 = vmatprep.mubr.f32.mxu0 0.0
      %2410 = vmatmul.mubr.f32.gmra.mrb[0].mxu0 %v2343
      %v2411 = vpop.f32.mrb[0].mxu0
      %v2412 = vadd.f32 0.0, %v2411
      %v2413 = vpop.f32.mrb[0].mxu0
      %2414 = vdwg.mxu0
      %2415 = vrot.lane.b32.xlu0 %v485, 124
      %v2416 = vpop.permute.xlu0 %2415
      %v2419 = vsel %vm1782, %v1940, 0
      %2421 = vmatprep.subr.mxu0 0.0
      %2422 = vmatpush1.msra.mxu0 %v2416
      %2423 = vmatprep.subr.mxu0 0.0
      %2424 = vmatpush1.msra.mxu0 0.0
      %2425 = vmatprep.subr.mxu0 0.0
      %2426 = vmatpush1.msra.mxu0 0.0
      %2427 = vmatprep.subr.mxu0 0.0
      %2428 = vmatpush1.msra.mxu0 0.0
      %2429 = vmatprep.subr.mxu0 0.0
      %2430 = vmatpush1.msra.mxu0 0.0
      %2431 = vmatprep.subr.mxu0 0.0
      %2432 = vmatpush1.msra.mxu0 0.0
      %2433 = vmatprep.subr.mxu0 0.0
      %2434 = vmatpush1.msra.mxu0 0.0
      %2435 = vmatprep.subr.mxu0 0.0
      %2436 = vmatpush1.msra.mxu0 0.0
      %2437 = vmatprep.subr.mxu0 0.0
      %2438 = vmatpush1.msra.mxu0 0.0
      %2439 = vmatprep.subr.mxu0 0.0
      %2440 = vmatpush1.msra.mxu0 0.0
      %2441 = vmatprep.subr.mxu0 0.0
      %2442 = vmatpush1.msra.mxu0 0.0
      %2443 = vmatprep.subr.mxu0 0.0
      %2444 = vmatpush1.msra.mxu0 0.0
      %2445 = vmatprep.subr.mxu0 0.0
      %2446 = vmatpush1.msra.mxu0 0.0
      %2447 = vmatprep.subr.mxu0 0.0
      %2448 = vmatpush1.msra.mxu0 0.0
      %2449 = vmatprep.subr.mxu0 0.0
      %2450 = vmatpush1.msra.mxu0 0.0
      %2451 = vmatprep.subr.mxu0 0.0
      %2452 = vmatpush1.msra.mxu0 0.0
      %2453 = vmatprep.subr.mxu0 0.0
      %2454 = vmatpush1.msra.mxu0 0.0
      %2455 = vmatprep.subr.mxu0 0.0
      %2456 = vmatpush1.msra.mxu0 0.0
      %2457 = vmatprep.subr.mxu0 0.0
      %2458 = vmatpush1.msra.mxu0 0.0
      %2459 = vmatprep.subr.mxu0 0.0
      %2460 = vmatpush1.msra.mxu0 0.0
      %2461 = vmatprep.subr.mxu0 0.0
      %2462 = vmatpush1.msra.mxu0 0.0
      %2463 = vmatprep.subr.mxu0 0.0
      %2464 = vmatpush1.msra.mxu0 0.0
      %2465 = vmatprep.subr.mxu0 0.0
      %2466 = vmatpush1.msra.mxu0 0.0
      %2467 = vmatprep.subr.mxu0 0.0
      %2468 = vmatpush1.msra.mxu0 0.0
      %2469 = vmatprep.subr.mxu0 0.0
      %2470 = vmatpush1.msra.mxu0 0.0
      %2471 = vmatprep.subr.mxu0 0.0
      %2472 = vmatpush1.msra.mxu0 0.0
      %2473 = vmatprep.subr.mxu0 0.0
      %2474 = vmatpush1.msra.mxu0 0.0
      %2475 = vmatprep.subr.mxu0 0.0
      %2476 = vmatpush1.msra.mxu0 0.0
      %2477 = vmatprep.subr.mxu0 0.0
      %2478 = vmatpush1.msra.mxu0 0.0
      %2479 = vmatprep.subr.mxu0 0.0
      %2480 = vmatpush1.msra.mxu0 0.0
      %2481 = vmatprep.subr.mxu0 0.0
      %2482 = vmatpush1.msra.mxu0 0.0
      %2483 = vmatprep.subr.mxu0 0.0
      %2484 = vmatpush1.msra.mxu0 0.0
      %2485 = vmatprep.mubr.f32.mxu0 0.0
      %2486 = vmatmul.mubr.f32.gmra.mrb[0].mxu0 %v2419
      %v2487 = vpop.f32.mrb[0].mxu0
      %v2488 = vadd.f32 0.0, %v2487
      %v2489 = vpop.f32.mrb[0].mxu0
      %2490 = vdwg.mxu0
      %2491 = vrot.lane.b32.xlu0 %v490, 124
      %v2492 = vpop.permute.xlu0 %2491
      %v2495 = vsel %vm1782, %v1942, 0
      %2497 = vmatprep.subr.mxu0 0.0
      %2498 = vmatpush1.msra.mxu0 %v2492
      %2499 = vmatprep.subr.mxu0 0.0
      %2500 = vmatpush1.msra.mxu0 0.0
      %2501 = vmatprep.subr.mxu0 0.0
      %2502 = vmatpush1.msra.mxu0 0.0
      %2503 = vmatprep.subr.mxu0 0.0
      %2504 = vmatpush1.msra.mxu0 0.0
      %2505 = vmatprep.subr.mxu0 0.0
      %2506 = vmatpush1.msra.mxu0 0.0
      %2507 = vmatprep.subr.mxu0 0.0
      %2508 = vmatpush1.msra.mxu0 0.0
      %2509 = vmatprep.subr.mxu0 0.0
      %2510 = vmatpush1.msra.mxu0 0.0
      %2511 = vmatprep.subr.mxu0 0.0
      %2512 = vmatpush1.msra.mxu0 0.0
      %2513 = vmatprep.subr.mxu0 0.0
      %2514 = vmatpush1.msra.mxu0 0.0
      %2515 = vmatprep.subr.mxu0 0.0
      %2516 = vmatpush1.msra.mxu0 0.0
      %2517 = vmatprep.subr.mxu0 0.0
      %2518 = vmatpush1.msra.mxu0 0.0
      %2519 = vmatprep.subr.mxu0 0.0
      %2520 = vmatpush1.msra.mxu0 0.0
      %2521 = vmatprep.subr.mxu0 0.0
      %2522 = vmatpush1.msra.mxu0 0.0
      %2523 = vmatprep.subr.mxu0 0.0
      %2524 = vmatpush1.msra.mxu0 0.0
      %2525 = vmatprep.subr.mxu0 0.0
      %2526 = vmatpush1.msra.mxu0 0.0
      %2527 = vmatprep.subr.mxu0 0.0
      %2528 = vmatpush1.msra.mxu0 0.0
      %2529 = vmatprep.subr.mxu0 0.0
      %2530 = vmatpush1.msra.mxu0 0.0
      %2531 = vmatprep.subr.mxu0 0.0
      %2532 = vmatpush1.msra.mxu0 0.0
      %2533 = vmatprep.subr.mxu0 0.0
      %2534 = vmatpush1.msra.mxu0 0.0
      %2535 = vmatprep.subr.mxu0 0.0
      %2536 = vmatpush1.msra.mxu0 0.0
      %2537 = vmatprep.subr.mxu0 0.0
      %2538 = vmatpush1.msra.mxu0 0.0
      %2539 = vmatprep.subr.mxu0 0.0
      %2540 = vmatpush1.msra.mxu0 0.0
      %2541 = vmatprep.subr.mxu0 0.0
      %2542 = vmatpush1.msra.mxu0 0.0
      %2543 = vmatprep.subr.mxu0 0.0
      %2544 = vmatpush1.msra.mxu0 0.0
      %2545 = vmatprep.subr.mxu0 0.0
      %2546 = vmatpush1.msra.mxu0 0.0
      %2547 = vmatprep.subr.mxu0 0.0
      %2548 = vmatpush1.msra.mxu0 0.0
      %2549 = vmatprep.subr.mxu0 0.0
      %2550 = vmatpush1.msra.mxu0 0.0
      %2551 = vmatprep.subr.mxu0 0.0
      %2552 = vmatpush1.msra.mxu0 0.0
      %2553 = vmatprep.subr.mxu0 0.0
      %2554 = vmatpush1.msra.mxu0 0.0
      %2555 = vmatprep.subr.mxu0 0.0
      %2556 = vmatpush1.msra.mxu0 0.0
      %2557 = vmatprep.subr.mxu0 0.0
      %2558 = vmatpush1.msra.mxu0 0.0
      %2559 = vmatprep.subr.mxu0 0.0
      %2560 = vmatpush1.msra.mxu0 0.0
      %2561 = vmatprep.mubr.f32.mxu0 0.0
      %2562 = vmatmul.mubr.f32.gmra.mrb[0].mxu0 %v2495
      %v2563 = vpop.f32.mrb[0].mxu0
      %v2564 = vadd.f32 0.0, %v2563
      %v2565 = vpop.f32.mrb[0].mxu0
      %2566 = vdwg.mxu0
      %2567 = vrot.lane.b32.xlu0 %v495, 124
      %v2568 = vpop.permute.xlu0 %2567
      %v2571 = vsel %vm1782, %v1944, 0
      %2573 = vmatprep.subr.mxu0 0.0
      %2574 = vmatpush1.msra.mxu0 %v2568
      %2575 = vmatprep.subr.mxu0 0.0
      %2576 = vmatpush1.msra.mxu0 0.0
      %2577 = vmatprep.subr.mxu0 0.0
      %2578 = vmatpush1.msra.mxu0 0.0
      %2579 = vmatprep.subr.mxu0 0.0
      %2580 = vmatpush1.msra.mxu0 0.0
      %2581 = vmatprep.subr.mxu0 0.0
      %2582 = vmatpush1.msra.mxu0 0.0
      %2583 = vmatprep.subr.mxu0 0.0
      %2584 = vmatpush1.msra.mxu0 0.0
      %2585 = vmatprep.subr.mxu0 0.0
      %2586 = vmatpush1.msra.mxu0 0.0
      %2587 = vmatprep.subr.mxu0 0.0
      %2588 = vmatpush1.msra.mxu0 0.0
      %2589 = vmatprep.subr.mxu0 0.0
      %2590 = vmatpush1.msra.mxu0 0.0
      %2591 = vmatprep.subr.mxu0 0.0
      %2592 = vmatpush1.msra.mxu0 0.0
      %2593 = vmatprep.subr.mxu0 0.0
      %2594 = vmatpush1.msra.mxu0 0.0
      %2595 = vmatprep.subr.mxu0 0.0
      %2596 = vmatpush1.msra.mxu0 0.0
      %2597 = vmatprep.subr.mxu0 0.0
      %2598 = vmatpush1.msra.mxu0 0.0
      %2599 = vmatprep.subr.mxu0 0.0
      %2600 = vmatpush1.msra.mxu0 0.0
      %2601 = vmatprep.subr.mxu0 0.0
      %2602 = vmatpush1.msra.mxu0 0.0
      %2603 = vmatprep.subr.mxu0 0.0
      %2604 = vmatpush1.msra.mxu0 0.0
      %2605 = vmatprep.subr.mxu0 0.0
      %2606 = vmatpush1.msra.mxu0 0.0
      %2607 = vmatprep.subr.mxu0 0.0
      %2608 = vmatpush1.msra.mxu0 0.0
      %2609 = vmatprep.subr.mxu0 0.0
      %2610 = vmatpush1.msra.mxu0 0.0
      %2611 = vmatprep.subr.mxu0 0.0
      %2612 = vmatpush1.msra.mxu0 0.0
      %2613 = vmatprep.subr.mxu0 0.0
      %2614 = vmatpush1.msra.mxu0 0.0
      %2615 = vmatprep.subr.mxu0 0.0
      %2616 = vmatpush1.msra.mxu0 0.0
      %2617 = vmatprep.subr.mxu0 0.0
      %2618 = vmatpush1.msra.mxu0 0.0
      %2619 = vmatprep.subr.mxu0 0.0
      %2620 = vmatpush1.msra.mxu0 0.0
      %2621 = vmatprep.subr.mxu0 0.0
      %2622 = vmatpush1.msra.mxu0 0.0
      %2623 = vmatprep.subr.mxu0 0.0
      %2624 = vmatpush1.msra.mxu0 0.0
      %2625 = vmatprep.subr.mxu0 0.0
      %2626 = vmatpush1.msra.mxu0 0.0
      %2627 = vmatprep.subr.mxu0 0.0
      %2628 = vmatpush1.msra.mxu0 0.0
      %2629 = vmatprep.subr.mxu0 0.0
      %2630 = vmatpush1.msra.mxu0 0.0
      %2631 = vmatprep.subr.mxu0 0.0
      %2632 = vmatpush1.msra.mxu0 0.0
      %2633 = vmatprep.subr.mxu0 0.0
      %2634 = vmatpush1.msra.mxu0 0.0
      %2635 = vmatprep.subr.mxu0 0.0
      %2636 = vmatpush1.msra.mxu0 0.0
      %2637 = vmatprep.mubr.f32.mxu0 0.0
      %2638 = vmatmul.mubr.f32.gmra.mrb[0].mxu0 %v2571
      %v2639 = vpop.f32.mrb[0].mxu0
      %v2640 = vadd.f32 0.0, %v2639
      %v2641 = vpop.f32.mrb[0].mxu0
      %2642 = vdwg.mxu0
      %2643 = vrot.lane.b32.xlu0 %v500, 124
      %v2644 = vpop.permute.xlu0 %2643
      %v2647 = vsel %vm1782, %v1946, 0
      %2649 = vmatprep.subr.mxu0 0.0
      %2650 = vmatpush1.msra.mxu0 %v2644
      %2651 = vmatprep.subr.mxu0 0.0
      %2652 = vmatpush1.msra.mxu0 0.0
      %2653 = vmatprep.subr.mxu0 0.0
      %2654 = vmatpush1.msra.mxu0 0.0
      %2655 = vmatprep.subr.mxu0 0.0
      %2656 = vmatpush1.msra.mxu0 0.0
      %2657 = vmatprep.subr.mxu0 0.0
      %2658 = vmatpush1.msra.mxu0 0.0
      %2659 = vmatprep.subr.mxu0 0.0
      %2660 = vmatpush1.msra.mxu0 0.0
      %2661 = vmatprep.subr.mxu0 0.0
      %2662 = vmatpush1.msra.mxu0 0.0
      %2663 = vmatprep.subr.mxu0 0.0
      %2664 = vmatpush1.msra.mxu0 0.0
      %2665 = vmatprep.subr.mxu0 0.0
      %2666 = vmatpush1.msra.mxu0 0.0
      %2667 = vmatprep.subr.mxu0 0.0
      %2668 = vmatpush1.msra.mxu0 0.0
      %2669 = vmatprep.subr.mxu0 0.0
      %2670 = vmatpush1.msra.mxu0 0.0
      %2671 = vmatprep.subr.mxu0 0.0
      %2672 = vmatpush1.msra.mxu0 0.0
      %2673 = vmatprep.subr.mxu0 0.0
      %2674 = vmatpush1.msra.mxu0 0.0
      %2675 = vmatprep.subr.mxu0 0.0
      %2676 = vmatpush1.msra.mxu0 0.0
      %2677 = vmatprep.subr.mxu0 0.0
      %2678 = vmatpush1.msra.mxu0 0.0
      %2679 = vmatprep.subr.mxu0 0.0
      %2680 = vmatpush1.msra.mxu0 0.0
      %2681 = vmatprep.subr.mxu0 0.0
      %2682 = vmatpush1.msra.mxu0 0.0
      %2683 = vmatprep.subr.mxu0 0.0
      %2684 = vmatpush1.msra.mxu0 0.0
      %2685 = vmatprep.subr.mxu0 0.0
      %2686 = vmatpush1.msra.mxu0 0.0
      %2687 = vmatprep.subr.mxu0 0.0
      %2688 = vmatpush1.msra.mxu0 0.0
      %2689 = vmatprep.subr.mxu0 0.0
      %2690 = vmatpush1.msra.mxu0 0.0
      %2691 = vmatprep.subr.mxu0 0.0
      %2692 = vmatpush1.msra.mxu0 0.0
      %2693 = vmatprep.subr.mxu0 0.0
      %2694 = vmatpush1.msra.mxu0 0.0
      %2695 = vmatprep.subr.mxu0 0.0
      %2696 = vmatpush1.msra.mxu0 0.0
      %2697 = vmatprep.subr.mxu0 0.0
      %2698 = vmatpush1.msra.mxu0 0.0
      %2699 = vmatprep.subr.mxu0 0.0
      %2700 = vmatpush1.msra.mxu0 0.0
      %2701 = vmatprep.subr.mxu0 0.0
      %2702 = vmatpush1.msra.mxu0 0.0
      %2703 = vmatprep.subr.mxu0 0.0
      %2704 = vmatpush1.msra.mxu0 0.0
      %2705 = vmatprep.subr.mxu0 0.0
      %2706 = vmatpush1.msra.mxu0 0.0
      %2707 = vmatprep.subr.mxu0 0.0
      %2708 = vmatpush1.msra.mxu0 0.0
      %2709 = vmatprep.subr.mxu0 0.0
      %2710 = vmatpush1.msra.mxu0 0.0
      %2711 = vmatprep.subr.mxu0 0.0
      %2712 = vmatpush1.msra.mxu0 0.0
      %2713 = vmatprep.mubr.f32.mxu0 0.0
      %2714 = vmatmul.mubr.f32.gmra.mrb[0].mxu0 %v2647
      %v2715 = vpop.f32.mrb[0].mxu0
      %v2716 = vadd.f32 0.0, %v2715
      %v2717 = vpop.f32.mrb[0].mxu0
      %2718 = vdwg.mxu0
      %2719 = vrot.lane.b32.xlu0 %v505, 124
      %v2720 = vpop.permute.xlu0 %2719
      %v2723 = vsel %vm1782, %v1948, 0
      %2725 = vmatprep.subr.mxu0 0.0
      %2726 = vmatpush1.msra.mxu0 %v2720
      %2727 = vmatprep.subr.mxu0 0.0
      %2728 = vmatpush1.msra.mxu0 0.0
      %2729 = vmatprep.subr.mxu0 0.0
      %2730 = vmatpush1.msra.mxu0 0.0
      %2731 = vmatprep.subr.mxu0 0.0
      %2732 = vmatpush1.msra.mxu0 0.0
      %2733 = vmatprep.subr.mxu0 0.0
      %2734 = vmatpush1.msra.mxu0 0.0
      %2735 = vmatprep.subr.mxu0 0.0
      %2736 = vmatpush1.msra.mxu0 0.0
      %2737 = vmatprep.subr.mxu0 0.0
      %2738 = vmatpush1.msra.mxu0 0.0
      %2739 = vmatprep.subr.mxu0 0.0
      %2740 = vmatpush1.msra.mxu0 0.0
      %2741 = vmatprep.subr.mxu0 0.0
      %2742 = vmatpush1.msra.mxu0 0.0
      %2743 = vmatprep.subr.mxu0 0.0
      %2744 = vmatpush1.msra.mxu0 0.0
      %2745 = vmatprep.subr.mxu0 0.0
      %2746 = vmatpush1.msra.mxu0 0.0
      %2747 = vmatprep.subr.mxu0 0.0
      %2748 = vmatpush1.msra.mxu0 0.0
      %2749 = vmatprep.subr.mxu0 0.0
      %2750 = vmatpush1.msra.mxu0 0.0
      %2751 = vmatprep.subr.mxu0 0.0
      %2752 = vmatpush1.msra.mxu0 0.0
      %2753 = vmatprep.subr.mxu0 0.0
      %2754 = vmatpush1.msra.mxu0 0.0
      %2755 = vmatprep.subr.mxu0 0.0
      %2756 = vmatpush1.msra.mxu0 0.0
      %2757 = vmatprep.subr.mxu0 0.0
      %2758 = vmatpush1.msra.mxu0 0.0
      %2759 = vmatprep.subr.mxu0 0.0
      %2760 = vmatpush1.msra.mxu0 0.0
      %2761 = vmatprep.subr.mxu0 0.0
      %2762 = vmatpush1.msra.mxu0 0.0
      %2763 = vmatprep.subr.mxu0 0.0
      %2764 = vmatpush1.msra.mxu0 0.0
      %2765 = vmatprep.subr.mxu0 0.0
      %2766 = vmatpush1.msra.mxu0 0.0
      %2767 = vmatprep.subr.mxu0 0.0
      %2768 = vmatpush1.msra.mxu0 0.0
      %2769 = vmatprep.subr.mxu0 0.0
      %2770 = vmatpush1.msra.mxu0 0.0
      %2771 = vmatprep.subr.mxu0 0.0
      %2772 = vmatpush1.msra.mxu0 0.0
      %2773 = vmatprep.subr.mxu0 0.0
      %2774 = vmatpush1.msra.mxu0 0.0
      %2775 = vmatprep.subr.mxu0 0.0
      %2776 = vmatpush1.msra.mxu0 0.0
      %2777 = vmatprep.subr.mxu0 0.0
      %2778 = vmatpush1.msra.mxu0 0.0
      %2779 = vmatprep.subr.mxu0 0.0
      %2780 = vmatpush1.msra.mxu0 0.0
      %2781 = vmatprep.subr.mxu0 0.0
      %2782 = vmatpush1.msra.mxu0 0.0
      %2783 = vmatprep.subr.mxu0 0.0
      %2784 = vmatpush1.msra.mxu0 0.0
      %2785 = vmatprep.subr.mxu0 0.0
      %2786 = vmatpush1.msra.mxu0 0.0
      %2787 = vmatprep.subr.mxu0 0.0
      %2788 = vmatpush1.msra.mxu0 0.0
      %2789 = vmatprep.mubr.f32.mxu0 0.0
      %2790 = vmatmul.mubr.f32.gmra.mrb[0].mxu0 %v2723
      %v2791 = vpop.f32.mrb[0].mxu0
      %v2792 = vadd.f32 0.0, %v2791
      %v2793 = vpop.f32.mrb[0].mxu0
      %2794 = vdwg.mxu0
      %2795 = vrot.lane.b32.xlu0 %v510, 124
      %v2796 = vpop.permute.xlu0 %2795
      %v2799 = vsel %vm1782, %v1950, 0
      %2801 = vmatprep.subr.mxu0 0.0
      %2802 = vmatpush1.msra.mxu0 %v2796
      %2803 = vmatprep.subr.mxu0 0.0
      %2804 = vmatpush1.msra.mxu0 0.0
      %2805 = vmatprep.subr.mxu0 0.0
      %2806 = vmatpush1.msra.mxu0 0.0
      %2807 = vmatprep.subr.mxu0 0.0
      %2808 = vmatpush1.msra.mxu0 0.0
      %2809 = vmatprep.subr.mxu0 0.0
      %2810 = vmatpush1.msra.mxu0 0.0
      %2811 = vmatprep.subr.mxu0 0.0
      %2812 = vmatpush1.msra.mxu0 0.0
      %2813 = vmatprep.subr.mxu0 0.0
      %2814 = vmatpush1.msra.mxu0 0.0
      %2815 = vmatprep.subr.mxu0 0.0
      %2816 = vmatpush1.msra.mxu0 0.0
      %2817 = vmatprep.subr.mxu0 0.0
      %2818 = vmatpush1.msra.mxu0 0.0
      %2819 = vmatprep.subr.mxu0 0.0
      %2820 = vmatpush1.msra.mxu0 0.0
      %2821 = vmatprep.subr.mxu0 0.0
      %2822 = vmatpush1.msra.mxu0 0.0
      %2823 = vmatprep.subr.mxu0 0.0
      %2824 = vmatpush1.msra.mxu0 0.0
      %2825 = vmatprep.subr.mxu0 0.0
      %2826 = vmatpush1.msra.mxu0 0.0
      %2827 = vmatprep.subr.mxu0 0.0
      %2828 = vmatpush1.msra.mxu0 0.0
      %2829 = vmatprep.subr.mxu0 0.0
      %2830 = vmatpush1.msra.mxu0 0.0
      %2831 = vmatprep.subr.mxu0 0.0
      %2832 = vmatpush1.msra.mxu0 0.0
      %2833 = vmatprep.subr.mxu0 0.0
      %2834 = vmatpush1.msra.mxu0 0.0
      %2835 = vmatprep.subr.mxu0 0.0
      %2836 = vmatpush1.msra.mxu0 0.0
      %2837 = vmatprep.subr.mxu0 0.0
      %2838 = vmatpush1.msra.mxu0 0.0
      %2839 = vmatprep.subr.mxu0 0.0
      %2840 = vmatpush1.msra.mxu0 0.0
      %2841 = vmatprep.subr.mxu0 0.0
      %2842 = vmatpush1.msra.mxu0 0.0
      %2843 = vmatprep.subr.mxu0 0.0
      %2844 = vmatpush1.msra.mxu0 0.0
      %2845 = vmatprep.subr.mxu0 0.0
      %2846 = vmatpush1.msra.mxu0 0.0
      %2847 = vmatprep.subr.mxu0 0.0
      %2848 = vmatpush1.msra.mxu0 0.0
      %2849 = vmatprep.subr.mxu0 0.0
      %2850 = vmatpush1.msra.mxu0 0.0
      %2851 = vmatprep.subr.mxu0 0.0
      %2852 = vmatpush1.msra.mxu0 0.0
      %2853 = vmatprep.subr.mxu0 0.0
      %2854 = vmatpush1.msra.mxu0 0.0
      %2855 = vmatprep.subr.mxu0 0.0
      %2856 = vmatpush1.msra.mxu0 0.0
      %2857 = vmatprep.subr.mxu0 0.0
      %2858 = vmatpush1.msra.mxu0 0.0
      %2859 = vmatprep.subr.mxu0 0.0
      %2860 = vmatpush1.msra.mxu0 0.0
      %2861 = vmatprep.subr.mxu0 0.0
      %2862 = vmatpush1.msra.mxu0 0.0
      %2863 = vmatprep.subr.mxu0 0.0
      %2864 = vmatpush1.msra.mxu0 0.0
      %2865 = vmatprep.mubr.f32.mxu0 0.0
      %2866 = vmatmul.mubr.f32.gmra.mrb[0].mxu0 %v2799
      %v2867 = vpop.f32.mrb[0].mxu0
      %v2868 = vadd.f32 0.0, %v2867
      %v2869 = vpop.f32.mrb[0].mxu0
      %2870 = vdwg.mxu0
      %2871 = vrot.lane.b32.xlu0 %v515, 124
      %v2872 = vpop.permute.xlu0 %2871
      %v2875 = vsel %vm1782, %v1952, 0
      %2877 = vmatprep.subr.mxu0 0.0
      %2878 = vmatpush1.msra.mxu0 %v2872
      %2879 = vmatprep.subr.mxu0 0.0
      %2880 = vmatpush1.msra.mxu0 0.0
      %2881 = vmatprep.subr.mxu0 0.0
      %2882 = vmatpush1.msra.mxu0 0.0
      %2883 = vmatprep.subr.mxu0 0.0
      %2884 = vmatpush1.msra.mxu0 0.0
      %2885 = vmatprep.subr.mxu0 0.0
      %2886 = vmatpush1.msra.mxu0 0.0
      %2887 = vmatprep.subr.mxu0 0.0
      %2888 = vmatpush1.msra.mxu0 0.0
      %2889 = vmatprep.subr.mxu0 0.0
      %2890 = vmatpush1.msra.mxu0 0.0
      %2891 = vmatprep.subr.mxu0 0.0
      %2892 = vmatpush1.msra.mxu0 0.0
      %2893 = vmatprep.subr.mxu0 0.0
      %2894 = vmatpush1.msra.mxu0 0.0
      %2895 = vmatprep.subr.mxu0 0.0
      %2896 = vmatpush1.msra.mxu0 0.0
      %2897 = vmatprep.subr.mxu0 0.0
      %2898 = vmatpush1.msra.mxu0 0.0
      %2899 = vmatprep.subr.mxu0 0.0
      %2900 = vmatpush1.msra.mxu0 0.0
      %2901 = vmatprep.subr.mxu0 0.0
      %2902 = vmatpush1.msra.mxu0 0.0
      %2903 = vmatprep.subr.mxu0 0.0
      %2904 = vmatpush1.msra.mxu0 0.0
      %2905 = vmatprep.subr.mxu0 0.0
      %2906 = vmatpush1.msra.mxu0 0.0
      %2907 = vmatprep.subr.mxu0 0.0
      %2908 = vmatpush1.msra.mxu0 0.0
      %2909 = vmatprep.subr.mxu0 0.0
      %2910 = vmatpush1.msra.mxu0 0.0
      %2911 = vmatprep.subr.mxu0 0.0
      %2912 = vmatpush1.msra.mxu0 0.0
      %2913 = vmatprep.subr.mxu0 0.0
      %2914 = vmatpush1.msra.mxu0 0.0
      %2915 = vmatprep.subr.mxu0 0.0
      %2916 = vmatpush1.msra.mxu0 0.0
      %2917 = vmatprep.subr.mxu0 0.0
      %2918 = vmatpush1.msra.mxu0 0.0
      %2919 = vmatprep.subr.mxu0 0.0
      %2920 = vmatpush1.msra.mxu0 0.0
      %2921 = vmatprep.subr.mxu0 0.0
      %2922 = vmatpush1.msra.mxu0 0.0
      %2923 = vmatprep.subr.mxu0 0.0
      %2924 = vmatpush1.msra.mxu0 0.0
      %2925 = vmatprep.subr.mxu0 0.0
      %2926 = vmatpush1.msra.mxu0 0.0
      %2927 = vmatprep.subr.mxu0 0.0
      %2928 = vmatpush1.msra.mxu0 0.0
      %2929 = vmatprep.subr.mxu0 0.0
      %2930 = vmatpush1.msra.mxu0 0.0
      %2931 = vmatprep.subr.mxu0 0.0
      %2932 = vmatpush1.msra.mxu0 0.0
      %2933 = vmatprep.subr.mxu0 0.0
      %2934 = vmatpush1.msra.mxu0 0.0
      %2935 = vmatprep.subr.mxu0 0.0
      %2936 = vmatpush1.msra.mxu0 0.0
      %2937 = vmatprep.subr.mxu0 0.0
      %2938 = vmatpush1.msra.mxu0 0.0
      %2939 = vmatprep.subr.mxu0 0.0
      %2940 = vmatpush1.msra.mxu0 0.0
      %2941 = vmatprep.mubr.f32.mxu0 0.0
      %2942 = vmatmul.mubr.f32.gmra.mrb[0].mxu0 %v2875
      %v2943 = vpop.f32.mrb[0].mxu0
      %v2944 = vadd.f32 0.0, %v2943
      %v2945 = vpop.f32.mrb[0].mxu0
      %2946 = vdwg.mxu0
      %2947 = vrot.lane.b32.xlu0 %v520, 124
      %v2948 = vpop.permute.xlu0 %2947
      %v2951 = vsel %vm1782, %v1954, 0
      %2953 = vmatprep.subr.mxu0 0.0
      %2954 = vmatpush1.msra.mxu0 %v2948
      %2955 = vmatprep.subr.mxu0 0.0
      %2956 = vmatpush1.msra.mxu0 0.0
      %2957 = vmatprep.subr.mxu0 0.0
      %2958 = vmatpush1.msra.mxu0 0.0
      %2959 = vmatprep.subr.mxu0 0.0
      %2960 = vmatpush1.msra.mxu0 0.0
      %2961 = vmatprep.subr.mxu0 0.0
      %2962 = vmatpush1.msra.mxu0 0.0
      %2963 = vmatprep.subr.mxu0 0.0
      %2964 = vmatpush1.msra.mxu0 0.0
      %2965 = vmatprep.subr.mxu0 0.0
      %2966 = vmatpush1.msra.mxu0 0.0
      %2967 = vmatprep.subr.mxu0 0.0
      %2968 = vmatpush1.msra.mxu0 0.0
      %2969 = vmatprep.subr.mxu0 0.0
      %2970 = vmatpush1.msra.mxu0 0.0
      %2971 = vmatprep.subr.mxu0 0.0
      %2972 = vmatpush1.msra.mxu0 0.0
      %2973 = vmatprep.subr.mxu0 0.0
      %2974 = vmatpush1.msra.mxu0 0.0
      %2975 = vmatprep.subr.mxu0 0.0
      %2976 = vmatpush1.msra.mxu0 0.0
      %2977 = vmatprep.subr.mxu0 0.0
      %2978 = vmatpush1.msra.mxu0 0.0
      %2979 = vmatprep.subr.mxu0 0.0
      %2980 = vmatpush1.msra.mxu0 0.0
      %2981 = vmatprep.subr.mxu0 0.0
      %2982 = vmatpush1.msra.mxu0 0.0
      %2983 = vmatprep.subr.mxu0 0.0
      %2984 = vmatpush1.msra.mxu0 0.0
      %2985 = vmatprep.subr.mxu0 0.0
      %2986 = vmatpush1.msra.mxu0 0.0
      %2987 = vmatprep.subr.mxu0 0.0
      %2988 = vmatpush1.msra.mxu0 0.0
      %2989 = vmatprep.subr.mxu0 0.0
      %2990 = vmatpush1.msra.mxu0 0.0
      %2991 = vmatprep.subr.mxu0 0.0
      %2992 = vmatpush1.msra.mxu0 0.0
      %2993 = vmatprep.subr.mxu0 0.0
      %2994 = vmatpush1.msra.mxu0 0.0
      %2995 = vmatprep.subr.mxu0 0.0
      %2996 = vmatpush1.msra.mxu0 0.0
      %2997 = vmatprep.subr.mxu0 0.0
      %2998 = vmatpush1.msra.mxu0 0.0
      %2999 = vmatprep.subr.mxu0 0.0
      %3000 = vmatpush1.msra.mxu0 0.0
      %3001 = vmatprep.subr.mxu0 0.0
      %3002 = vmatpush1.msra.mxu0 0.0
      %3003 = vmatprep.subr.mxu0 0.0
      %3004 = vmatpush1.msra.mxu0 0.0
      %3005 = vmatprep.subr.mxu0 0.0
      %3006 = vmatpush1.msra.mxu0 0.0
      %3007 = vmatprep.subr.mxu0 0.0
      %3008 = vmatpush1.msra.mxu0 0.0
      %3009 = vmatprep.subr.mxu0 0.0
      %3010 = vmatpush1.msra.mxu0 0.0
      %3011 = vmatprep.subr.mxu0 0.0
      %3012 = vmatpush1.msra.mxu0 0.0
      %3013 = vmatprep.subr.mxu0 0.0
      %3014 = vmatpush1.msra.mxu0 0.0
      %3015 = vmatprep.subr.mxu0 0.0
      %3016 = vmatpush1.msra.mxu0 0.0
      %3017 = vmatprep.mubr.f32.mxu0 0.0
      %3018 = vmatmul.mubr.f32.gmra.mrb[0].mxu0 %v2951
      %v3019 = vpop.f32.mrb[0].mxu0
      %v3020 = vadd.f32 0.0, %v3019
      %v3021 = vpop.f32.mrb[0].mxu0
      %3022 = vdwg.mxu0
      %3023 = vrot.lane.b32.xlu0 %v525, 124
      %v3024 = vpop.permute.xlu0 %3023
      %v3027 = vsel %vm1782, %v1956, 0
      %3029 = vmatprep.subr.mxu0 0.0
      %3030 = vmatpush1.msra.mxu0 %v3024
      %3031 = vmatprep.subr.mxu0 0.0
      %3032 = vmatpush1.msra.mxu0 0.0
      %3033 = vmatprep.subr.mxu0 0.0
      %3034 = vmatpush1.msra.mxu0 0.0
      %3035 = vmatprep.subr.mxu0 0.0
      %3036 = vmatpush1.msra.mxu0 0.0
      %3037 = vmatprep.subr.mxu0 0.0
      %3038 = vmatpush1.msra.mxu0 0.0
      %3039 = vmatprep.subr.mxu0 0.0
      %3040 = vmatpush1.msra.mxu0 0.0
      %3041 = vmatprep.subr.mxu0 0.0
      %3042 = vmatpush1.msra.mxu0 0.0
      %3043 = vmatprep.subr.mxu0 0.0
      %3044 = vmatpush1.msra.mxu0 0.0
      %3045 = vmatprep.subr.mxu0 0.0
      %3046 = vmatpush1.msra.mxu0 0.0
      %3047 = vmatprep.subr.mxu0 0.0
      %3048 = vmatpush1.msra.mxu0 0.0
      %3049 = vmatprep.subr.mxu0 0.0
      %3050 = vmatpush1.msra.mxu0 0.0
      %3051 = vmatprep.subr.mxu0 0.0
      %3052 = vmatpush1.msra.mxu0 0.0
      %3053 = vmatprep.subr.mxu0 0.0
      %3054 = vmatpush1.msra.mxu0 0.0
      %3055 = vmatprep.subr.mxu0 0.0
      %3056 = vmatpush1.msra.mxu0 0.0
      %3057 = vmatprep.subr.mxu0 0.0
      %3058 = vmatpush1.msra.mxu0 0.0
      %3059 = vmatprep.subr.mxu0 0.0
      %3060 = vmatpush1.msra.mxu0 0.0
      %3061 = vmatprep.subr.mxu0 0.0
      %3062 = vmatpush1.msra.mxu0 0.0
      %3063 = vmatprep.subr.mxu0 0.0
      %3064 = vmatpush1.msra.mxu0 0.0
      %3065 = vmatprep.subr.mxu0 0.0
      %3066 = vmatpush1.msra.mxu0 0.0
      %3067 = vmatprep.subr.mxu0 0.0
      %3068 = vmatpush1.msra.mxu0 0.0
      %3069 = vmatprep.subr.mxu0 0.0
      %3070 = vmatpush1.msra.mxu0 0.0
      %3071 = vmatprep.subr.mxu0 0.0
      %3072 = vmatpush1.msra.mxu0 0.0
      %3073 = vmatprep.subr.mxu0 0.0
      %3074 = vmatpush1.msra.mxu0 0.0
      %3075 = vmatprep.subr.mxu0 0.0
      %3076 = vmatpush1.msra.mxu0 0.0
      %3077 = vmatprep.subr.mxu0 0.0
      %3078 = vmatpush1.msra.mxu0 0.0
      %3079 = vmatprep.subr.mxu0 0.0
      %3080 = vmatpush1.msra.mxu0 0.0
      %3081 = vmatprep.subr.mxu0 0.0
      %3082 = vmatpush1.msra.mxu0 0.0
      %3083 = vmatprep.subr.mxu0 0.0
      %3084 = vmatpush1.msra.mxu0 0.0
      %3085 = vmatprep.subr.mxu0 0.0
      %3086 = vmatpush1.msra.mxu0 0.0
      %3087 = vmatprep.subr.mxu0 0.0
      %3088 = vmatpush1.msra.mxu0 0.0
      %3089 = vmatprep.subr.mxu0 0.0
      %3090 = vmatpush1.msra.mxu0 0.0
      %3091 = vmatprep.subr.mxu0 0.0
      %3092 = vmatpush1.msra.mxu0 0.0
      %3093 = vmatprep.mubr.f32.mxu0 0.0
      %3094 = vmatmul.mubr.f32.gmra.mrb[0].mxu0 %v3027
      %v3095 = vpop.f32.mrb[0].mxu0
      %v3096 = vadd.f32 0.0, %v3095
      %v3097 = vpop.f32.mrb[0].mxu0
      %3098 = vdwg.mxu0
      %3099 = vrot.lane.b32.xlu0 %v530, 124
      %v3100 = vpop.permute.xlu0 %3099
      %v3103 = vsel %vm1782, %v1958, 0
      %3105 = vmatprep.subr.mxu0 0.0
      %3106 = vmatpush1.msra.mxu0 %v3100
      %3107 = vmatprep.subr.mxu0 0.0
      %3108 = vmatpush1.msra.mxu0 0.0
      %3109 = vmatprep.subr.mxu0 0.0
      %3110 = vmatpush1.msra.mxu0 0.0
      %3111 = vmatprep.subr.mxu0 0.0
      %3112 = vmatpush1.msra.mxu0 0.0
      %3113 = vmatprep.subr.mxu0 0.0
      %3114 = vmatpush1.msra.mxu0 0.0
      %3115 = vmatprep.subr.mxu0 0.0
      %3116 = vmatpush1.msra.mxu0 0.0
      %3117 = vmatprep.subr.mxu0 0.0
      %3118 = vmatpush1.msra.mxu0 0.0
      %3119 = vmatprep.subr.mxu0 0.0
      %3120 = vmatpush1.msra.mxu0 0.0
      %3121 = vmatprep.subr.mxu0 0.0
      %3122 = vmatpush1.msra.mxu0 0.0
      %3123 = vmatprep.subr.mxu0 0.0
      %3124 = vmatpush1.msra.mxu0 0.0
      %3125 = vmatprep.subr.mxu0 0.0
      %3126 = vmatpush1.msra.mxu0 0.0
      %3127 = vmatprep.subr.mxu0 0.0
      %3128 = vmatpush1.msra.mxu0 0.0
      %3129 = vmatprep.subr.mxu0 0.0
      %3130 = vmatpush1.msra.mxu0 0.0
      %3131 = vmatprep.subr.mxu0 0.0
      %3132 = vmatpush1.msra.mxu0 0.0
      %3133 = vmatprep.subr.mxu0 0.0
      %3134 = vmatpush1.msra.mxu0 0.0
      %3135 = vmatprep.subr.mxu0 0.0
      %3136 = vmatpush1.msra.mxu0 0.0
      %3137 = vmatprep.subr.mxu0 0.0
      %3138 = vmatpush1.msra.mxu0 0.0
      %3139 = vmatprep.subr.mxu0 0.0
      %3140 = vmatpush1.msra.mxu0 0.0
      %3141 = vmatprep.subr.mxu0 0.0
      %3142 = vmatpush1.msra.mxu0 0.0
      %3143 = vmatprep.subr.mxu0 0.0
      %3144 = vmatpush1.msra.mxu0 0.0
      %3145 = vmatprep.subr.mxu0 0.0
      %3146 = vmatpush1.msra.mxu0 0.0
      %3147 = vmatprep.subr.mxu0 0.0
      %3148 = vmatpush1.msra.mxu0 0.0
      %3149 = vmatprep.subr.mxu0 0.0
      %3150 = vmatpush1.msra.mxu0 0.0
      %3151 = vmatprep.subr.mxu0 0.0
      %3152 = vmatpush1.msra.mxu0 0.0
      %3153 = vmatprep.subr.mxu0 0.0
      %3154 = vmatpush1.msra.mxu0 0.0
      %3155 = vmatprep.subr.mxu0 0.0
      %3156 = vmatpush1.msra.mxu0 0.0
      %3157 = vmatprep.subr.mxu0 0.0
      %3158 = vmatpush1.msra.mxu0 0.0
      %3159 = vmatprep.subr.mxu0 0.0
      %3160 = vmatpush1.msra.mxu0 0.0
      %3161 = vmatprep.subr.mxu0 0.0
      %3162 = vmatpush1.msra.mxu0 0.0
      %3163 = vmatprep.subr.mxu0 0.0
      %3164 = vmatpush1.msra.mxu0 0.0
      %3165 = vmatprep.subr.mxu0 0.0
      %3166 = vmatpush1.msra.mxu0 0.0
      %3167 = vmatprep.subr.mxu0 0.0
      %3168 = vmatpush1.msra.mxu0 0.0
      %3169 = vmatprep.mubr.f32.mxu0 0.0
      %3170 = vmatmul.mubr.f32.gmra.mrb[0].mxu0 %v3103
      %v3171 = vpop.f32.mrb[0].mxu0
      %v3172 = vadd.f32 0.0, %v3171
      %v3173 = vpop.f32.mrb[0].mxu0
      %3174 = vdwg.mxu0
      %v3175 = vld [vmem:[%s306] sm:$0xf]
      %v3177 = vsel %vm536, %v3175, 0
      %v3180 = vsel %vm536, %v2032, 0
      %v3183 = vsel %vm536, %v2108, 0
      %v3186 = vsel %vm536, %v2184, 0
      %v3189 = vsel %vm536, %v2260, 0
      %v3192 = vsel %vm536, %v2336, 0
      %v3195 = vsel %vm536, %v2412, 0
      %v3198 = vsel %vm536, %v2488, 0
      %v3201 = vsel %vm536, %v2564, 0
      %v3204 = vsel %vm536, %v2640, 0
      %v3207 = vsel %vm536, %v2716, 0
      %v3210 = vsel %vm536, %v2792, 0
      %v3213 = vsel %vm536, %v2868, 0
      %v3216 = vsel %vm536, %v2944, 0
      %v3219 = vsel %vm536, %v3020, 0
      %v3222 = vsel %vm536, %v3096, 0
      %v3225 = vsel %vm536, %v3172, 0
      %3227 = vmatprep.subr.mxu0 0.0
      %3228 = vmatpush1.xpose.msra.mxu0 %v3180
      %3229 = vmatprep.subr.mxu0 0.0
      %3230 = vmatpush1.xpose.msra.mxu0 %v3183
      %3231 = vmatprep.subr.mxu0 0.0
      %3232 = vmatpush1.xpose.msra.mxu0 %v3186
      %3233 = vmatprep.subr.mxu0 0.0
      %3234 = vmatpush1.xpose.msra.mxu0 %v3189
      %3235 = vmatprep.subr.mxu0 0.0
      %3236 = vmatpush1.xpose.msra.mxu0 %v3192
      %3237 = vmatprep.subr.mxu0 0.0
      %3238 = vmatpush1.xpose.msra.mxu0 %v3195
      %3239 = vmatprep.subr.mxu0 0.0
      %3240 = vmatpush1.xpose.msra.mxu0 %v3198
      %3241 = vmatprep.subr.mxu0 0.0
      %3242 = vmatpush1.xpose.msra.mxu0 %v3201
      %3243 = vmatprep.subr.mxu0 0.0
      %3244 = vmatpush1.xpose.msra.mxu0 %v3204
      %3245 = vmatprep.subr.mxu0 0.0
      %3246 = vmatpush1.xpose.msra.mxu0 %v3207
      %3247 = vmatprep.subr.mxu0 0.0
      %3248 = vmatpush1.xpose.msra.mxu0 %v3210
      %3249 = vmatprep.subr.mxu0 0.0
      %3250 = vmatpush1.xpose.msra.mxu0 %v3213
      %3251 = vmatprep.subr.mxu0 0.0
      %3252 = vmatpush1.xpose.msra.mxu0 %v3216
      %3253 = vmatprep.subr.mxu0 0.0
      %3254 = vmatpush1.xpose.msra.mxu0 %v3219
      %3255 = vmatprep.subr.mxu0 0.0
      %3256 = vmatpush1.xpose.msra.mxu0 %v3222
      %3257 = vmatprep.subr.mxu0 0.0
      %3258 = vmatpush1.xpose.msra.mxu0 %v3225
      %3259 = vmatprep.subr.mxu0 0.0
      %3260 = vmatpush1.xpose.msra.mxu0 0.0
      %3261 = vmatprep.subr.mxu0 0.0
      %3262 = vmatpush1.xpose.msra.mxu0 0.0
      %3263 = vmatprep.subr.mxu0 0.0
      %3264 = vmatpush1.xpose.msra.mxu0 0.0
      %3265 = vmatprep.subr.mxu0 0.0
      %3266 = vmatpush1.xpose.msra.mxu0 0.0
      %3267 = vmatprep.subr.mxu0 0.0
      %3268 = vmatpush1.xpose.msra.mxu0 0.0
      %3269 = vmatprep.subr.mxu0 0.0
      %3270 = vmatpush1.xpose.msra.mxu0 0.0
      %3271 = vmatprep.subr.mxu0 0.0
      %3272 = vmatpush1.xpose.msra.mxu0 0.0
      %3273 = vmatprep.subr.mxu0 0.0
      %3274 = vmatpush1.xpose.msra.mxu0 0.0
      %3275 = vmatprep.subr.mxu0 0.0
      %3276 = vmatpush1.xpose.msra.mxu0 0.0
      %3277 = vmatprep.subr.mxu0 0.0
      %3278 = vmatpush1.xpose.msra.mxu0 0.0
      %3279 = vmatprep.subr.mxu0 0.0
      %3280 = vmatpush1.xpose.msra.mxu0 0.0
      %3281 = vmatprep.subr.mxu0 0.0
      %3282 = vmatpush1.xpose.msra.mxu0 0.0
      %3283 = vmatprep.subr.mxu0 0.0
      %3284 = vmatpush1.xpose.msra.mxu0 0.0
      %3285 = vmatprep.subr.mxu0 0.0
      %3286 = vmatpush1.xpose.msra.mxu0 0.0
      %3287 = vmatprep.subr.mxu0 0.0
      %3288 = vmatpush1.xpose.msra.mxu0 0.0
      %3289 = vmatprep.subr.mxu0 0.0
      %3290 = vmatpush1.xpose.msra.mxu0 0.0
      %3291 = vmatprep.mubr.f32.mxu0 0.0
      %3292 = vmatmul.mubr.f32.gmra.mrb[0].mxu0 %v3177
      %v3293 = vpop.f32.mrb[0].mxu0
      %v3294 = vadd.f32 0.0, %v3293
      %v3295 = vpop.f32.mrb[0].mxu0
      %3296 = vdwg.mxu0
      %p3297 = scmp.eq.s32.totalorder %s22, 0
      // Predicated region
      $region37: #{_lambda_.5} parent=35 // pred_check
        %p3298 = pneg %p3297
      $region38: #{_lambda_.5} parent=35 // pred_check_branch
        %3300 = sbr.rel (%p3298) target = $region40
      $region39: #{_lambda_.5} parent=35 // pred_region
        %v3301 = vld [vmem:[%s310] sm:$0xf]
        %3303 = vset.pattern.permute.xlu0 0
        %3304 = vperm.xlu0 %3303, %v3301
        %v3305 = vpop.permute.xlu0 %3304
        %v3307 = vadd.f32 %v3294, %v3305
        %3308 = vst [vmem:[%s317] sm:$0xf] %v3307
      $region40: #{_lambda_.5} parent=35 // pred_fallthru
        _
      %p3309 = scmp.ne.s32.totalorder %s22, 0
      // Predicated region
      $region41: #{_lambda_.5} parent=35 // pred_check
        %p3310 = pneg %p3309
      $region42: #{_lambda_.5} parent=35 // pred_check_branch
        %3312 = sbr.rel (%p3310) target = $region44
      $region43: #{_lambda_.5} parent=35 // pred_region
        %v3313 = vld [vmem:[%s317] sm:$0xf]
        %v3314 = vadd.f32 %v3313, %v3294
        %3315 = vst [vmem:[%s317] sm:$0xf] %v3314
      $region44: #{_lambda_.5} parent=35 // pred_fallthru
        _
      %p3316 = scmp.lt.s32.totalorder %s20, 1
      %s3317 = scalar_select %p3316, %s20, 1
      %p3318 = scmp.lt.s32.totalorder %s21, 0
      %s3319 = scalar_select %p3318, %s21, 0
      %s3320 = sadd.s32 %s3319, %s3317
      %s3321 = smul.addr %s3320, 4
      %s3322 = scalar_lea.vmem %s4, %s3321
      // Predicated region
      $region45: #{_lambda_.5} parent=35 // pred_check
        %p3323 = pneg %p164
      $region46: #{_lambda_.5} parent=35 // pred_check_branch
        %3325 = sbr.rel (%p3323) target = $region48
      $region47: #{_lambda_.5} parent=35 // pred_region
        _
      $region48: #{_lambda_.5} parent=35 // pred_fallthru
        _
    $region36: #{_lambda_.5} parent=5 // pred_fallthru
      _
    %p3326 = scmp.le.s32.totalorder 2, %s10
    // Predicated region
    $region49: #{_lambda_.5} parent=5 // pred_check
      %p3327 = pneg %p3326
    $region50: #{_lambda_.5} parent=5 // pred_check_branch
      %3329 = sbr.rel (%p3327) target = $region52
    $region51: #{_lambda_.5} parent=5 // pred_region
      %s3330 = ssub.s32 %s10, 2
      // Predicated region
      $region53: #{_lambda_.5} parent=51 // pred_check
        %p3331 = pneg %p170
      $region54: #{_lambda_.5} parent=51 // pred_check_branch
        %3333 = sbr.rel (%p3331) target = $region56
      $region55: #{_lambda_.5} parent=51 // pred_region
        %p3334 = scmp.lt.s32.totalorder %s23, 1
        %s3335 = scalar_select %p3334, %s23, 1
        %p3336 = scmp.lt.s32.totalorder %s24, 0
        %s3337 = scalar_select %p3336, %s24, 0
        %s3338 = sadd.s32 %s3337, %s3335
        %s3339 = smul.addr %s3338, 4
        %s3340 = scalar_lea.vmem %s4, %s3339
      $region56: #{_lambda_.5} parent=51 // pred_fallthru
        _
    $region52: #{_lambda_.5} parent=5 // pred_fallthru
      _
  $region6: #{_lambda_.5} parent=0 // loop_footer
    %s14 = sadd.s32 1, %s10
  $region7: #{_lambda_.5} parent=0 // loop_footer_branch
    %9 = sbr.rel target = $region3
  $region8: #{_lambda_.5} parent=0 // loop_exit
    _

</llo_original>
